<compile_context>
chip_gen: v7x
topology: tpu7x:2x2x1
jax: 0.10.0
libtpu: 0.0.40
codegen_flags: <defaults>
</compile_context>

<pallas_src>
import jax
import jax.numpy as jnp
from jax.experimental import pallas as pl
from jax.experimental.pallas import tpu as pltpu

# ------------------------------------------------------------------ config ---
BATCH = 16
SEQ = 8
INPUT_SIZE = 256      # scaled down from 2048 for a small runnable example
HIDDEN = 128
NUM_CLASSES = 2
NUM_LAYERS = 2        # hard-wired to 2 layers below (matches the module)
LANE = 128            # lane-padded head width
BATCH_TILE = 8        # batch rows per grid step


# ------------------------------------------------------------------ kernel ---
def _lstm_fc_kernel(x_ref,      # (Bt, T, IN)  bf16  VMEM
                    wih0_ref,   # (IN, 4H)     bf16
                    b0_ref,     # (1, 4H)      f32   = b_ih_l0 + b_hh_l0
                    wblk_ref,   # (2H, 8H)     bf16  = [[whh0, wih1],[0, whh1]]
                    b1_ref,     # (1, 4H)      f32   = b_ih_l1 + b_hh_l1
                    wfc_ref,    # (H, 128)     bf16  (zero-padded past C)
                    bfc_ref,    # (1, 128)     f32   (zero-padded past C)
                    out_ref,    # (Bt, 128)    f32
                    gates_ref): # (Bt, T, 4H)  f32   VMEM scratch
    Bt, T, IN = x_ref.shape
    H = b1_ref.shape[1] // 4

    # ---- hoisted layer-0 input projection (one big MXU matmul per tile) -----
    x_flat = x_ref[...].reshape(Bt * T, IN)                          # bf16
    gx = (jnp.dot(x_flat, wih0_ref[...],
                  preferred_element_type=jnp.float32)
          + b0_ref[...])                                             # (Bt*T,4H) f32
    gates_ref[...] = gx.reshape(Bt, T, 4 * H)                        # VMEM-backed

    # b1 broadcast hoisted out of the loop (JAX does not CSE broadcasts).
    b1b = jnp.broadcast_to(b1_ref[...], (Bt, 4 * H))

    def gate_math(g, c):
        # PyTorch gate order [i, f, g, o]; sigmoid via tanh (1 EUP push each).
        i = 0.5 * jnp.tanh(0.5 * g[:, 0 * H:1 * H]) + 0.5
        f = 0.5 * jnp.tanh(0.5 * g[:, 1 * H:2 * H]) + 0.5
        gg = jnp.tanh(g[:, 2 * H:3 * H])
        o = 0.5 * jnp.tanh(0.5 * g[:, 3 * H:4 * H]) + 0.5
        c_new = f * c + i * gg
        h_new = o * jnp.tanh(c_new)
        return h_new, c_new

    h1 = c1 = h2 = c2 = jnp.zeros((Bt, H), jnp.float32)
    rec0 = jnp.zeros((Bt, 4 * H), jnp.float32)   # h1_{-1} @ whh0 == 0

    # Fully unrolled time loop (T static): ONE fused matmul per step on the
    # serial critical path.
    for t in range(T):
        g0 = gates_ref[:, t, :] + rec0
        h1, c1 = gate_math(g0, c1)

        # [h1_t | h2_{t-1}] @ [[whh0, wih1],[0, whh1]]
        cat = jnp.concatenate([h1, h2], axis=1).astype(jnp.bfloat16)  # (Bt,2H)
        fused = jnp.dot(cat, wblk_ref[...],
                        preferred_element_type=jnp.float32)           # (Bt,8H)
        rec0 = fused[:, :4 * H]            # = h1_t @ whh0  (for step t+1)
        g1 = fused[:, 4 * H:] + b1b        # = h1_t@wih1 + h2_{t-1}@whh1 + b1
        h2, c2 = gate_math(g1, c2)

    # fc(out[:, -1, :]) — lane-dense (Bt, 128) store.
    logits = (jnp.dot(h2.astype(jnp.bfloat16), wfc_ref[...],
                      preferred_element_type=jnp.float32)
              + bfc_ref[...])
    out_ref[...] = logits.astype(out_ref.dtype)


# ----------------------------------------------------------------- wrapper ---
def lstm_classifier_forward(x, params, *, batch_tile=BATCH_TILE):
    """x: (B, T, IN) float32.  Returns logits (B, NUM_CLASSES) float32."""
    B, T, IN = x.shape
    H = HIDDEN
    assert B % batch_tile == 0

    bf = lambda a: a.astype(jnp.bfloat16)
    x_bf = bf(x)                                 # no HBM transpose, only cast

    # Fused block weight [[whh0, wih1],[0, whh1]] : (2H, 8H)
    wblk = jnp.concatenate(
        [jnp.concatenate([params["whh0"], params["wih1"]], axis=1),
         jnp.concatenate([jnp.zeros((H, 4 * H), jnp.float32), params["whh1"]],
                         axis=1)],
        axis=0)

    # Lane-padded classifier head.
    wfc_pad = jnp.zeros((H, LANE), jnp.float32).at[:, :NUM_CLASSES].set(
        params["wfc"])
    bfc_pad = jnp.zeros((1, LANE), jnp.float32).at[:, :NUM_CLASSES].set(
        params["bfc"])

    args = (x_bf, bf(params["wih0"]), params["b0"], bf(wblk), params["b1"],
            bf(wfc_pad), bfc_pad)

    grid = (B // batch_tile,)
    in_specs = [
        pl.BlockSpec((batch_tile, T, IN), lambda b: (b, 0, 0)),   # x: per-tile
        pl.BlockSpec((IN, 4 * H), lambda b: (0, 0)),              # weights stay
        pl.BlockSpec((1, 4 * H), lambda b: (0, 0)),               # VMEM-resident
        pl.BlockSpec((2 * H, 8 * H), lambda b: (0, 0)),
        pl.BlockSpec((1, 4 * H), lambda b: (0, 0)),
        pl.BlockSpec((H, LANE), lambda b: (0, 0)),
        pl.BlockSpec((1, LANE), lambda b: (0, 0)),
    ]
    out_specs = pl.BlockSpec((batch_tile, LANE), lambda b: (b, 0))

    out_padded = pl.pallas_call(
        _lstm_fc_kernel,
        out_shape=jax.ShapeDtypeStruct((B, LANE), jnp.float32),
        grid_spec=pltpu.PrefetchScalarGridSpec(
            num_scalar_prefetch=0,
            grid=grid,
            in_specs=in_specs,
            out_specs=out_specs,
            scratch_shapes=[pltpu.VMEM((batch_tile, T, 4 * H), jnp.float32)],
        ),
        compiler_params=pltpu.CompilerParams(
            dimension_semantics=("parallel",),    # batch tiles -> both TCs (v7x)
            vmem_limit_bytes=32 << 20,
        ),
    )(*args)
    return out_padded[:, :NUM_CLASSES]


# ----------------------------------------------------- deterministic params --
def init_params(key):
    bound = 1.0 / jnp.sqrt(HIDDEN)  # PyTorch default U(-1/sqrt(H), 1/sqrt(H))
    ks = jax.random.split(key, 12)

    def u(k, shape):
        return jax.random.uniform(k, shape, jnp.float32, -bound, bound)

    # PyTorch stores weight_ih_l{k}: (4H, IN_k), weight_hh: (4H, H).
    # We pass transposes so kernel matmuls are (B,K)@(K,4H).
    wih0 = u(ks[0], (4 * HIDDEN, INPUT_SIZE)).T          # (IN, 4H)
    whh0 = u(ks[1], (4 * HIDDEN, HIDDEN)).T              # (H, 4H)
    b0 = (u(ks[2], (4 * HIDDEN,)) + u(ks[3], (4 * HIDDEN,))).reshape(1, -1)
    wih1 = u(ks[4], (4 * HIDDEN, HIDDEN)).T              # (H, 4H)
    whh1 = u(ks[5], (4 * HIDDEN, HIDDEN)).T              # (H, 4H)
    b1 = (u(ks[6], (4 * HIDDEN,)) + u(ks[7], (4 * HIDDEN,))).reshape(1, -1)

    fbound = 1.0 / jnp.sqrt(HIDDEN)
    wfc = jax.random.uniform(ks[8], (NUM_CLASSES, HIDDEN), jnp.float32,
                             -fbound, fbound).T          # (H, C)
    bfc = jax.random.uniform(ks[9], (NUM_CLASSES,), jnp.float32,
                             -fbound, fbound).reshape(1, -1)
    return dict(wih0=wih0, whh0=whh0, b0=b0,
                wih1=wih1, whh1=whh1, b1=b1,
                wfc=wfc, bfc=bfc)


# -------------------------------------------------------- pure-JAX reference -
def reference_forward(x, p):
    """Pure f32 reference with PyTorch LSTM semantics."""
    B = x.shape[0]

    def cell(x_t, h, c, wih, whh, b):
        g = x_t @ wih + h @ whh + b
        H = HIDDEN
        i = jax.nn.sigmoid(g[:, 0 * H:1 * H])
        f = jax.nn.sigmoid(g[:, 1 * H:2 * H])
        gg = jnp.tanh(g[:, 2 * H:3 * H])
        o = jax.nn.sigmoid(g[:, 3 * H:4 * H])
        c = f * c + i * gg
        h = o * jnp.tanh(c)
        return h, c

    h1 = c1 = h2 = c2 = jnp.zeros((B, HIDDEN), jnp.float32)
    for t in range(x.shape[1]):
        h1, c1 = cell(x[:, t, :], h1, c1, p["wih0"], p["whh0"], p["b0"])
        h2, c2 = cell(h1, h2, c2, p["wih1"], p["whh1"], p["b1"])
    return h2 @ p["wfc"] + p["bfc"]


# --------------------------------------------------------------------- main --
if __name__ == "__main__":
    key = jax.random.PRNGKey(0)
    kx, kp = jax.random.split(key)
    x = jax.random.normal(kx, (BATCH, SEQ, INPUT_SIZE), jnp.float32)
    params = init_params(kp)

    out = lstm_classifier_forward(x, params)
    out = jax.block_until_ready(out)

    ref = reference_forward(x, params)
    assert out.shape == (BATCH, NUM_CLASSES)
    # bf16 MXU operands (f32 accumulate / f32 state) vs. f32 reference.
    assert jnp.allclose(out, ref, atol=5e-2, rtol=5e-2), "mismatch vs reference"

    print("KERNEL_OK")
</pallas_src>

<mosaic_0001>
module attributes {stable_mosaic.version = 11 : i64} {
  func.func @_lstm_fc_kernel(%arg0: i32, %arg1: memref<8x8x256xbf16, #tpu.memory_space<vmem>>, %arg2: memref<256x512xbf16, #tpu.memory_space<vmem>>, %arg3: memref<1x512xf32, #tpu.memory_space<vmem>>, %arg4: memref<256x1024xbf16, #tpu.memory_space<vmem>>, %arg5: memref<1x512xf32, #tpu.memory_space<vmem>>, %arg6: memref<128x128xbf16, #tpu.memory_space<vmem>>, %arg7: memref<1x128xf32, #tpu.memory_space<vmem>>, %arg8: memref<8x128xf32, #tpu.memory_space<vmem>>, %arg9: memref<8x8x512xf32, #tpu.memory_space<vmem>>) attributes {dimension_semantics = [#tpu.dimension_semantics<parallel>], iteration_bounds = array<i64: 2>, scalar_prefetch = 0 : i64, scratch_operands = 1 : i64, tpu.core_type = #tpu.core_type<tc>, window_params = [{transform_indices = @transform_0, window_bounds = array<i64: 8, 8, 256>}, {pipeline_mode = #tpu.pipeline_mode<synchronous>, transform_indices = @transform_1, window_bounds = array<i64: 256, 512>}, {pipeline_mode = #tpu.pipeline_mode<synchronous>, transform_indices = @transform_2, window_bounds = array<i64: 1, 512>}, {pipeline_mode = #tpu.pipeline_mode<synchronous>, transform_indices = @transform_3, window_bounds = array<i64: 256, 1024>}, {pipeline_mode = #tpu.pipeline_mode<synchronous>, transform_indices = @transform_4, window_bounds = array<i64: 1, 512>}, {pipeline_mode = #tpu.pipeline_mode<synchronous>, transform_indices = @transform_5, window_bounds = array<i64: 128, 128>}, {pipeline_mode = #tpu.pipeline_mode<synchronous>, transform_indices = @transform_6, window_bounds = array<i64: 1, 128>}, {transform_indices = @transform_7, window_bounds = array<i64: 8, 128>}]} {
    %c0 = arith.constant 0 : index
    %c0_0 = arith.constant 0 : index
    %c0_1 = arith.constant 0 : index
    %0 = vector.load %arg1[%c0, %c0_0, %c0_1] : memref<8x8x256xbf16, #tpu.memory_space<vmem>>, vector<8x8x256xbf16>
    %1 = vector.shape_cast %0 : vector<8x8x256xbf16> to vector<64x256xbf16>
    %c0_2 = arith.constant 0 : index
    %c0_3 = arith.constant 0 : index
    %2 = vector.load %arg2[%c0_2, %c0_3] : memref<256x512xbf16, #tpu.memory_space<vmem>>, vector<256x512xbf16>
    %cst = arith.constant dense<0.000000e+00> : vector<64x512xf32>
    %3 = tpu.matmul %1, %2, %cst {dimension_numbers = #tpu.dot_dimension_numbers<[1], [0], [0], [1], [0, 0, 1, 1], [], []>} : vector<64x256xbf16>, vector<256x512xbf16>, vector<64x512xf32> -> vector<64x512xf32>
    %c0_4 = arith.constant 0 : index
    %c0_5 = arith.constant 0 : index
    %4 = vector.load %arg3[%c0_4, %c0_5] : memref<1x512xf32, #tpu.memory_space<vmem>>, vector<1x512xf32>
    %5 = vector.broadcast %4 : vector<1x512xf32> to vector<64x512xf32>
    %6 = arith.addf %3, %5 : vector<64x512xf32>
    %7 = vector.shape_cast %6 : vector<64x512xf32> to vector<8x8x512xf32>
    %c0_6 = arith.constant 0 : index
    %c0_7 = arith.constant 0 : index
    %c0_8 = arith.constant 0 : index
    %8 = vector.load %arg9[%c0_6, %c0_7, %c0_8] : memref<8x8x512xf32, #tpu.memory_space<vmem>>, vector<8x8x512xf32>
    tpu.vector_store %arg9[%c0_6, %c0_7, %c0_8], %7 {strides = array<i32>} : memref<8x8x512xf32, #tpu.memory_space<vmem>>, vector<8x8x512xf32>,
    %c0_9 = arith.constant 0 : index
    %c0_10 = arith.constant 0 : index
    %9 = vector.load %arg5[%c0_9, %c0_10] : memref<1x512xf32, #tpu.memory_space<vmem>>, vector<1x512xf32>
    %10 = vector.shape_cast %9 : vector<1x512xf32> to vector<1x512xf32>
    %11 = vector.broadcast %10 : vector<1x512xf32> to vector<8x512xf32>
    %cst_11 = arith.constant 0.000000e+00 : f32
    %12 = vector.broadcast %cst_11 : f32 to vector<8x128xf32>
    %cst_12 = arith.constant 0.000000e+00 : f32
    %13 = vector.broadcast %cst_12 : f32 to vector<8x512xf32>
    %c0_13 = arith.constant 0 : index
    %c0_14 = arith.constant 0 : index
    %c0_15 = arith.constant 0 : index
    %14 = vector.load %arg9[%c0_13, %c0_14, %c0_15] : memref<8x8x512xf32, #tpu.memory_space<vmem>>, vector<8x1x512xf32>
    %15 = vector.shape_cast %14 : vector<8x1x512xf32> to vector<8x512xf32>
    %16 = arith.addf %15, %13 : vector<8x512xf32>
    %17 = vector.extract_strided_slice %16 {offsets = [0, 0], sizes = [8, 128], strides = [1, 1]} : vector<8x512xf32> to vector<8x128xf32>
    %cst_16 = arith.constant 5.000000e-01 : f32
    %18 = vector.broadcast %cst_16 : f32 to vector<8x128xf32>
    %19 = arith.mulf %18, %17 : vector<8x128xf32>
    %20 = math.tanh %19 : vector<8x128xf32>
    %cst_17 = arith.constant 5.000000e-01 : f32
    %21 = vector.broadcast %cst_17 : f32 to vector<8x128xf32>
    %22 = arith.mulf %21, %20 : vector<8x128xf32>
    %cst_18 = arith.constant 5.000000e-01 : f32
    %23 = vector.broadcast %cst_18 : f32 to vector<8x128xf32>
    %24 = arith.addf %22, %23 : vector<8x128xf32>
    %25 = vector.extract_strided_slice %16 {offsets = [0, 128], sizes = [8, 128], strides = [1, 1]} : vector<8x512xf32> to vector<8x128xf32>
    %cst_19 = arith.constant 5.000000e-01 : f32
    %26 = vector.broadcast %cst_19 : f32 to vector<8x128xf32>
    %27 = arith.mulf %26, %25 : vector<8x128xf32>
    %28 = math.tanh %27 : vector<8x128xf32>
    %cst_20 = arith.constant 5.000000e-01 : f32
    %29 = vector.broadcast %cst_20 : f32 to vector<8x128xf32>
    %30 = arith.mulf %29, %28 : vector<8x128xf32>
    %cst_21 = arith.constant 5.000000e-01 : f32
    %31 = vector.broadcast %cst_21 : f32 to vector<8x128xf32>
    %32 = arith.addf %30, %31 : vector<8x128xf32>
    %33 = vector.extract_strided_slice %16 {offsets = [0, 256], sizes = [8, 128], strides = [1, 1]} : vector<8x512xf32> to vector<8x128xf32>
    %34 = math.tanh %33 : vector<8x128xf32>
    %35 = vector.extract_strided_slice %16 {offsets = [0, 384], sizes = [8, 128], strides = [1, 1]} : vector<8x512xf32> to vector<8x128xf32>
    %cst_22 = arith.constant 5.000000e-01 : f32
    %36 = vector.broadcast %cst_22 : f32 to vector<8x128xf32>
    %37 = arith.mulf %36, %35 : vector<8x128xf32>
    %38 = math.tanh %37 : vector<8x128xf32>
    %cst_23 = arith.constant 5.000000e-01 : f32
    %39 = vector.broadcast %cst_23 : f32 to vector<8x128xf32>
    %40 = arith.mulf %39, %38 : vector<8x128xf32>
    %cst_24 = arith.constant 5.000000e-01 : f32
    %41 = vector.broadcast %cst_24 : f32 to vector<8x128xf32>
    %42 = arith.addf %40, %41 : vector<8x128xf32>
    %43 = arith.mulf %32, %12 : vector<8x128xf32>
    %44 = arith.mulf %24, %34 : vector<8x128xf32>
    %45 = arith.addf %43, %44 : vector<8x128xf32>
    %46 = math.tanh %45 : vector<8x128xf32>
    %47 = arith.mulf %42, %46 : vector<8x128xf32>
    %48 = tpu.concatenate %47, %12 in 1 : vector<8x128xf32>, vector<8x128xf32> -> vector<8x256xf32>
    %49 = arith.truncf %48 : vector<8x256xf32> to vector<8x256xbf16>
    %c0_25 = arith.constant 0 : index
    %c0_26 = arith.constant 0 : index
    %50 = vector.load %arg4[%c0_25, %c0_26] : memref<256x1024xbf16, #tpu.memory_space<vmem>>, vector<256x1024xbf16>
    %cst_27 = arith.constant dense<0.000000e+00> : vector<8x1024xf32>
    %51 = tpu.matmul %49, %50, %cst_27 {dimension_numbers = #tpu.dot_dimension_numbers<[1], [0], [0], [1], [0, 0, 1, 1], [], []>} : vector<8x256xbf16>, vector<256x1024xbf16>, vector<8x1024xf32> -> vector<8x1024xf32>
    %52 = vector.extract_strided_slice %51 {offsets = [0, 0], sizes = [8, 512], strides = [1, 1]} : vector<8x1024xf32> to vector<8x512xf32>
    %53 = vector.extract_strided_slice %51 {offsets = [0, 512], sizes = [8, 512], strides = [1, 1]} : vector<8x1024xf32> to vector<8x512xf32>
    %54 = arith.addf %53, %11 : vector<8x512xf32>
    %55 = vector.extract_strided_slice %54 {offsets = [0, 0], sizes = [8, 128], strides = [1, 1]} : vector<8x512xf32> to vector<8x128xf32>
    %cst_28 = arith.constant 5.000000e-01 : f32
    %56 = vector.broadcast %cst_28 : f32 to vector<8x128xf32>
    %57 = arith.mulf %56, %55 : vector<8x128xf32>
    %58 = math.tanh %57 : vector<8x128xf32>
    %cst_29 = arith.constant 5.000000e-01 : f32
    %59 = vector.broadcast %cst_29 : f32 to vector<8x128xf32>
    %60 = arith.mulf %59, %58 : vector<8x128xf32>
    %cst_30 = arith.constant 5.000000e-01 : f32
    %61 = vector.broadcast %cst_30 : f32 to vector<8x128xf32>
    %62 = arith.addf %60, %61 : vector<8x128xf32>
    %63 = vector.extract_strided_slice %54 {offsets = [0, 128], sizes = [8, 128], strides = [1, 1]} : vector<8x512xf32> to vector<8x128xf32>
    %cst_31 = arith.constant 5.000000e-01 : f32
    %64 = vector.broadcast %cst_31 : f32 to vector<8x128xf32>
    %65 = arith.mulf %64, %63 : vector<8x128xf32>
    %66 = math.tanh %65 : vector<8x128xf32>
    %cst_32 = arith.constant 5.000000e-01 : f32
    %67 = vector.broadcast %cst_32 : f32 to vector<8x128xf32>
    %68 = arith.mulf %67, %66 : vector<8x128xf32>
    %cst_33 = arith.constant 5.000000e-01 : f32
    %69 = vector.broadcast %cst_33 : f32 to vector<8x128xf32>
    %70 = arith.addf %68, %69 : vector<8x128xf32>
    %71 = vector.extract_strided_slice %54 {offsets = [0, 256], sizes = [8, 128], strides = [1, 1]} : vector<8x512xf32> to vector<8x128xf32>
    %72 = math.tanh %71 : vector<8x128xf32>
    %73 = vector.extract_strided_slice %54 {offsets = [0, 384], sizes = [8, 128], strides = [1, 1]} : vector<8x512xf32> to vector<8x128xf32>
    %cst_34 = arith.constant 5.000000e-01 : f32
    %74 = vector.broadcast %cst_34 : f32 to vector<8x128xf32>
    %75 = arith.mulf %74, %73 : vector<8x128xf32>
    %76 = math.tanh %75 : vector<8x128xf32>
    %cst_35 = arith.constant 5.000000e-01 : f32
    %77 = vector.broadcast %cst_35 : f32 to vector<8x128xf32>
    %78 = arith.mulf %77, %76 : vector<8x128xf32>
    %cst_36 = arith.constant 5.000000e-01 : f32
    %79 = vector.broadcast %cst_36 : f32 to vector<8x128xf32>
    %80 = arith.addf %78, %79 : vector<8x128xf32>
    %81 = arith.mulf %70, %12 : vector<8x128xf32>
    %82 = arith.mulf %62, %72 : vector<8x128xf32>
    %83 = arith.addf %81, %82 : vector<8x128xf32>
    %84 = math.tanh %83 : vector<8x128xf32>
    %85 = arith.mulf %80, %84 : vector<8x128xf32>
    %c0_37 = arith.constant 0 : index
    %c1 = arith.constant 1 : index
    %c0_38 = arith.constant 0 : index
    %86 = vector.load %arg9[%c0_37, %c1, %c0_38] : memref<8x8x512xf32, #tpu.memory_space<vmem>>, vector<8x1x512xf32>
    %87 = vector.shape_cast %86 : vector<8x1x512xf32> to vector<8x512xf32>
    %88 = arith.addf %87, %52 : vector<8x512xf32>
    %89 = vector.extract_strided_slice %88 {offsets = [0, 0], sizes = [8, 128], strides = [1, 1]} : vector<8x512xf32> to vector<8x128xf32>
    %cst_39 = arith.constant 5.000000e-01 : f32
    %90 = vector.broadcast %cst_39 : f32 to vector<8x128xf32>
    %91 = arith.mulf %90, %89 : vector<8x128xf32>
    %92 = math.tanh %91 : vector<8x128xf32>
    %cst_40 = arith.constant 5.000000e-01 : f32
    %93 = vector.broadcast %cst_40 : f32 to vector<8x128xf32>
    %94 = arith.mulf %93, %92 : vector<8x128xf32>
    %cst_41 = arith.constant 5.000000e-01 : f32
    %95 = vector.broadcast %cst_41 : f32 to vector<8x128xf32>
    %96 = arith.addf %94, %95 : vector<8x128xf32>
    %97 = vector.extract_strided_slice %88 {offsets = [0, 128], sizes = [8, 128], strides = [1, 1]} : vector<8x512xf32> to vector<8x128xf32>
    %cst_42 = arith.constant 5.000000e-01 : f32
    %98 = vector.broadcast %cst_42 : f32 to vector<8x128xf32>
    %99 = arith.mulf %98, %97 : vector<8x128xf32>
    %100 = math.tanh %99 : vector<8x128xf32>
    %cst_43 = arith.constant 5.000000e-01 : f32
    %101 = vector.broadcast %cst_43 : f32 to vector<8x128xf32>
    %102 = arith.mulf %101, %100 : vector<8x128xf32>
    %cst_44 = arith.constant 5.000000e-01 : f32
    %103 = vector.broadcast %cst_44 : f32 to vector<8x128xf32>
    %104 = arith.addf %102, %103 : vector<8x128xf32>
    %105 = vector.extract_strided_slice %88 {offsets = [0, 256], sizes = [8, 128], strides = [1, 1]} : vector<8x512xf32> to vector<8x128xf32>
    %106 = math.tanh %105 : vector<8x128xf32>
    %107 = vector.extract_strided_slice %88 {offsets = [0, 384], sizes = [8, 128], strides = [1, 1]} : vector<8x512xf32> to vector<8x128xf32>
    %cst_45 = arith.constant 5.000000e-01 : f32
    %108 = vector.broadcast %cst_45 : f32 to vector<8x128xf32>
    %109 = arith.mulf %108, %107 : vector<8x128xf32>
    %110 = math.tanh %109 : vector<8x128xf32>
    %cst_46 = arith.constant 5.000000e-01 : f32
    %111 = vector.broadcast %cst_46 : f32 to vector<8x128xf32>
    %112 = arith.mulf %111, %110 : vector<8x128xf32>
    %cst_47 = arith.constant 5.000000e-01 : f32
    %113 = vector.broadcast %cst_47 : f32 to vector<8x128xf32>
    %114 = arith.addf %112, %113 : vector<8x128xf32>
    %115 = arith.mulf %104, %45 : vector<8x128xf32>
    %116 = arith.mulf %96, %106 : vector<8x128xf32>
    %117 = arith.addf %115, %116 : vector<8x128xf32>
    %118 = math.tanh %117 : vector<8x128xf32>
    %119 = arith.mulf %114, %118 : vector<8x128xf32>
    %120 = tpu.concatenate %119, %85 in 1 : vector<8x128xf32>, vector<8x128xf32> -> vector<8x256xf32>
    %121 = arith.truncf %120 : vector<8x256xf32> to vector<8x256xbf16>
    %c0_48 = arith.constant 0 : index
    %c0_49 = arith.constant 0 : index
    %122 = vector.load %arg4[%c0_48, %c0_49] : memref<256x1024xbf16, #tpu.memory_space<vmem>>, vector<256x1024xbf16>
    %cst_50 = arith.constant dense<0.000000e+00> : vector<8x1024xf32>
    %123 = tpu.matmul %121, %122, %cst_50 {dimension_numbers = #tpu.dot_dimension_numbers<[1], [0], [0], [1], [0, 0, 1, 1], [], []>} : vector<8x256xbf16>, vector<256x1024xbf16>, vector<8x1024xf32> -> vector<8x1024xf32>
    %124 = vector.extract_strided_slice %123 {offsets = [0, 0], sizes = [8, 512], strides = [1, 1]} : vector<8x1024xf32> to vector<8x512xf32>
    %125 = vector.extract_strided_slice %123 {offsets = [0, 512], sizes = [8, 512], strides = [1, 1]} : vector<8x1024xf32> to vector<8x512xf32>
    %126 = arith.addf %125, %11 : vector<8x512xf32>
    %127 = vector.extract_strided_slice %126 {offsets = [0, 0], sizes = [8, 128], strides = [1, 1]} : vector<8x512xf32> to vector<8x128xf32>
    %cst_51 = arith.constant 5.000000e-01 : f32
    %128 = vector.broadcast %cst_51 : f32 to vector<8x128xf32>
    %129 = arith.mulf %128, %127 : vector<8x128xf32>
    %130 = math.tanh %129 : vector<8x128xf32>
    %cst_52 = arith.constant 5.000000e-01 : f32
    %131 = vector.broadcast %cst_52 : f32 to vector<8x128xf32>
    %132 = arith.mulf %131, %130 : vector<8x128xf32>
    %cst_53 = arith.constant 5.000000e-01 : f32
    %133 = vector.broadcast %cst_53 : f32 to vector<8x128xf32>
    %134 = arith.addf %132, %133 : vector<8x128xf32>
    %135 = vector.extract_strided_slice %126 {offsets = [0, 128], sizes = [8, 128], strides = [1, 1]} : vector<8x512xf32> to vector<8x128xf32>
    %cst_54 = arith.constant 5.000000e-01 : f32
    %136 = vector.broadcast %cst_54 : f32 to vector<8x128xf32>
    %137 = arith.mulf %136, %135 : vector<8x128xf32>
    %138 = math.tanh %137 : vector<8x128xf32>
    %cst_55 = arith.constant 5.000000e-01 : f32
    %139 = vector.broadcast %cst_55 : f32 to vector<8x128xf32>
    %140 = arith.mulf %139, %138 : vector<8x128xf32>
    %cst_56 = arith.constant 5.000000e-01 : f32
    %141 = vector.broadcast %cst_56 : f32 to vector<8x128xf32>
    %142 = arith.addf %140, %141 : vector<8x128xf32>
    %143 = vector.extract_strided_slice %126 {offsets = [0, 256], sizes = [8, 128], strides = [1, 1]} : vector<8x512xf32> to vector<8x128xf32>
    %144 = math.tanh %143 : vector<8x128xf32>
    %145 = vector.extract_strided_slice %126 {offsets = [0, 384], sizes = [8, 128], strides = [1, 1]} : vector<8x512xf32> to vector<8x128xf32>
    %cst_57 = arith.constant 5.000000e-01 : f32
    %146 = vector.broadcast %cst_57 : f32 to vector<8x128xf32>
    %147 = arith.mulf %146, %145 : vector<8x128xf32>
    %148 = math.tanh %147 : vector<8x128xf32>
    %cst_58 = arith.constant 5.000000e-01 : f32
    %149 = vector.broadcast %cst_58 : f32 to vector<8x128xf32>
    %150 = arith.mulf %149, %148 : vector<8x128xf32>
    %cst_59 = arith.constant 5.000000e-01 : f32
    %151 = vector.broadcast %cst_59 : f32 to vector<8x128xf32>
    %152 = arith.addf %150, %151 : vector<8x128xf32>
    %153 = arith.mulf %142, %83 : vector<8x128xf32>
    %154 = arith.mulf %134, %144 : vector<8x128xf32>
    %155 = arith.addf %153, %154 : vector<8x128xf32>
    %156 = math.tanh %155 : vector<8x128xf32>
    %157 = arith.mulf %152, %156 : vector<8x128xf32>
    %c0_60 = arith.constant 0 : index
    %c2 = arith.constant 2 : index
    %c0_61 = arith.constant 0 : index
    %158 = vector.load %arg9[%c0_60, %c2, %c0_61] : memref<8x8x512xf32, #tpu.memory_space<vmem>>, vector<8x1x512xf32>
    %159 = vector.shape_cast %158 : vector<8x1x512xf32> to vector<8x512xf32>
    %160 = arith.addf %159, %124 : vector<8x512xf32>
    %161 = vector.extract_strided_slice %160 {offsets = [0, 0], sizes = [8, 128], strides = [1, 1]} : vector<8x512xf32> to vector<8x128xf32>
    %cst_62 = arith.constant 5.000000e-01 : f32
    %162 = vector.broadcast %cst_62 : f32 to vector<8x128xf32>
    %163 = arith.mulf %162, %161 : vector<8x128xf32>
    %164 = math.tanh %163 : vector<8x128xf32>
    %cst_63 = arith.constant 5.000000e-01 : f32
    %165 = vector.broadcast %cst_63 : f32 to vector<8x128xf32>
    %166 = arith.mulf %165, %164 : vector<8x128xf32>
    %cst_64 = arith.constant 5.000000e-01 : f32
    %167 = vector.broadcast %cst_64 : f32 to vector<8x128xf32>
    %168 = arith.addf %166, %167 : vector<8x128xf32>
    %169 = vector.extract_strided_slice %160 {offsets = [0, 128], sizes = [8, 128], strides = [1, 1]} : vector<8x512xf32> to vector<8x128xf32>
    %cst_65 = arith.constant 5.000000e-01 : f32
    %170 = vector.broadcast %cst_65 : f32 to vector<8x128xf32>
    %171 = arith.mulf %170, %169 : vector<8x128xf32>
    %172 = math.tanh %171 : vector<8x128xf32>
    %cst_66 = arith.constant 5.000000e-01 : f32
    %173 = vector.broadcast %cst_66 : f32 to vector<8x128xf32>
    %174 = arith.mulf %173, %172 : vector<8x128xf32>
    %cst_67 = arith.constant 5.000000e-01 : f32
    %175 = vector.broadcast %cst_67 : f32 to vector<8x128xf32>
    %176 = arith.addf %174, %175 : vector<8x128xf32>
    %177 = vector.extract_strided_slice %160 {offsets = [0, 256], sizes = [8, 128], strides = [1, 1]} : vector<8x512xf32> to vector<8x128xf32>
    %178 = math.tanh %177 : vector<8x128xf32>
    %179 = vector.extract_strided_slice %160 {offsets = [0, 384], sizes = [8, 128], strides = [1, 1]} : vector<8x512xf32> to vector<8x128xf32>
    %cst_68 = arith.constant 5.000000e-01 : f32
    %180 = vector.broadcast %cst_68 : f32 to vector<8x128xf32>
    %181 = arith.mulf %180, %179 : vector<8x128xf32>
    %182 = math.tanh %181 : vector<8x128xf32>
    %cst_69 = arith.constant 5.000000e-01 : f32
    %183 = vector.broadcast %cst_69 : f32 to vector<8x128xf32>
    %184 = arith.mulf %183, %182 : vector<8x128xf32>
    %cst_70 = arith.constant 5.000000e-01 : f32
    %185 = vector.broadcast %cst_70 : f32 to vector<8x128xf32>
    %186 = arith.addf %184, %185 : vector<8x128xf32>
    %187 = arith.mulf %176, %117 : vector<8x128xf32>
    %188 = arith.mulf %168, %178 : vector<8x128xf32>
    %189 = arith.addf %187, %188 : vector<8x128xf32>
    %190 = math.tanh %189 : vector<8x128xf32>
    %191 = arith.mulf %186, %190 : vector<8x128xf32>
    %192 = tpu.concatenate %191, %157 in 1 : vector<8x128xf32>, vector<8x128xf32> -> vector<8x256xf32>
    %193 = arith.truncf %192 : vector<8x256xf32> to vector<8x256xbf16>
    %c0_71 = arith.constant 0 : index
    %c0_72 = arith.constant 0 : index
    %194 = vector.load %arg4[%c0_71, %c0_72] : memref<256x1024xbf16, #tpu.memory_space<vmem>>, vector<256x1024xbf16>
    %cst_73 = arith.constant dense<0.000000e+00> : vector<8x1024xf32>
    %195 = tpu.matmul %193, %194, %cst_73 {dimension_numbers = #tpu.dot_dimension_numbers<[1], [0], [0], [1], [0, 0, 1, 1], [], []>} : vector<8x256xbf16>, vector<256x1024xbf16>, vector<8x1024xf32> -> vector<8x1024xf32>
    %196 = vector.extract_strided_slice %195 {offsets = [0, 0], sizes = [8, 512], strides = [1, 1]} : vector<8x1024xf32> to vector<8x512xf32>
    %197 = vector.extract_strided_slice %195 {offsets = [0, 512], sizes = [8, 512], strides = [1, 1]} : vector<8x1024xf32> to vector<8x512xf32>
    %198 = arith.addf %197, %11 : vector<8x512xf32>
    %199 = vector.extract_strided_slice %198 {offsets = [0, 0], sizes = [8, 128], strides = [1, 1]} : vector<8x512xf32> to vector<8x128xf32>
    %cst_74 = arith.constant 5.000000e-01 : f32
    %200 = vector.broadcast %cst_74 : f32 to vector<8x128xf32>
    %201 = arith.mulf %200, %199 : vector<8x128xf32>
    %202 = math.tanh %201 : vector<8x128xf32>
    %cst_75 = arith.constant 5.000000e-01 : f32
    %203 = vector.broadcast %cst_75 : f32 to vector<8x128xf32>
    %204 = arith.mulf %203, %202 : vector<8x128xf32>
    %cst_76 = arith.constant 5.000000e-01 : f32
    %205 = vector.broadcast %cst_76 : f32 to vector<8x128xf32>
    %206 = arith.addf %204, %205 : vector<8x128xf32>
    %207 = vector.extract_strided_slice %198 {offsets = [0, 128], sizes = [8, 128], strides = [1, 1]} : vector<8x512xf32> to vector<8x128xf32>
    %cst_77 = arith.constant 5.000000e-01 : f32
    %208 = vector.broadcast %cst_77 : f32 to vector<8x128xf32>
    %209 = arith.mulf %208, %207 : vector<8x128xf32>
    %210 = math.tanh %209 : vector<8x128xf32>
    %cst_78 = arith.constant 5.000000e-01 : f32
    %211 = vector.broadcast %cst_78 : f32 to vector<8x128xf32>
    %212 = arith.mulf %211, %210 : vector<8x128xf32>
    %cst_79 = arith.constant 5.000000e-01 : f32
    %213 = vector.broadcast %cst_79 : f32 to vector<8x128xf32>
    %214 = arith.addf %212, %213 : vector<8x128xf32>
    %215 = vector.extract_strided_slice %198 {offsets = [0, 256], sizes = [8, 128], strides = [1, 1]} : vector<8x512xf32> to vector<8x128xf32>
    %216 = math.tanh %215 : vector<8x128xf32>
    %217 = vector.extract_strided_slice %198 {offsets = [0, 384], sizes = [8, 128], strides = [1, 1]} : vector<8x512xf32> to vector<8x128xf32>
    %cst_80 = arith.constant 5.000000e-01 : f32
    %218 = vector.broadcast %cst_80 : f32 to vector<8x128xf32>
    %219 = arith.mulf %218, %217 : vector<8x128xf32>
    %220 = math.tanh %219 : vector<8x128xf32>
    %cst_81 = arith.constant 5.000000e-01 : f32
    %221 = vector.broadcast %cst_81 : f32 to vector<8x128xf32>
    %222 = arith.mulf %221, %220 : vector<8x128xf32>
    %cst_82 = arith.constant 5.000000e-01 : f32
    %223 = vector.broadcast %cst_82 : f32 to vector<8x128xf32>
    %224 = arith.addf %222, %223 : vector<8x128xf32>
    %225 = arith.mulf %214, %155 : vector<8x128xf32>
    %226 = arith.mulf %206, %216 : vector<8x128xf32>
    %227 = arith.addf %225, %226 : vector<8x128xf32>
    %228 = math.tanh %227 : vector<8x128xf32>
    %229 = arith.mulf %224, %228 : vector<8x128xf32>
    %c0_83 = arith.constant 0 : index
    %c3 = arith.constant 3 : index
    %c0_84 = arith.constant 0 : index
    %230 = vector.load %arg9[%c0_83, %c3, %c0_84] : memref<8x8x512xf32, #tpu.memory_space<vmem>>, vector<8x1x512xf32>
    %231 = vector.shape_cast %230 : vector<8x1x512xf32> to vector<8x512xf32>
    %232 = arith.addf %231, %196 : vector<8x512xf32>
    %233 = vector.extract_strided_slice %232 {offsets = [0, 0], sizes = [8, 128], strides = [1, 1]} : vector<8x512xf32> to vector<8x128xf32>
    %cst_85 = arith.constant 5.000000e-01 : f32
    %234 = vector.broadcast %cst_85 : f32 to vector<8x128xf32>
    %235 = arith.mulf %234, %233 : vector<8x128xf32>
    %236 = math.tanh %235 : vector<8x128xf32>
    %cst_86 = arith.constant 5.000000e-01 : f32
    %237 = vector.broadcast %cst_86 : f32 to vector<8x128xf32>
    %238 = arith.mulf %237, %236 : vector<8x128xf32>
    %cst_87 = arith.constant 5.000000e-01 : f32
    %239 = vector.broadcast %cst_87 : f32 to vector<8x128xf32>
    %240 = arith.addf %238, %239 : vector<8x128xf32>
    %241 = vector.extract_strided_slice %232 {offsets = [0, 128], sizes = [8, 128], strides = [1, 1]} : vector<8x512xf32> to vector<8x128xf32>
    %cst_88 = arith.constant 5.000000e-01 : f32
    %242 = vector.broadcast %cst_88 : f32 to vector<8x128xf32>
    %243 = arith.mulf %242, %241 : vector<8x128xf32>
    %244 = math.tanh %243 : vector<8x128xf32>
    %cst_89 = arith.constant 5.000000e-01 : f32
    %245 = vector.broadcast %cst_89 : f32 to vector<8x128xf32>
    %246 = arith.mulf %245, %244 : vector<8x128xf32>
    %cst_90 = arith.constant 5.000000e-01 : f32
    %247 = vector.broadcast %cst_90 : f32 to vector<8x128xf32>
    %248 = arith.addf %246, %247 : vector<8x128xf32>
    %249 = vector.extract_strided_slice %232 {offsets = [0, 256], sizes = [8, 128], strides = [1, 1]} : vector<8x512xf32> to vector<8x128xf32>
    %250 = math.tanh %249 : vector<8x128xf32>
    %251 = vector.extract_strided_slice %232 {offsets = [0, 384], sizes = [8, 128], strides = [1, 1]} : vector<8x512xf32> to vector<8x128xf32>
    %cst_91 = arith.constant 5.000000e-01 : f32
    %252 = vector.broadcast %cst_91 : f32 to vector<8x128xf32>
    %253 = arith.mulf %252, %251 : vector<8x128xf32>
    %254 = math.tanh %253 : vector<8x128xf32>
    %cst_92 = arith.constant 5.000000e-01 : f32
    %255 = vector.broadcast %cst_92 : f32 to vector<8x128xf32>
    %256 = arith.mulf %255, %254 : vector<8x128xf32>
    %cst_93 = arith.constant 5.000000e-01 : f32
    %257 = vector.broadcast %cst_93 : f32 to vector<8x128xf32>
    %258 = arith.addf %256, %257 : vector<8x128xf32>
    %259 = arith.mulf %248, %189 : vector<8x128xf32>
    %260 = arith.mulf %240, %250 : vector<8x128xf32>
    %261 = arith.addf %259, %260 : vector<8x128xf32>
    %262 = math.tanh %261 : vector<8x128xf32>
    %263 = arith.mulf %258, %262 : vector<8x128xf32>
    %264 = tpu.concatenate %263, %229 in 1 : vector<8x128xf32>, vector<8x128xf32> -> vector<8x256xf32>
    %265 = arith.truncf %264 : vector<8x256xf32> to vector<8x256xbf16>
    %c0_94 = arith.constant 0 : index
    %c0_95 = arith.constant 0 : index
    %266 = vector.load %arg4[%c0_94, %c0_95] : memref<256x1024xbf16, #tpu.memory_space<vmem>>, vector<256x1024xbf16>
    %cst_96 = arith.constant dense<0.000000e+00> : vector<8x1024xf32>
    %267 = tpu.matmul %265, %266, %cst_96 {dimension_numbers = #tpu.dot_dimension_numbers<[1], [0], [0], [1], [0, 0, 1, 1], [], []>} : vector<8x256xbf16>, vector<256x1024xbf16>, vector<8x1024xf32> -> vector<8x1024xf32>
    %268 = vector.extract_strided_slice %267 {offsets = [0, 0], sizes = [8, 512], strides = [1, 1]} : vector<8x1024xf32> to vector<8x512xf32>
    %269 = vector.extract_strided_slice %267 {offsets = [0, 512], sizes = [8, 512], strides = [1, 1]} : vector<8x1024xf32> to vector<8x512xf32>
    %270 = arith.addf %269, %11 : vector<8x512xf32>
    %271 = vector.extract_strided_slice %270 {offsets = [0, 0], sizes = [8, 128], strides = [1, 1]} : vector<8x512xf32> to vector<8x128xf32>
    %cst_97 = arith.constant 5.000000e-01 : f32
    %272 = vector.broadcast %cst_97 : f32 to vector<8x128xf32>
    %273 = arith.mulf %272, %271 : vector<8x128xf32>
    %274 = math.tanh %273 : vector<8x128xf32>
    %cst_98 = arith.constant 5.000000e-01 : f32
    %275 = vector.broadcast %cst_98 : f32 to vector<8x128xf32>
    %276 = arith.mulf %275, %274 : vector<8x128xf32>
    %cst_99 = arith.constant 5.000000e-01 : f32
    %277 = vector.broadcast %cst_99 : f32 to vector<8x128xf32>
    %278 = arith.addf %276, %277 : vector<8x128xf32>
    %279 = vector.extract_strided_slice %270 {offsets = [0, 128], sizes = [8, 128], strides = [1, 1]} : vector<8x512xf32> to vector<8x128xf32>
    %cst_100 = arith.constant 5.000000e-01 : f32
    %280 = vector.broadcast %cst_100 : f32 to vector<8x128xf32>
    %281 = arith.mulf %280, %279 : vector<8x128xf32>
    %282 = math.tanh %281 : vector<8x128xf32>
    %cst_101 = arith.constant 5.000000e-01 : f32
    %283 = vector.broadcast %cst_101 : f32 to vector<8x128xf32>
    %284 = arith.mulf %283, %282 : vector<8x128xf32>
    %cst_102 = arith.constant 5.000000e-01 : f32
    %285 = vector.broadcast %cst_102 : f32 to vector<8x128xf32>
    %286 = arith.addf %284, %285 : vector<8x128xf32>
    %287 = vector.extract_strided_slice %270 {offsets = [0, 256], sizes = [8, 128], strides = [1, 1]} : vector<8x512xf32> to vector<8x128xf32>
    %288 = math.tanh %287 : vector<8x128xf32>
    %289 = vector.extract_strided_slice %270 {offsets = [0, 384], sizes = [8, 128], strides = [1, 1]} : vector<8x512xf32> to vector<8x128xf32>
    %cst_103 = arith.constant 5.000000e-01 : f32
    %290 = vector.broadcast %cst_103 : f32 to vector<8x128xf32>
    %291 = arith.mulf %290, %289 : vector<8x128xf32>
    %292 = math.tanh %291 : vector<8x128xf32>
    %cst_104 = arith.constant 5.000000e-01 : f32
    %293 = vector.broadcast %cst_104 : f32 to vector<8x128xf32>
    %294 = arith.mulf %293, %292 : vector<8x128xf32>
    %cst_105 = arith.constant 5.000000e-01 : f32
    %295 = vector.broadcast %cst_105 : f32 to vector<8x128xf32>
    %296 = arith.addf %294, %295 : vector<8x128xf32>
    %297 = arith.mulf %286, %227 : vector<8x128xf32>
    %298 = arith.mulf %278, %288 : vector<8x128xf32>
    %299 = arith.addf %297, %298 : vector<8x128xf32>
    %300 = math.tanh %299 : vector<8x128xf32>
    %301 = arith.mulf %296, %300 : vector<8x128xf32>
    %c0_106 = arith.constant 0 : index
    %c4 = arith.constant 4 : index
    %c0_107 = arith.constant 0 : index
    %302 = vector.load %arg9[%c0_106, %c4, %c0_107] : memref<8x8x512xf32, #tpu.memory_space<vmem>>, vector<8x1x512xf32>
    %303 = vector.shape_cast %302 : vector<8x1x512xf32> to vector<8x512xf32>
    %304 = arith.addf %303, %268 : vector<8x512xf32>
    %305 = vector.extract_strided_slice %304 {offsets = [0, 0], sizes = [8, 128], strides = [1, 1]} : vector<8x512xf32> to vector<8x128xf32>
    %cst_108 = arith.constant 5.000000e-01 : f32
    %306 = vector.broadcast %cst_108 : f32 to vector<8x128xf32>
    %307 = arith.mulf %306, %305 : vector<8x128xf32>
    %308 = math.tanh %307 : vector<8x128xf32>
    %cst_109 = arith.constant 5.000000e-01 : f32
    %309 = vector.broadcast %cst_109 : f32 to vector<8x128xf32>
    %310 = arith.mulf %309, %308 : vector<8x128xf32>
    %cst_110 = arith.constant 5.000000e-01 : f32
    %311 = vector.broadcast %cst_110 : f32 to vector<8x128xf32>
    %312 = arith.addf %310, %311 : vector<8x128xf32>
    %313 = vector.extract_strided_slice %304 {offsets = [0, 128], sizes = [8, 128], strides = [1, 1]} : vector<8x512xf32> to vector<8x128xf32>
    %cst_111 = arith.constant 5.000000e-01 : f32
    %314 = vector.broadcast %cst_111 : f32 to vector<8x128xf32>
    %315 = arith.mulf %314, %313 : vector<8x128xf32>
    %316 = math.tanh %315 : vector<8x128xf32>
    %cst_112 = arith.constant 5.000000e-01 : f32
    %317 = vector.broadcast %cst_112 : f32 to vector<8x128xf32>
    %318 = arith.mulf %317, %316 : vector<8x128xf32>
    %cst_113 = arith.constant 5.000000e-01 : f32
    %319 = vector.broadcast %cst_113 : f32 to vector<8x128xf32>
    %320 = arith.addf %318, %319 : vector<8x128xf32>
    %321 = vector.extract_strided_slice %304 {offsets = [0, 256], sizes = [8, 128], strides = [1, 1]} : vector<8x512xf32> to vector<8x128xf32>
    %322 = math.tanh %321 : vector<8x128xf32>
    %323 = vector.extract_strided_slice %304 {offsets = [0, 384], sizes = [8, 128], strides = [1, 1]} : vector<8x512xf32> to vector<8x128xf32>
    %cst_114 = arith.constant 5.000000e-01 : f32
    %324 = vector.broadcast %cst_114 : f32 to vector<8x128xf32>
    %325 = arith.mulf %324, %323 : vector<8x128xf32>
    %326 = math.tanh %325 : vector<8x128xf32>
    %cst_115 = arith.constant 5.000000e-01 : f32
    %327 = vector.broadcast %cst_115 : f32 to vector<8x128xf32>
    %328 = arith.mulf %327, %326 : vector<8x128xf32>
    %cst_116 = arith.constant 5.000000e-01 : f32
    %329 = vector.broadcast %cst_116 : f32 to vector<8x128xf32>
    %330 = arith.addf %328, %329 : vector<8x128xf32>
    %331 = arith.mulf %320, %261 : vector<8x128xf32>
    %332 = arith.mulf %312, %322 : vector<8x128xf32>
    %333 = arith.addf %331, %332 : vector<8x128xf32>
    %334 = math.tanh %333 : vector<8x128xf32>
    %335 = arith.mulf %330, %334 : vector<8x128xf32>
    %336 = tpu.concatenate %335, %301 in 1 : vector<8x128xf32>, vector<8x128xf32> -> vector<8x256xf32>
    %337 = arith.truncf %336 : vector<8x256xf32> to vector<8x256xbf16>
    %c0_117 = arith.constant 0 : index
    %c0_118 = arith.constant 0 : index
    %338 = vector.load %arg4[%c0_117, %c0_118] : memref<256x1024xbf16, #tpu.memory_space<vmem>>, vector<256x1024xbf16>
    %cst_119 = arith.constant dense<0.000000e+00> : vector<8x1024xf32>
    %339 = tpu.matmul %337, %338, %cst_119 {dimension_numbers = #tpu.dot_dimension_numbers<[1], [0], [0], [1], [0, 0, 1, 1], [], []>} : vector<8x256xbf16>, vector<256x1024xbf16>, vector<8x1024xf32> -> vector<8x1024xf32>
    %340 = vector.extract_strided_slice %339 {offsets = [0, 0], sizes = [8, 512], strides = [1, 1]} : vector<8x1024xf32> to vector<8x512xf32>
    %341 = vector.extract_strided_slice %339 {offsets = [0, 512], sizes = [8, 512], strides = [1, 1]} : vector<8x1024xf32> to vector<8x512xf32>
    %342 = arith.addf %341, %11 : vector<8x512xf32>
    %343 = vector.extract_strided_slice %342 {offsets = [0, 0], sizes = [8, 128], strides = [1, 1]} : vector<8x512xf32> to vector<8x128xf32>
    %cst_120 = arith.constant 5.000000e-01 : f32
    %344 = vector.broadcast %cst_120 : f32 to vector<8x128xf32>
    %345 = arith.mulf %344, %343 : vector<8x128xf32>
    %346 = math.tanh %345 : vector<8x128xf32>
    %cst_121 = arith.constant 5.000000e-01 : f32
    %347 = vector.broadcast %cst_121 : f32 to vector<8x128xf32>
    %348 = arith.mulf %347, %346 : vector<8x128xf32>
    %cst_122 = arith.constant 5.000000e-01 : f32
    %349 = vector.broadcast %cst_122 : f32 to vector<8x128xf32>
    %350 = arith.addf %348, %349 : vector<8x128xf32>
    %351 = vector.extract_strided_slice %342 {offsets = [0, 128], sizes = [8, 128], strides = [1, 1]} : vector<8x512xf32> to vector<8x128xf32>
    %cst_123 = arith.constant 5.000000e-01 : f32
    %352 = vector.broadcast %cst_123 : f32 to vector<8x128xf32>
    %353 = arith.mulf %352, %351 : vector<8x128xf32>
    %354 = math.tanh %353 : vector<8x128xf32>
    %cst_124 = arith.constant 5.000000e-01 : f32
    %355 = vector.broadcast %cst_124 : f32 to vector<8x128xf32>
    %356 = arith.mulf %355, %354 : vector<8x128xf32>
    %cst_125 = arith.constant 5.000000e-01 : f32
    %357 = vector.broadcast %cst_125 : f32 to vector<8x128xf32>
    %358 = arith.addf %356, %357 : vector<8x128xf32>
    %359 = vector.extract_strided_slice %342 {offsets = [0, 256], sizes = [8, 128], strides = [1, 1]} : vector<8x512xf32> to vector<8x128xf32>
    %360 = math.tanh %359 : vector<8x128xf32>
    %361 = vector.extract_strided_slice %342 {offsets = [0, 384], sizes = [8, 128], strides = [1, 1]} : vector<8x512xf32> to vector<8x128xf32>
    %cst_126 = arith.constant 5.000000e-01 : f32
    %362 = vector.broadcast %cst_126 : f32 to vector<8x128xf32>
    %363 = arith.mulf %362, %361 : vector<8x128xf32>
    %364 = math.tanh %363 : vector<8x128xf32>
    %cst_127 = arith.constant 5.000000e-01 : f32
    %365 = vector.broadcast %cst_127 : f32 to vector<8x128xf32>
    %366 = arith.mulf %365, %364 : vector<8x128xf32>
    %cst_128 = arith.constant 5.000000e-01 : f32
    %367 = vector.broadcast %cst_128 : f32 to vector<8x128xf32>
    %368 = arith.addf %366, %367 : vector<8x128xf32>
    %369 = arith.mulf %358, %299 : vector<8x128xf32>
    %370 = arith.mulf %350, %360 : vector<8x128xf32>
    %371 = arith.addf %369, %370 : vector<8x128xf32>
    %372 = math.tanh %371 : vector<8x128xf32>
    %373 = arith.mulf %368, %372 : vector<8x128xf32>
    %c0_129 = arith.constant 0 : index
    %c5 = arith.constant 5 : index
    %c0_130 = arith.constant 0 : index
    %374 = vector.load %arg9[%c0_129, %c5, %c0_130] : memref<8x8x512xf32, #tpu.memory_space<vmem>>, vector<8x1x512xf32>
    %375 = vector.shape_cast %374 : vector<8x1x512xf32> to vector<8x512xf32>
    %376 = arith.addf %375, %340 : vector<8x512xf32>
    %377 = vector.extract_strided_slice %376 {offsets = [0, 0], sizes = [8, 128], strides = [1, 1]} : vector<8x512xf32> to vector<8x128xf32>
    %cst_131 = arith.constant 5.000000e-01 : f32
    %378 = vector.broadcast %cst_131 : f32 to vector<8x128xf32>
    %379 = arith.mulf %378, %377 : vector<8x128xf32>
    %380 = math.tanh %379 : vector<8x128xf32>
    %cst_132 = arith.constant 5.000000e-01 : f32
    %381 = vector.broadcast %cst_132 : f32 to vector<8x128xf32>
    %382 = arith.mulf %381, %380 : vector<8x128xf32>
    %cst_133 = arith.constant 5.000000e-01 : f32
    %383 = vector.broadcast %cst_133 : f32 to vector<8x128xf32>
    %384 = arith.addf %382, %383 : vector<8x128xf32>
    %385 = vector.extract_strided_slice %376 {offsets = [0, 128], sizes = [8, 128], strides = [1, 1]} : vector<8x512xf32> to vector<8x128xf32>
    %cst_134 = arith.constant 5.000000e-01 : f32
    %386 = vector.broadcast %cst_134 : f32 to vector<8x128xf32>
    %387 = arith.mulf %386, %385 : vector<8x128xf32>
    %388 = math.tanh %387 : vector<8x128xf32>
    %cst_135 = arith.constant 5.000000e-01 : f32
    %389 = vector.broadcast %cst_135 : f32 to vector<8x128xf32>
    %390 = arith.mulf %389, %388 : vector<8x128xf32>
    %cst_136 = arith.constant 5.000000e-01 : f32
    %391 = vector.broadcast %cst_136 : f32 to vector<8x128xf32>
    %392 = arith.addf %390, %391 : vector<8x128xf32>
    %393 = vector.extract_strided_slice %376 {offsets = [0, 256], sizes = [8, 128], strides = [1, 1]} : vector<8x512xf32> to vector<8x128xf32>
    %394 = math.tanh %393 : vector<8x128xf32>
    %395 = vector.extract_strided_slice %376 {offsets = [0, 384], sizes = [8, 128], strides = [1, 1]} : vector<8x512xf32> to vector<8x128xf32>
    %cst_137 = arith.constant 5.000000e-01 : f32
    %396 = vector.broadcast %cst_137 : f32 to vector<8x128xf32>
    %397 = arith.mulf %396, %395 : vector<8x128xf32>
    %398 = math.tanh %397 : vector<8x128xf32>
    %cst_138 = arith.constant 5.000000e-01 : f32
    %399 = vector.broadcast %cst_138 : f32 to vector<8x128xf32>
    %400 = arith.mulf %399, %398 : vector<8x128xf32>
    %cst_139 = arith.constant 5.000000e-01 : f32
    %401 = vector.broadcast %cst_139 : f32 to vector<8x128xf32>
    %402 = arith.addf %400, %401 : vector<8x128xf32>
    %403 = arith.mulf %392, %333 : vector<8x128xf32>
    %404 = arith.mulf %384, %394 : vector<8x128xf32>
    %405 = arith.addf %403, %404 : vector<8x128xf32>
    %406 = math.tanh %405 : vector<8x128xf32>
    %407 = arith.mulf %402, %406 : vector<8x128xf32>
    %408 = tpu.concatenate %407, %373 in 1 : vector<8x128xf32>, vector<8x128xf32> -> vector<8x256xf32>
    %409 = arith.truncf %408 : vector<8x256xf32> to vector<8x256xbf16>
    %c0_140 = arith.constant 0 : index
    %c0_141 = arith.constant 0 : index
    %410 = vector.load %arg4[%c0_140, %c0_141] : memref<256x1024xbf16, #tpu.memory_space<vmem>>, vector<256x1024xbf16>
    %cst_142 = arith.constant dense<0.000000e+00> : vector<8x1024xf32>
    %411 = tpu.matmul %409, %410, %cst_142 {dimension_numbers = #tpu.dot_dimension_numbers<[1], [0], [0], [1], [0, 0, 1, 1], [], []>} : vector<8x256xbf16>, vector<256x1024xbf16>, vector<8x1024xf32> -> vector<8x1024xf32>
    %412 = vector.extract_strided_slice %411 {offsets = [0, 0], sizes = [8, 512], strides = [1, 1]} : vector<8x1024xf32> to vector<8x512xf32>
    %413 = vector.extract_strided_slice %411 {offsets = [0, 512], sizes = [8, 512], strides = [1, 1]} : vector<8x1024xf32> to vector<8x512xf32>
    %414 = arith.addf %413, %11 : vector<8x512xf32>
    %415 = vector.extract_strided_slice %414 {offsets = [0, 0], sizes = [8, 128], strides = [1, 1]} : vector<8x512xf32> to vector<8x128xf32>
    %cst_143 = arith.constant 5.000000e-01 : f32
    %416 = vector.broadcast %cst_143 : f32 to vector<8x128xf32>
    %417 = arith.mulf %416, %415 : vector<8x128xf32>
    %418 = math.tanh %417 : vector<8x128xf32>
    %cst_144 = arith.constant 5.000000e-01 : f32
    %419 = vector.broadcast %cst_144 : f32 to vector<8x128xf32>
    %420 = arith.mulf %419, %418 : vector<8x128xf32>
    %cst_145 = arith.constant 5.000000e-01 : f32
    %421 = vector.broadcast %cst_145 : f32 to vector<8x128xf32>
    %422 = arith.addf %420, %421 : vector<8x128xf32>
    %423 = vector.extract_strided_slice %414 {offsets = [0, 128], sizes = [8, 128], strides = [1, 1]} : vector<8x512xf32> to vector<8x128xf32>
    %cst_146 = arith.constant 5.000000e-01 : f32
    %424 = vector.broadcast %cst_146 : f32 to vector<8x128xf32>
    %425 = arith.mulf %424, %423 : vector<8x128xf32>
    %426 = math.tanh %425 : vector<8x128xf32>
    %cst_147 = arith.constant 5.000000e-01 : f32
    %427 = vector.broadcast %cst_147 : f32 to vector<8x128xf32>
    %428 = arith.mulf %427, %426 : vector<8x128xf32>
    %cst_148 = arith.constant 5.000000e-01 : f32
    %429 = vector.broadcast %cst_148 : f32 to vector<8x128xf32>
    %430 = arith.addf %428, %429 : vector<8x128xf32>
    %431 = vector.extract_strided_slice %414 {offsets = [0, 256], sizes = [8, 128], strides = [1, 1]} : vector<8x512xf32> to vector<8x128xf32>
    %432 = math.tanh %431 : vector<8x128xf32>
    %433 = vector.extract_strided_slice %414 {offsets = [0, 384], sizes = [8, 128], strides = [1, 1]} : vector<8x512xf32> to vector<8x128xf32>
    %cst_149 = arith.constant 5.000000e-01 : f32
    %434 = vector.broadcast %cst_149 : f32 to vector<8x128xf32>
    %435 = arith.mulf %434, %433 : vector<8x128xf32>
    %436 = math.tanh %435 : vector<8x128xf32>
    %cst_150 = arith.constant 5.000000e-01 : f32
    %437 = vector.broadcast %cst_150 : f32 to vector<8x128xf32>
    %438 = arith.mulf %437, %436 : vector<8x128xf32>
    %cst_151 = arith.constant 5.000000e-01 : f32
    %439 = vector.broadcast %cst_151 : f32 to vector<8x128xf32>
    %440 = arith.addf %438, %439 : vector<8x128xf32>
    %441 = arith.mulf %430, %371 : vector<8x128xf32>
    %442 = arith.mulf %422, %432 : vector<8x128xf32>
    %443 = arith.addf %441, %442 : vector<8x128xf32>
    %444 = math.tanh %443 : vector<8x128xf32>
    %445 = arith.mulf %440, %444 : vector<8x128xf32>
    %c0_152 = arith.constant 0 : index
    %c6 = arith.constant 6 : index
    %c0_153 = arith.constant 0 : index
    %446 = vector.load %arg9[%c0_152, %c6, %c0_153] : memref<8x8x512xf32, #tpu.memory_space<vmem>>, vector<8x1x512xf32>
    %447 = vector.shape_cast %446 : vector<8x1x512xf32> to vector<8x512xf32>
    %448 = arith.addf %447, %412 : vector<8x512xf32>
    %449 = vector.extract_strided_slice %448 {offsets = [0, 0], sizes = [8, 128], strides = [1, 1]} : vector<8x512xf32> to vector<8x128xf32>
    %cst_154 = arith.constant 5.000000e-01 : f32
    %450 = vector.broadcast %cst_154 : f32 to vector<8x128xf32>
    %451 = arith.mulf %450, %449 : vector<8x128xf32>
    %452 = math.tanh %451 : vector<8x128xf32>
    %cst_155 = arith.constant 5.000000e-01 : f32
    %453 = vector.broadcast %cst_155 : f32 to vector<8x128xf32>
    %454 = arith.mulf %453, %452 : vector<8x128xf32>
    %cst_156 = arith.constant 5.000000e-01 : f32
    %455 = vector.broadcast %cst_156 : f32 to vector<8x128xf32>
    %456 = arith.addf %454, %455 : vector<8x128xf32>
    %457 = vector.extract_strided_slice %448 {offsets = [0, 128], sizes = [8, 128], strides = [1, 1]} : vector<8x512xf32> to vector<8x128xf32>
    %cst_157 = arith.constant 5.000000e-01 : f32
    %458 = vector.broadcast %cst_157 : f32 to vector<8x128xf32>
    %459 = arith.mulf %458, %457 : vector<8x128xf32>
    %460 = math.tanh %459 : vector<8x128xf32>
    %cst_158 = arith.constant 5.000000e-01 : f32
    %461 = vector.broadcast %cst_158 : f32 to vector<8x128xf32>
    %462 = arith.mulf %461, %460 : vector<8x128xf32>
    %cst_159 = arith.constant 5.000000e-01 : f32
    %463 = vector.broadcast %cst_159 : f32 to vector<8x128xf32>
    %464 = arith.addf %462, %463 : vector<8x128xf32>
    %465 = vector.extract_strided_slice %448 {offsets = [0, 256], sizes = [8, 128], strides = [1, 1]} : vector<8x512xf32> to vector<8x128xf32>
    %466 = math.tanh %465 : vector<8x128xf32>
    %467 = vector.extract_strided_slice %448 {offsets = [0, 384], sizes = [8, 128], strides = [1, 1]} : vector<8x512xf32> to vector<8x128xf32>
    %cst_160 = arith.constant 5.000000e-01 : f32
    %468 = vector.broadcast %cst_160 : f32 to vector<8x128xf32>
    %469 = arith.mulf %468, %467 : vector<8x128xf32>
    %470 = math.tanh %469 : vector<8x128xf32>
    %cst_161 = arith.constant 5.000000e-01 : f32
    %471 = vector.broadcast %cst_161 : f32 to vector<8x128xf32>
    %472 = arith.mulf %471, %470 : vector<8x128xf32>
    %cst_162 = arith.constant 5.000000e-01 : f32
    %473 = vector.broadcast %cst_162 : f32 to vector<8x128xf32>
    %474 = arith.addf %472, %473 : vector<8x128xf32>
    %475 = arith.mulf %464, %405 : vector<8x128xf32>
    %476 = arith.mulf %456, %466 : vector<8x128xf32>
    %477 = arith.addf %475, %476 : vector<8x128xf32>
    %478 = math.tanh %477 : vector<8x128xf32>
    %479 = arith.mulf %474, %478 : vector<8x128xf32>
    %480 = tpu.concatenate %479, %445 in 1 : vector<8x128xf32>, vector<8x128xf32> -> vector<8x256xf32>
    %481 = arith.truncf %480 : vector<8x256xf32> to vector<8x256xbf16>
    %c0_163 = arith.constant 0 : index
    %c0_164 = arith.constant 0 : index
    %482 = vector.load %arg4[%c0_163, %c0_164] : memref<256x1024xbf16, #tpu.memory_space<vmem>>, vector<256x1024xbf16>
    %cst_165 = arith.constant dense<0.000000e+00> : vector<8x1024xf32>
    %483 = tpu.matmul %481, %482, %cst_165 {dimension_numbers = #tpu.dot_dimension_numbers<[1], [0], [0], [1], [0, 0, 1, 1], [], []>} : vector<8x256xbf16>, vector<256x1024xbf16>, vector<8x1024xf32> -> vector<8x1024xf32>
    %484 = vector.extract_strided_slice %483 {offsets = [0, 0], sizes = [8, 512], strides = [1, 1]} : vector<8x1024xf32> to vector<8x512xf32>
    %485 = vector.extract_strided_slice %483 {offsets = [0, 512], sizes = [8, 512], strides = [1, 1]} : vector<8x1024xf32> to vector<8x512xf32>
    %486 = arith.addf %485, %11 : vector<8x512xf32>
    %487 = vector.extract_strided_slice %486 {offsets = [0, 0], sizes = [8, 128], strides = [1, 1]} : vector<8x512xf32> to vector<8x128xf32>
    %cst_166 = arith.constant 5.000000e-01 : f32
    %488 = vector.broadcast %cst_166 : f32 to vector<8x128xf32>
    %489 = arith.mulf %488, %487 : vector<8x128xf32>
    %490 = math.tanh %489 : vector<8x128xf32>
    %cst_167 = arith.constant 5.000000e-01 : f32
    %491 = vector.broadcast %cst_167 : f32 to vector<8x128xf32>
    %492 = arith.mulf %491, %490 : vector<8x128xf32>
    %cst_168 = arith.constant 5.000000e-01 : f32
    %493 = vector.broadcast %cst_168 : f32 to vector<8x128xf32>
    %494 = arith.addf %492, %493 : vector<8x128xf32>
    %495 = vector.extract_strided_slice %486 {offsets = [0, 128], sizes = [8, 128], strides = [1, 1]} : vector<8x512xf32> to vector<8x128xf32>
    %cst_169 = arith.constant 5.000000e-01 : f32
    %496 = vector.broadcast %cst_169 : f32 to vector<8x128xf32>
    %497 = arith.mulf %496, %495 : vector<8x128xf32>
    %498 = math.tanh %497 : vector<8x128xf32>
    %cst_170 = arith.constant 5.000000e-01 : f32
    %499 = vector.broadcast %cst_170 : f32 to vector<8x128xf32>
    %500 = arith.mulf %499, %498 : vector<8x128xf32>
    %cst_171 = arith.constant 5.000000e-01 : f32
    %501 = vector.broadcast %cst_171 : f32 to vector<8x128xf32>
    %502 = arith.addf %500, %501 : vector<8x128xf32>
    %503 = vector.extract_strided_slice %486 {offsets = [0, 256], sizes = [8, 128], strides = [1, 1]} : vector<8x512xf32> to vector<8x128xf32>
    %504 = math.tanh %503 : vector<8x128xf32>
    %505 = vector.extract_strided_slice %486 {offsets = [0, 384], sizes = [8, 128], strides = [1, 1]} : vector<8x512xf32> to vector<8x128xf32>
    %cst_172 = arith.constant 5.000000e-01 : f32
    %506 = vector.broadcast %cst_172 : f32 to vector<8x128xf32>
    %507 = arith.mulf %506, %505 : vector<8x128xf32>
    %508 = math.tanh %507 : vector<8x128xf32>
    %cst_173 = arith.constant 5.000000e-01 : f32
    %509 = vector.broadcast %cst_173 : f32 to vector<8x128xf32>
    %510 = arith.mulf %509, %508 : vector<8x128xf32>
    %cst_174 = arith.constant 5.000000e-01 : f32
    %511 = vector.broadcast %cst_174 : f32 to vector<8x128xf32>
    %512 = arith.addf %510, %511 : vector<8x128xf32>
    %513 = arith.mulf %502, %443 : vector<8x128xf32>
    %514 = arith.mulf %494, %504 : vector<8x128xf32>
    %515 = arith.addf %513, %514 : vector<8x128xf32>
    %516 = math.tanh %515 : vector<8x128xf32>
    %517 = arith.mulf %512, %516 : vector<8x128xf32>
    %c0_175 = arith.constant 0 : index
    %c7 = arith.constant 7 : index
    %c0_176 = arith.constant 0 : index
    %518 = vector.load %arg9[%c0_175, %c7, %c0_176] : memref<8x8x512xf32, #tpu.memory_space<vmem>>, vector<8x1x512xf32>
    %519 = vector.shape_cast %518 : vector<8x1x512xf32> to vector<8x512xf32>
    %520 = arith.addf %519, %484 : vector<8x512xf32>
    %521 = vector.extract_strided_slice %520 {offsets = [0, 0], sizes = [8, 128], strides = [1, 1]} : vector<8x512xf32> to vector<8x128xf32>
    %cst_177 = arith.constant 5.000000e-01 : f32
    %522 = vector.broadcast %cst_177 : f32 to vector<8x128xf32>
    %523 = arith.mulf %522, %521 : vector<8x128xf32>
    %524 = math.tanh %523 : vector<8x128xf32>
    %cst_178 = arith.constant 5.000000e-01 : f32
    %525 = vector.broadcast %cst_178 : f32 to vector<8x128xf32>
    %526 = arith.mulf %525, %524 : vector<8x128xf32>
    %cst_179 = arith.constant 5.000000e-01 : f32
    %527 = vector.broadcast %cst_179 : f32 to vector<8x128xf32>
    %528 = arith.addf %526, %527 : vector<8x128xf32>
    %529 = vector.extract_strided_slice %520 {offsets = [0, 128], sizes = [8, 128], strides = [1, 1]} : vector<8x512xf32> to vector<8x128xf32>
    %cst_180 = arith.constant 5.000000e-01 : f32
    %530 = vector.broadcast %cst_180 : f32 to vector<8x128xf32>
    %531 = arith.mulf %530, %529 : vector<8x128xf32>
    %532 = math.tanh %531 : vector<8x128xf32>
    %cst_181 = arith.constant 5.000000e-01 : f32
    %533 = vector.broadcast %cst_181 : f32 to vector<8x128xf32>
    %534 = arith.mulf %533, %532 : vector<8x128xf32>
    %cst_182 = arith.constant 5.000000e-01 : f32
    %535 = vector.broadcast %cst_182 : f32 to vector<8x128xf32>
    %536 = arith.addf %534, %535 : vector<8x128xf32>
    %537 = vector.extract_strided_slice %520 {offsets = [0, 256], sizes = [8, 128], strides = [1, 1]} : vector<8x512xf32> to vector<8x128xf32>
    %538 = math.tanh %537 : vector<8x128xf32>
    %539 = vector.extract_strided_slice %520 {offsets = [0, 384], sizes = [8, 128], strides = [1, 1]} : vector<8x512xf32> to vector<8x128xf32>
    %cst_183 = arith.constant 5.000000e-01 : f32
    %540 = vector.broadcast %cst_183 : f32 to vector<8x128xf32>
    %541 = arith.mulf %540, %539 : vector<8x128xf32>
    %542 = math.tanh %541 : vector<8x128xf32>
    %cst_184 = arith.constant 5.000000e-01 : f32
    %543 = vector.broadcast %cst_184 : f32 to vector<8x128xf32>
    %544 = arith.mulf %543, %542 : vector<8x128xf32>
    %cst_185 = arith.constant 5.000000e-01 : f32
    %545 = vector.broadcast %cst_185 : f32 to vector<8x128xf32>
    %546 = arith.addf %544, %545 : vector<8x128xf32>
    %547 = arith.mulf %536, %477 : vector<8x128xf32>
    %548 = arith.mulf %528, %538 : vector<8x128xf32>
    %549 = arith.addf %547, %548 : vector<8x128xf32>
    %550 = math.tanh %549 : vector<8x128xf32>
    %551 = arith.mulf %546, %550 : vector<8x128xf32>
    %552 = tpu.concatenate %551, %517 in 1 : vector<8x128xf32>, vector<8x128xf32> -> vector<8x256xf32>
    %553 = arith.truncf %552 : vector<8x256xf32> to vector<8x256xbf16>
    %c0_186 = arith.constant 0 : index
    %c0_187 = arith.constant 0 : index
    %554 = vector.load %arg4[%c0_186, %c0_187] : memref<256x1024xbf16, #tpu.memory_space<vmem>>, vector<256x1024xbf16>
    %cst_188 = arith.constant dense<0.000000e+00> : vector<8x1024xf32>
    %555 = tpu.matmul %553, %554, %cst_188 {dimension_numbers = #tpu.dot_dimension_numbers<[1], [0], [0], [1], [0, 0, 1, 1], [], []>} : vector<8x256xbf16>, vector<256x1024xbf16>, vector<8x1024xf32> -> vector<8x1024xf32>
    %556 = vector.extract_strided_slice %555 {offsets = [0, 512], sizes = [8, 512], strides = [1, 1]} : vector<8x1024xf32> to vector<8x512xf32>
    %557 = arith.addf %556, %11 : vector<8x512xf32>
    %558 = vector.extract_strided_slice %557 {offsets = [0, 0], sizes = [8, 128], strides = [1, 1]} : vector<8x512xf32> to vector<8x128xf32>
    %cst_189 = arith.constant 5.000000e-01 : f32
    %559 = vector.broadcast %cst_189 : f32 to vector<8x128xf32>
    %560 = arith.mulf %559, %558 : vector<8x128xf32>
    %561 = math.tanh %560 : vector<8x128xf32>
    %cst_190 = arith.constant 5.000000e-01 : f32
    %562 = vector.broadcast %cst_190 : f32 to vector<8x128xf32>
    %563 = arith.mulf %562, %561 : vector<8x128xf32>
    %cst_191 = arith.constant 5.000000e-01 : f32
    %564 = vector.broadcast %cst_191 : f32 to vector<8x128xf32>
    %565 = arith.addf %563, %564 : vector<8x128xf32>
    %566 = vector.extract_strided_slice %557 {offsets = [0, 128], sizes = [8, 128], strides = [1, 1]} : vector<8x512xf32> to vector<8x128xf32>
    %cst_192 = arith.constant 5.000000e-01 : f32
    %567 = vector.broadcast %cst_192 : f32 to vector<8x128xf32>
    %568 = arith.mulf %567, %566 : vector<8x128xf32>
    %569 = math.tanh %568 : vector<8x128xf32>
    %cst_193 = arith.constant 5.000000e-01 : f32
    %570 = vector.broadcast %cst_193 : f32 to vector<8x128xf32>
    %571 = arith.mulf %570, %569 : vector<8x128xf32>
    %cst_194 = arith.constant 5.000000e-01 : f32
    %572 = vector.broadcast %cst_194 : f32 to vector<8x128xf32>
    %573 = arith.addf %571, %572 : vector<8x128xf32>
    %574 = vector.extract_strided_slice %557 {offsets = [0, 256], sizes = [8, 128], strides = [1, 1]} : vector<8x512xf32> to vector<8x128xf32>
    %575 = math.tanh %574 : vector<8x128xf32>
    %576 = vector.extract_strided_slice %557 {offsets = [0, 384], sizes = [8, 128], strides = [1, 1]} : vector<8x512xf32> to vector<8x128xf32>
    %cst_195 = arith.constant 5.000000e-01 : f32
    %577 = vector.broadcast %cst_195 : f32 to vector<8x128xf32>
    %578 = arith.mulf %577, %576 : vector<8x128xf32>
    %579 = math.tanh %578 : vector<8x128xf32>
    %cst_196 = arith.constant 5.000000e-01 : f32
    %580 = vector.broadcast %cst_196 : f32 to vector<8x128xf32>
    %581 = arith.mulf %580, %579 : vector<8x128xf32>
    %cst_197 = arith.constant 5.000000e-01 : f32
    %582 = vector.broadcast %cst_197 : f32 to vector<8x128xf32>
    %583 = arith.addf %581, %582 : vector<8x128xf32>
    %584 = arith.mulf %573, %515 : vector<8x128xf32>
    %585 = arith.mulf %565, %575 : vector<8x128xf32>
    %586 = arith.addf %584, %585 : vector<8x128xf32>
    %587 = math.tanh %586 : vector<8x128xf32>
    %588 = arith.mulf %583, %587 : vector<8x128xf32>
    %589 = arith.truncf %588 : vector<8x128xf32> to vector<8x128xbf16>
    %c0_198 = arith.constant 0 : index
    %c0_199 = arith.constant 0 : index
    %590 = vector.load %arg6[%c0_198, %c0_199] : memref<128x128xbf16, #tpu.memory_space<vmem>>, vector<128x128xbf16>
    %cst_200 = arith.constant dense<0.000000e+00> : vector<8x128xf32>
    %591 = tpu.matmul %589, %590, %cst_200 {dimension_numbers = #tpu.dot_dimension_numbers<[1], [0], [0], [1], [0, 0, 1, 1], [], []>} : vector<8x128xbf16>, vector<128x128xbf16>, vector<8x128xf32> -> vector<8x128xf32>
    %c0_201 = arith.constant 0 : index
    %c0_202 = arith.constant 0 : index
    %592 = vector.load %arg7[%c0_201, %c0_202] : memref<1x128xf32, #tpu.memory_space<vmem>>, vector<1x128xf32>
    %593 = vector.broadcast %592 : vector<1x128xf32> to vector<8x128xf32>
    %594 = arith.addf %591, %593 : vector<8x128xf32>
    %c0_203 = arith.constant 0 : index
    %c0_204 = arith.constant 0 : index
    %595 = vector.load %arg8[%c0_203, %c0_204] : memref<8x128xf32, #tpu.memory_space<vmem>>, vector<8x128xf32>
    tpu.vector_store %arg8[%c0_203, %c0_204], %594 {strides = array<i32>} : memref<8x128xf32, #tpu.memory_space<vmem>>, vector<8x128xf32>,
    return
  }
  func.func @transform_0(%arg0: i32) -> (i32, i32, i32) {
    %c0_i32 = arith.constant 0 : i32
    %c0_i32_0 = arith.constant 0 : i32
    %c0_i32_1 = arith.constant 0 : i32
    return %arg0, %c0_i32, %c0_i32_0 : i32, i32, i32
  }
  func.func @transform_1(%arg0: i32) -> (i32, i32) {
    %c0_i32 = arith.constant 0 : i32
    %c0_i32_0 = arith.constant 0 : i32
    %c0_i32_1 = arith.constant 0 : i32
    return %c0_i32, %c0_i32_0 : i32, i32
  }
  func.func @transform_2(%arg0: i32) -> (i32, i32) {
    %c0_i32 = arith.constant 0 : i32
    %c0_i32_0 = arith.constant 0 : i32
    %c0_i32_1 = arith.constant 0 : i32
    return %c0_i32, %c0_i32_0 : i32, i32
  }
  func.func @transform_3(%arg0: i32) -> (i32, i32) {
    %c0_i32 = arith.constant 0 : i32
    %c0_i32_0 = arith.constant 0 : i32
    %c0_i32_1 = arith.constant 0 : i32
    return %c0_i32, %c0_i32_0 : i32, i32
  }
  func.func @transform_4(%arg0: i32) -> (i32, i32) {
    %c0_i32 = arith.constant 0 : i32
    %c0_i32_0 = arith.constant 0 : i32
    %c0_i32_1 = arith.constant 0 : i32
    return %c0_i32, %c0_i32_0 : i32, i32
  }
  func.func @transform_5(%arg0: i32) -> (i32, i32) {
    %c0_i32 = arith.constant 0 : i32
    %c0_i32_0 = arith.constant 0 : i32
    %c0_i32_1 = arith.constant 0 : i32
    return %c0_i32, %c0_i32_0 : i32, i32
  }
  func.func @transform_6(%arg0: i32) -> (i32, i32) {
    %c0_i32 = arith.constant 0 : i32
    %c0_i32_0 = arith.constant 0 : i32
    %c0_i32_1 = arith.constant 0 : i32
    return %c0_i32, %c0_i32_0 : i32, i32
  }
  func.func @transform_7(%arg0: i32) -> (i32, i32) {
    %c0_i32 = arith.constant 0 : i32
    %c0_i32_0 = arith.constant 0 : i32
    return %arg0, %c0_i32 : i32, i32
  }
}

</mosaic_0001>

<llo_original>
// kernel: tpu_custom_call.1
$region0: #{tpu_custom_call.1}
  #allocation0 [shape = 'u32[]', space=smem, size = 0x4, offset = 0x4, fixed_abs, tag = 'smem constant byte address 0x4 - core index']
  #allocation1 [shape = 'u32[144,128]{1,0:T(1,128)}', space=vmem, size = 0x12000, scoped, tag = 'internal scratch']
  #allocation2 [shape = 'f32[8,8,512]{2,1,0:T(8,128)}', space=vmem, size = 0x20000, scoped, tag = 'scratch operand']
  %s0 = inlined_call_operand.hbm [shape: bf16[16,8,256], index: 0, kind: input, shape index: {}]
  %s1 = inlined_call_operand.hbm [shape: bf16[256,512], index: 1, kind: input, shape index: {}]
  %s2 = inlined_call_operand.vmem [shape: f32[1,512], index: 2, kind: input, shape index: {}]
  %s3 = inlined_call_operand.hbm [shape: bf16[256,1024], index: 3, kind: input, shape index: {}]
  %s4 = inlined_call_operand.vmem [shape: f32[1,512], index: 4, kind: input, shape index: {}]
  %s5 = inlined_call_operand.hbm [shape: bf16[128,128], index: 5, kind: input, shape index: {}]
  %s6 = inlined_call_operand.vmem [shape: f32[1,128], index: 6, kind: input, shape index: {}]
  %s7 = inlined_call_operand.hbm [shape: f32[16,128], index: 7, kind: output, shape index: {}]
  %s8 = sld [smem:[#allocation0]]
  $region77: #{tpu_custom_call.1} parent=0
    _
  %s10 = ssub.s32 1, %s8
  %s11 = scalar_select 0, %s10, %s8
  $region1: #{tpu_custom_call.1} parent=0
    #allocation3 [shape = 'u8[65536]{0}', space=vmem, size = 0x10000, scoped, tag = 'input window, operand 0']
    #allocation4 [shape = 's32[2]{0}', space=sflag, size = 0x8, scoped, tag = 'scoped memory for tpu_custom_call.1']
    #allocation5 [shape = 's32[2]{0}', space=sflag, size = 0x8, scoped, tag = 'scoped memory for tpu_custom_call.1']
    #allocation6 [shape = 'u8[262144]{0}', space=vmem, size = 0x40000, scoped, tag = 'input window, operand 1, single buffered']
    #allocation7 [shape = 's32[1]{0}', space=sflag, size = 0x4, scoped, tag = 'scoped memory for tpu_custom_call.1']
    #allocation8 [shape = 'u8[524288]{0}', space=vmem, size = 0x80000, scoped, tag = 'input window, operand 3, single buffered']
    #allocation9 [shape = 'u8[32768]{0}', space=vmem, size = 0x8000, scoped, tag = 'input window, operand 5, single buffered']
    #allocation10 [shape = 's32[1]{0}', space=sflag, size = 0x4, scoped, tag = 'scoped memory for tpu_custom_call.1']
    #allocation11 [shape = 'u8[8192]{0}', space=vmem, size = 0x2000, scoped, tag = 'output window, operand 0']
    %12 = vsyncpa [#allocation4], 0
    %s13 = scalar_lea.sflag [#allocation4], 1
    %14 = vsyncpa %s13, 0
    %15 = vsyncpa [#allocation7], 0
    %16 = vsyncpa [#allocation10], 0
    %17 = vsyncpa [#allocation5], 0
    %s18 = scalar_lea.sflag [#allocation5], 1
    %19 = vsyncpa %s18, 0
    loop: start=0, step=1, limit=4
    $region2: #{tpu_custom_call.1} parent=1 // loop_pre_header
      _
    $region3: #{tpu_custom_call.1} parent=1 // loop_header
      %s21 = sphi 0, %s25
      %p22 = scmp.ge.s32.totalorder %s21, 4
      %s31 = sphi 0, %s33
      %s34 = sphi 0, %s31
      %s35 = sphi 0, %s34
      %s51 = sphi 0, %s35
      %s55 = sphi 0, %s55
      %s57 = sphi 0, %s55
      %s58 = sphi 0, %s57
      %s72 = sphi 0, %s58
      %s76 = sphi 0, %s76
      %s78 = sphi 0, %s76
      %s79 = sphi 0, %s78
      %s93 = sphi 0, %s79
      %s97 = sphi 0, %s97
      %s99 = sphi 0, %s97
      %s100 = sphi 0, %s99
      %s114 = sphi 0, %s100
      %s118 = sphi 0, %s118
      %s120 = sphi 0, %s118
      %s121 = sphi 0, %s120
      %s135 = sphi 0, %s121
      %s139 = sphi 0, %s139
      %s141 = sphi 0, %s139
      %s142 = sphi 0, %s141
      %s156 = sphi 0, %s142
      %s160 = sphi 0, %s160
      %s162 = sphi 0, %s160
      %s163 = sphi 0, %s162
      %s177 = sphi 0, %s163
      %s183 = sphi 0, %s185
      %s186 = sphi 0, %s183
      %s187 = sphi 0, %s186
      %s203 = sphi 0, %s187
    $region4: #{tpu_custom_call.1} parent=1 // loop_header_branch
      %24 = sbr.rel (%p22) target = $region8
    $region5: #{tpu_custom_call.1} parent=1 // loop_body
      %s26 = ssub.s32 %s21, 1
      %s27 = ssub.s32 %s21, 2
      %s28 = sadd.s32 %s21, 1
      %s29 = ssub.s32 %s21, %s28
      %p30 = scmp.eq.s32.totalorder %s29, 0
      %s32 = sadd.s32 %s31, 1
      %s33 = scalar_select %p30, %s31, %s32
      %p36 = pneg %p30
      %p37 = scmp.eq.s32.totalorder %s21, 1
      %p38 = por %p36, %p37
      %p39 = scmp.ne.s32.totalorder %s31, %s34
      %p40 = scmp.eq.s32.totalorder %s21, 0
      %p41 = por %p39, %p40
      %p42 = scmp.ne.s32.totalorder %s31, %s34
      %p43 = scmp.eq.s32.totalorder %s26, 1
      %p44 = por %p42, %p43
      %p45 = scmp.ne.s32.totalorder %s34, %s35
      %p46 = scmp.eq.s32.totalorder %s26, 0
      %p47 = por %p45, %p46
      %p48 = scmp.ne.s32.totalorder %s34, %s35
      %p49 = scmp.eq.s32.totalorder %s27, 1
      %p50 = por %p48, %p49
      %p52 = scmp.ne.s32.totalorder %s35, %s51
      %p53 = scmp.eq.s32.totalorder %s27, 0
      %p54 = por %p52, %p53
      %s56 = sadd.s32 %s55, 1
      %p59 = scmp.eq.s32.totalorder %s21, 1
      %p60 = scmp.ne.s32.totalorder %s55, %s57
      %p61 = scmp.eq.s32.totalorder %s21, 0
      %p62 = por %p60, %p61
      %p63 = scmp.ne.s32.totalorder %s55, %s57
      %p64 = scmp.eq.s32.totalorder %s26, 1
      %p65 = por %p63, %p64
      %p66 = scmp.ne.s32.totalorder %s57, %s58
      %p67 = scmp.eq.s32.totalorder %s26, 0
      %p68 = por %p66, %p67
      %p69 = scmp.ne.s32.totalorder %s57, %s58
      %p70 = scmp.eq.s32.totalorder %s27, 1
      %p71 = por %p69, %p70
      %p73 = scmp.ne.s32.totalorder %s58, %s72
      %p74 = scmp.eq.s32.totalorder %s27, 0
      %p75 = por %p73, %p74
      %s77 = sadd.s32 %s76, 1
      %p80 = scmp.eq.s32.totalorder %s21, 1
      %p81 = scmp.ne.s32.totalorder %s76, %s78
      %p82 = scmp.eq.s32.totalorder %s21, 0
      %p83 = por %p81, %p82
      %p84 = scmp.ne.s32.totalorder %s76, %s78
      %p85 = scmp.eq.s32.totalorder %s26, 1
      %p86 = por %p84, %p85
      %p87 = scmp.ne.s32.totalorder %s78, %s79
      %p88 = scmp.eq.s32.totalorder %s26, 0
      %p89 = por %p87, %p88
      %p90 = scmp.ne.s32.totalorder %s78, %s79
      %p91 = scmp.eq.s32.totalorder %s27, 1
      %p92 = por %p90, %p91
      %p94 = scmp.ne.s32.totalorder %s79, %s93
      %p95 = scmp.eq.s32.totalorder %s27, 0
      %p96 = por %p94, %p95
      %s98 = sadd.s32 %s97, 1
      %p101 = scmp.eq.s32.totalorder %s21, 1
      %p102 = scmp.ne.s32.totalorder %s97, %s99
      %p103 = scmp.eq.s32.totalorder %s21, 0
      %p104 = por %p102, %p103
      %p105 = scmp.ne.s32.totalorder %s97, %s99
      %p106 = scmp.eq.s32.totalorder %s26, 1
      %p107 = por %p105, %p106
      %p108 = scmp.ne.s32.totalorder %s99, %s100
      %p109 = scmp.eq.s32.totalorder %s26, 0
      %p110 = por %p108, %p109
      %p111 = scmp.ne.s32.totalorder %s99, %s100
      %p112 = scmp.eq.s32.totalorder %s27, 1
      %p113 = por %p111, %p112
      %p115 = scmp.ne.s32.totalorder %s100, %s114
      %p116 = scmp.eq.s32.totalorder %s27, 0
      %p117 = por %p115, %p116
      %s119 = sadd.s32 %s118, 1
      %p122 = scmp.eq.s32.totalorder %s21, 1
      %p123 = scmp.ne.s32.totalorder %s118, %s120
      %p124 = scmp.eq.s32.totalorder %s21, 0
      %p125 = por %p123, %p124
      %p126 = scmp.ne.s32.totalorder %s118, %s120
      %p127 = scmp.eq.s32.totalorder %s26, 1
      %p128 = por %p126, %p127
      %p129 = scmp.ne.s32.totalorder %s120, %s121
      %p130 = scmp.eq.s32.totalorder %s26, 0
      %p131 = por %p129, %p130
      %p132 = scmp.ne.s32.totalorder %s120, %s121
      %p133 = scmp.eq.s32.totalorder %s27, 1
      %p134 = por %p132, %p133
      %p136 = scmp.ne.s32.totalorder %s121, %s135
      %p137 = scmp.eq.s32.totalorder %s27, 0
      %p138 = por %p136, %p137
      %s140 = sadd.s32 %s139, 1
      %p143 = scmp.eq.s32.totalorder %s21, 1
      %p144 = scmp.ne.s32.totalorder %s139, %s141
      %p145 = scmp.eq.s32.totalorder %s21, 0
      %p146 = por %p144, %p145
      %p147 = scmp.ne.s32.totalorder %s139, %s141
      %p148 = scmp.eq.s32.totalorder %s26, 1
      %p149 = por %p147, %p148
      %p150 = scmp.ne.s32.totalorder %s141, %s142
      %p151 = scmp.eq.s32.totalorder %s26, 0
      %p152 = por %p150, %p151
      %p153 = scmp.ne.s32.totalorder %s141, %s142
      %p154 = scmp.eq.s32.totalorder %s27, 1
      %p155 = por %p153, %p154
      %p157 = scmp.ne.s32.totalorder %s142, %s156
      %p158 = scmp.eq.s32.totalorder %s27, 0
      %p159 = por %p157, %p158
      %s161 = sadd.s32 %s160, 1
      %p164 = scmp.eq.s32.totalorder %s21, 1
      %p165 = scmp.ne.s32.totalorder %s160, %s162
      %p166 = scmp.eq.s32.totalorder %s21, 0
      %p167 = por %p165, %p166
      %p168 = scmp.ne.s32.totalorder %s160, %s162
      %p169 = scmp.eq.s32.totalorder %s26, 1
      %p170 = por %p168, %p169
      %p171 = scmp.ne.s32.totalorder %s162, %s163
      %p172 = scmp.eq.s32.totalorder %s26, 0
      %p173 = por %p171, %p172
      %p174 = scmp.ne.s32.totalorder %s162, %s163
      %p175 = scmp.eq.s32.totalorder %s27, 1
      %p176 = por %p174, %p175
      %p178 = scmp.ne.s32.totalorder %s163, %s177
      %p179 = scmp.eq.s32.totalorder %s27, 0
      %p180 = por %p178, %p179
      %s181 = ssub.s32 %s21, %s28
      %p182 = scmp.eq.s32.totalorder %s181, 0
      %s184 = sadd.s32 %s183, 1
      %s185 = scalar_select %p182, %s183, %s184
      %p188 = pneg %p182
      %p189 = scmp.eq.s32.totalorder %s21, 1
      %p190 = por %p188, %p189
      %p191 = scmp.ne.s32.totalorder %s183, %s186
      %p192 = scmp.eq.s32.totalorder %s21, 0
      %p193 = por %p191, %p192
      %p194 = scmp.ne.s32.totalorder %s183, %s186
      %p195 = scmp.eq.s32.totalorder %s26, 1
      %p196 = por %p194, %p195
      %p197 = scmp.ne.s32.totalorder %s186, %s187
      %p198 = scmp.eq.s32.totalorder %s26, 0
      %p199 = por %p197, %p198
      %p200 = scmp.ne.s32.totalorder %s186, %s187
      %p201 = scmp.eq.s32.totalorder %s27, 1
      %p202 = por %p200, %p201
      %p204 = scmp.ne.s32.totalorder %s187, %s203
      %p205 = scmp.eq.s32.totalorder %s27, 0
      %p206 = por %p204, %p205
      %p207 = scmp.le.s32.totalorder 1, %s21
      %p208 = scmp.lt.s32.totalorder %s21, 3
      %p209 = pnand %p207, %p208
      %p210 = pneg %p209
      // Predicated region
      $region9: #{tpu_custom_call.1} parent=5 // pred_check
        _
      $region10: #{tpu_custom_call.1} parent=5 // pred_check_branch
        %212 = sbr.rel (%p209) target = $region12
      $region11: #{tpu_custom_call.1} parent=5 // pred_region
        %s213 = ssub.s32 %s21, 1
        // Predicated region
        $region13: #{tpu_custom_call.1} parent=11 // pred_check
          %p214 = pneg %p68
        $region14: #{tpu_custom_call.1} parent=11 // pred_check_branch
          %216 = sbr.rel (%p214) target = $region16
        $region15: #{tpu_custom_call.1} parent=11 // pred_region
          %s218 = ssub.s32 8192, 8192
          %219 = vsyncadd [#allocation7], %s218
          %s220 = sshll.u32 [#allocation6], 4
          %s221 = int_to_ptr.vmem [resolvable:$true] %s220
          %226 = dma.hbm_to_vmem [thread:$0]  %s1, 8192, %s221, [#allocation7], 256, 256, 16
        $region16: #{tpu_custom_call.1} parent=11 // pred_fallthru
          _
        // Predicated region
        $region17: #{tpu_custom_call.1} parent=11 // pred_check
          %p227 = pneg %p89
        $region18: #{tpu_custom_call.1} parent=11 // pred_check_branch
          %229 = sbr.rel (%p227) target = $region20
        $region19: #{tpu_custom_call.1} parent=11 // pred_region
          _
        $region20: #{tpu_custom_call.1} parent=11 // pred_fallthru
          _
        // Predicated region
        $region21: #{tpu_custom_call.1} parent=11 // pred_check
          %p230 = pneg %p110
        $region22: #{tpu_custom_call.1} parent=11 // pred_check_branch
          %232 = sbr.rel (%p230) target = $region24
        $region23: #{tpu_custom_call.1} parent=11 // pred_region
          %s234 = ssub.s32 16384, 16384
          %235 = vsyncadd [#allocation7], %s234
          %s236 = sshll.u32 [#allocation8], 4
          %s237 = int_to_ptr.vmem [resolvable:$true] %s236
          %242 = dma.hbm_to_vmem [thread:$0]  %s3, 16384, %s237, [#allocation7], 512, 512, 32
        $region24: #{tpu_custom_call.1} parent=11 // pred_fallthru
          _
        // Predicated region
        $region25: #{tpu_custom_call.1} parent=11 // pred_check
          %p243 = pneg %p131
        $region26: #{tpu_custom_call.1} parent=11 // pred_check_branch
          %245 = sbr.rel (%p243) target = $region28
        $region27: #{tpu_custom_call.1} parent=11 // pred_region
          _
        $region28: #{tpu_custom_call.1} parent=11 // pred_fallthru
          _
        // Predicated region
        $region29: #{tpu_custom_call.1} parent=11 // pred_check
          %p246 = pneg %p152
        $region30: #{tpu_custom_call.1} parent=11 // pred_check_branch
          %248 = sbr.rel (%p246) target = $region32
        $region31: #{tpu_custom_call.1} parent=11 // pred_region
          %s250 = ssub.s32 1024, 1024
          %251 = vsyncadd [#allocation10], %s250
          %s252 = sshll.u32 [#allocation9], 4
          %s253 = int_to_ptr.vmem [resolvable:$true] %s252
          %258 = dma.hbm_to_vmem [thread:$0]  %s5, 1024, %s253, [#allocation10], 64, 64, 4
        $region32: #{tpu_custom_call.1} parent=11 // pred_fallthru
          _
        // Predicated region
        $region33: #{tpu_custom_call.1} parent=11 // pred_check
          %p259 = pneg %p173
        $region34: #{tpu_custom_call.1} parent=11 // pred_check_branch
          %261 = sbr.rel (%p259) target = $region36
        $region35: #{tpu_custom_call.1} parent=11 // pred_region
          _
        $region36: #{tpu_custom_call.1} parent=11 // pred_fallthru
          _
      $region12: #{tpu_custom_call.1} parent=5 // pred_fallthru
        _
      %p262 = scmp.lt.s32.totalorder %s21, 2
      // Predicated region
      $region37: #{tpu_custom_call.1} parent=5 // pred_check
        %p263 = pneg %p262
      $region38: #{tpu_custom_call.1} parent=5 // pred_check_branch
        %265 = sbr.rel (%p263) target = $region40
      $region39: #{tpu_custom_call.1} parent=5 // pred_region
        // Predicated region
        $region41: #{tpu_custom_call.1} parent=39 // pred_check
          %p266 = pneg %p41
        $region42: #{tpu_custom_call.1} parent=39 // pred_check_branch
          %268 = sbr.rel (%p266) target = $region44
        $region43: #{tpu_custom_call.1} parent=39 // pred_region
          %s269 = sand.u32 %s31, 1
          %s270 = scalar_lea.sflag [#allocation4], %s269
          %s271 = sand.u32 %s31, 1
          %s272 = smul.addr %s271, 64
          %s273 = scalar_lea.vmem [#allocation3], %s272
          %s274 = smul.u32 8, %s21
          %s276 = ssub.s32 1024, 1024
          %277 = vsyncadd %s270, %s276
          %s278 = smul.addr %s274, 2
          %s279 = smul.addr %s278, 64
          %s280 = scalar_lea.hbm %s0, %s279
          %s281 = sshll.u32 %s273, 4
          %s282 = int_to_ptr.vmem [resolvable:$true] %s281
          %287 = dma.hbm_to_vmem [thread:$0]  %s280, 1024, %s282, %s270, 128, 128, 8
        $region44: #{tpu_custom_call.1} parent=39 // pred_fallthru
          _
      $region40: #{tpu_custom_call.1} parent=5 // pred_fallthru
        _
      %p288 = scmp.le.s32.totalorder 1, %s21
      %p289 = scmp.lt.s32.totalorder %s21, 3
      %p290 = pnand %p288, %p289
      %p291 = pneg %p290
      // Predicated region
      $region45: #{tpu_custom_call.1} parent=5 // pred_check
        _
      $region46: #{tpu_custom_call.1} parent=5 // pred_check_branch
        %293 = sbr.rel (%p290) target = $region48
      $region47: #{tpu_custom_call.1} parent=5 // pred_region
        %s294 = ssub.s32 %s21, 1
        %s295 = sand.u32 %s34, 1
        %s296 = scalar_lea.sflag [#allocation4], %s295
        %s297 = sand.u32 %s34, 1
        %s298 = smul.addr %s297, 64
        %s299 = scalar_lea.vmem [#allocation3], %s298
        // Predicated region
        $region49: #{tpu_custom_call.1} parent=47 // pred_check
          %p300 = pneg %p47
        $region50: #{tpu_custom_call.1} parent=47 // pred_check_branch
          %302 = sbr.rel (%p300) target = $region52
        $region51: #{tpu_custom_call.1} parent=47 // pred_region
          %303 = dma.done %s296, 1024
        $region52: #{tpu_custom_call.1} parent=47 // pred_fallthru
          _
        // Predicated region
        $region53: #{tpu_custom_call.1} parent=47 // pred_check
          %p304 = pneg %p68
        $region54: #{tpu_custom_call.1} parent=47 // pred_check_branch
          %306 = sbr.rel (%p304) target = $region56
        $region55: #{tpu_custom_call.1} parent=47 // pred_region
          %307 = dma.done [#allocation7], 8192
        $region56: #{tpu_custom_call.1} parent=47 // pred_fallthru
          _
        // Predicated region
        $region57: #{tpu_custom_call.1} parent=47 // pred_check
          %p308 = pneg %p110
        $region58: #{tpu_custom_call.1} parent=47 // pred_check_branch
          %310 = sbr.rel (%p308) target = $region60
        $region59: #{tpu_custom_call.1} parent=47 // pred_region
          %311 = dma.done [#allocation7], 16384
        $region60: #{tpu_custom_call.1} parent=47 // pred_fallthru
          _
        // Predicated region
        $region61: #{tpu_custom_call.1} parent=47 // pred_check
          %p312 = pneg %p152
        $region62: #{tpu_custom_call.1} parent=47 // pred_check_branch
          %314 = sbr.rel (%p312) target = $region64
        $region63: #{tpu_custom_call.1} parent=47 // pred_region
          %315 = dma.done [#allocation10], 1024
        $region64: #{tpu_custom_call.1} parent=47 // pred_fallthru
          _
        %s316 = sand.u32 %s34, 1
        %s317 = scalar_lea.sflag [#allocation4], %s316
        %s318 = sand.u32 %s34, 1
        %s319 = smul.addr %s318, 64
        %s320 = scalar_lea.vmem [#allocation3], %s319
        %p321 = pneg %p47
        %p322 = pneg %p44
        %p323 = pneg %p68
        %p324 = pneg %p65
        %p325 = pneg %p89
        %p326 = pneg %p86
        %p327 = pneg %p110
        %p328 = pneg %p107
        %p329 = pneg %p131
        %p330 = pneg %p128
        %p331 = pneg %p152
        %p332 = pneg %p149
        %p333 = pneg %p173
        %p334 = pneg %p170
        %p335 = pneg %p199
        %p336 = pneg %p196
        %s337 = sand.u32 %s186, 1
        %s338 = scalar_lea.sflag [#allocation5], %s337
        %s339 = sand.u32 %s186, 1
        %s340 = smul.addr %s339, 8
        %s341 = scalar_lea.vmem [#allocation11], %s340
        %s342 = smul.u32 8, %s26
        %v344 = vld [vmem:[%s299] sm:$0xff]
        %v345 = vld [vmem:[%s299 + $0x8] sm:$0xff]
        %v346 = vld [vmem:[%s299 + $0x10] sm:$0xff]
        %v347 = vld [vmem:[%s299 + $0x18] sm:$0xff]
        %v348 = vld [vmem:[%s299 + $0x20] sm:$0xff]
        %v349 = vld [vmem:[%s299 + $0x28] sm:$0xff]
        %v350 = vld [vmem:[%s299 + $0x30] sm:$0xff]
        %v351 = vld [vmem:[%s299 + $0x38] sm:$0xff]
        %v352 = vld [vmem:[#allocation6] sm:$0xff]
        %v353 = vld [vmem:[#allocation6 + $0x8] sm:$0xff]
        %v354 = vld [vmem:[#allocation6 + $0x10] sm:$0xff]
        %v355 = vld [vmem:[#allocation6 + $0x18] sm:$0xff]
        %v356 = vld [vmem:[#allocation6 + $0x20] sm:$0xff]
        %v357 = vld [vmem:[#allocation6 + $0x28] sm:$0xff]
        %v358 = vld [vmem:[#allocation6 + $0x30] sm:$0xff]
        %v359 = vld [vmem:[#allocation6 + $0x38] sm:$0xff]
        %v360 = vld [vmem:[#allocation6 + $0x40] sm:$0xff]
        %v361 = vld [vmem:[#allocation6 + $0x48] sm:$0xff]
        %v362 = vld [vmem:[#allocation6 + $0x50] sm:$0xff]
        %v363 = vld [vmem:[#allocation6 + $0x58] sm:$0xff]
        %v364 = vld [vmem:[#allocation6 + $0x60] sm:$0xff]
        %v365 = vld [vmem:[#allocation6 + $0x68] sm:$0xff]
        %v366 = vld [vmem:[#allocation6 + $0x70] sm:$0xff]
        %v367 = vld [vmem:[#allocation6 + $0x78] sm:$0xff]
        %v368 = vld [vmem:[#allocation6 + $0x80] sm:$0xff]
        %v369 = vld [vmem:[#allocation6 + $0x88] sm:$0xff]
        %v370 = vld [vmem:[#allocation6 + $0x90] sm:$0xff]
        %v371 = vld [vmem:[#allocation6 + $0x98] sm:$0xff]
        %v372 = vld [vmem:[#allocation6 + $0xa0] sm:$0xff]
        %v373 = vld [vmem:[#allocation6 + $0xa8] sm:$0xff]
        %v374 = vld [vmem:[#allocation6 + $0xb0] sm:$0xff]
        %v375 = vld [vmem:[#allocation6 + $0xb8] sm:$0xff]
        %v376 = vld [vmem:[#allocation6 + $0xc0] sm:$0xff]
        %v377 = vld [vmem:[#allocation6 + $0xc8] sm:$0xff]
        %v378 = vld [vmem:[#allocation6 + $0xd0] sm:$0xff]
        %v379 = vld [vmem:[#allocation6 + $0xd8] sm:$0xff]
        %v380 = vld [vmem:[#allocation6 + $0xe0] sm:$0xff]
        %v381 = vld [vmem:[#allocation6 + $0xe8] sm:$0xff]
        %v382 = vld [vmem:[#allocation6 + $0xf0] sm:$0xff]
        %v383 = vld [vmem:[#allocation6 + $0xf8] sm:$0xff]
        %v384 = vld [vmem:[#allocation6 + $0x100] sm:$0xff]
        %v385 = vld [vmem:[#allocation6 + $0x108] sm:$0xff]
        %v386 = vld [vmem:[#allocation6 + $0x110] sm:$0xff]
        %v387 = vld [vmem:[#allocation6 + $0x118] sm:$0xff]
        %v388 = vld [vmem:[#allocation6 + $0x120] sm:$0xff]
        %v389 = vld [vmem:[#allocation6 + $0x128] sm:$0xff]
        %v390 = vld [vmem:[#allocation6 + $0x130] sm:$0xff]
        %v391 = vld [vmem:[#allocation6 + $0x138] sm:$0xff]
        %v392 = vld [vmem:[#allocation6 + $0x140] sm:$0xff]
        %v393 = vld [vmem:[#allocation6 + $0x148] sm:$0xff]
        %v394 = vld [vmem:[#allocation6 + $0x150] sm:$0xff]
        %v395 = vld [vmem:[#allocation6 + $0x158] sm:$0xff]
        %v396 = vld [vmem:[#allocation6 + $0x160] sm:$0xff]
        %v397 = vld [vmem:[#allocation6 + $0x168] sm:$0xff]
        %v398 = vld [vmem:[#allocation6 + $0x170] sm:$0xff]
        %v399 = vld [vmem:[#allocation6 + $0x178] sm:$0xff]
        %v400 = vld [vmem:[#allocation6 + $0x180] sm:$0xff]
        %v401 = vld [vmem:[#allocation6 + $0x188] sm:$0xff]
        %v402 = vld [vmem:[#allocation6 + $0x190] sm:$0xff]
        %v403 = vld [vmem:[#allocation6 + $0x198] sm:$0xff]
        %v404 = vld [vmem:[#allocation6 + $0x1a0] sm:$0xff]
        %v405 = vld [vmem:[#allocation6 + $0x1a8] sm:$0xff]
        %v406 = vld [vmem:[#allocation6 + $0x1b0] sm:$0xff]
        %v407 = vld [vmem:[#allocation6 + $0x1b8] sm:$0xff]
        %v408 = vld [vmem:[#allocation6 + $0x1c0] sm:$0xff]
        %v409 = vld [vmem:[#allocation6 + $0x1c8] sm:$0xff]
        %v410 = vld [vmem:[#allocation6 + $0x1d0] sm:$0xff]
        %v411 = vld [vmem:[#allocation6 + $0x1d8] sm:$0xff]
        %v412 = vld [vmem:[#allocation6 + $0x1e0] sm:$0xff]
        %v413 = vld [vmem:[#allocation6 + $0x1e8] sm:$0xff]
        %v414 = vld [vmem:[#allocation6 + $0x1f0] sm:$0xff]
        %v415 = vld [vmem:[#allocation6 + $0x1f8] sm:$0xff]
        %v416 = vld [vmem:[%s2] sm:$0xf]
        %v418 = vlaneseq
        %v419 = vshrl.u32 %v418, 7
        %v420 = vsub.s32 0, %v419
        %v421 = vrot.slane %v416, %v420
        %v422 = vlaneseq
        %v423 = vshrl.u32 %v422, 7
        %v424 = vsub.s32 1, %v423
        %v425 = vrot.slane %v416, %v424
        %v426 = vlaneseq
        %v427 = vshrl.u32 %v426, 7
        %v428 = vsub.s32 2, %v427
        %v429 = vrot.slane %v416, %v428
        %v430 = vlaneseq
        %v431 = vshrl.u32 %v430, 7
        %v432 = vsub.s32 3, %v431
        %v433 = vrot.slane %v416, %v432
        %v446 = vunpack.c.l.b16 %v344
        %v447 = vunpack.c.h.b16 %v344
        %v448 = vunpack.c.l.b16 %v345
        %v449 = vunpack.c.h.b16 %v345
        %v450 = vunpack.c.l.b16 %v346
        %v451 = vunpack.c.h.b16 %v346
        %v452 = vunpack.c.l.b16 %v347
        %v453 = vunpack.c.h.b16 %v347
        %v454 = vunpack.c.l.b16 %v348
        %v455 = vunpack.c.h.b16 %v348
        %v456 = vunpack.c.l.b16 %v349
        %v457 = vunpack.c.h.b16 %v349
        %v458 = vunpack.c.l.b16 %v350
        %v459 = vunpack.c.h.b16 %v350
        %v460 = vunpack.c.l.b16 %v351
        %v461 = vunpack.c.h.b16 %v351
        %v462 = vpack.c.b16 %v448, %v446
        %v463 = vpack.c.b16 %v449, %v447
        %v464 = vpack.c.b16 %v452, %v450
        %v465 = vpack.c.b16 %v453, %v451
        %v466 = vpack.c.b16 %v456, %v454
        %v467 = vpack.c.b16 %v457, %v455
        %v468 = vpack.c.b16 %v460, %v458
        %v469 = vpack.c.b16 %v461, %v459
        %v542 = vunpack.c.l.b16 %v352
        %v543 = vunpack.c.h.b16 %v352
        %v544 = vunpack.c.l.b16 %v353
        %v545 = vunpack.c.h.b16 %v353
        %v546 = vunpack.c.l.b16 %v354
        %v547 = vunpack.c.h.b16 %v354
        %v548 = vunpack.c.l.b16 %v355
        %v549 = vunpack.c.h.b16 %v355
        %v550 = vunpack.c.l.b16 %v356
        %v551 = vunpack.c.h.b16 %v356
        %v552 = vunpack.c.l.b16 %v357
        %v553 = vunpack.c.h.b16 %v357
        %v554 = vunpack.c.l.b16 %v358
        %v555 = vunpack.c.h.b16 %v358
        %v556 = vunpack.c.l.b16 %v359
        %v557 = vunpack.c.h.b16 %v359
        %v558 = vunpack.c.l.b16 %v360
        %v559 = vunpack.c.h.b16 %v360
        %v560 = vunpack.c.l.b16 %v361
        %v561 = vunpack.c.h.b16 %v361
        %v562 = vunpack.c.l.b16 %v362
        %v563 = vunpack.c.h.b16 %v362
        %v564 = vunpack.c.l.b16 %v363
        %v565 = vunpack.c.h.b16 %v363
        %v566 = vunpack.c.l.b16 %v364
        %v567 = vunpack.c.h.b16 %v364
        %v568 = vunpack.c.l.b16 %v365
        %v569 = vunpack.c.h.b16 %v365
        %v570 = vunpack.c.l.b16 %v366
        %v571 = vunpack.c.h.b16 %v366
        %v572 = vunpack.c.l.b16 %v367
        %v573 = vunpack.c.h.b16 %v367
        %v574 = vunpack.c.l.b16 %v368
        %v575 = vunpack.c.h.b16 %v368
        %v576 = vunpack.c.l.b16 %v369
        %v577 = vunpack.c.h.b16 %v369
        %v578 = vunpack.c.l.b16 %v370
        %v579 = vunpack.c.h.b16 %v370
        %v580 = vunpack.c.l.b16 %v371
        %v581 = vunpack.c.h.b16 %v371
        %v582 = vunpack.c.l.b16 %v372
        %v583 = vunpack.c.h.b16 %v372
        %v584 = vunpack.c.l.b16 %v373
        %v585 = vunpack.c.h.b16 %v373
        %v586 = vunpack.c.l.b16 %v374
        %v587 = vunpack.c.h.b16 %v374
        %v588 = vunpack.c.l.b16 %v375
        %v589 = vunpack.c.h.b16 %v375
        %v590 = vunpack.c.l.b16 %v376
        %v591 = vunpack.c.h.b16 %v376
        %v592 = vunpack.c.l.b16 %v377
        %v593 = vunpack.c.h.b16 %v377
        %v594 = vunpack.c.l.b16 %v378
        %v595 = vunpack.c.h.b16 %v378
        %v596 = vunpack.c.l.b16 %v379
        %v597 = vunpack.c.h.b16 %v379
        %v598 = vunpack.c.l.b16 %v380
        %v599 = vunpack.c.h.b16 %v380
        %v600 = vunpack.c.l.b16 %v381
        %v601 = vunpack.c.h.b16 %v381
        %v602 = vunpack.c.l.b16 %v382
        %v603 = vunpack.c.h.b16 %v382
        %v604 = vunpack.c.l.b16 %v383
        %v605 = vunpack.c.h.b16 %v383
        %v606 = vunpack.c.l.b16 %v384
        %v607 = vunpack.c.h.b16 %v384
        %v608 = vunpack.c.l.b16 %v385
        %v609 = vunpack.c.h.b16 %v385
        %v610 = vunpack.c.l.b16 %v386
        %v611 = vunpack.c.h.b16 %v386
        %v612 = vunpack.c.l.b16 %v387
        %v613 = vunpack.c.h.b16 %v387
        %v614 = vunpack.c.l.b16 %v388
        %v615 = vunpack.c.h.b16 %v388
        %v616 = vunpack.c.l.b16 %v389
        %v617 = vunpack.c.h.b16 %v389
        %v618 = vunpack.c.l.b16 %v390
        %v619 = vunpack.c.h.b16 %v390
        %v620 = vunpack.c.l.b16 %v391
        %v621 = vunpack.c.h.b16 %v391
        %v622 = vunpack.c.l.b16 %v392
        %v623 = vunpack.c.h.b16 %v392
        %v624 = vunpack.c.l.b16 %v393
        %v625 = vunpack.c.h.b16 %v393
        %v626 = vunpack.c.l.b16 %v394
        %v627 = vunpack.c.h.b16 %v394
        %v628 = vunpack.c.l.b16 %v395
        %v629 = vunpack.c.h.b16 %v395
        %v630 = vunpack.c.l.b16 %v396
        %v631 = vunpack.c.h.b16 %v396
        %v632 = vunpack.c.l.b16 %v397
        %v633 = vunpack.c.h.b16 %v397
        %v634 = vunpack.c.l.b16 %v398
        %v635 = vunpack.c.h.b16 %v398
        %v636 = vunpack.c.l.b16 %v399
        %v637 = vunpack.c.h.b16 %v399
        %v638 = vunpack.c.l.b16 %v400
        %v639 = vunpack.c.h.b16 %v400
        %v640 = vunpack.c.l.b16 %v401
        %v641 = vunpack.c.h.b16 %v401
        %v642 = vunpack.c.l.b16 %v402
        %v643 = vunpack.c.h.b16 %v402
        %v644 = vunpack.c.l.b16 %v403
        %v645 = vunpack.c.h.b16 %v403
        %v646 = vunpack.c.l.b16 %v404
        %v647 = vunpack.c.h.b16 %v404
        %v648 = vunpack.c.l.b16 %v405
        %v649 = vunpack.c.h.b16 %v405
        %v650 = vunpack.c.l.b16 %v406
        %v651 = vunpack.c.h.b16 %v406
        %v652 = vunpack.c.l.b16 %v407
        %v653 = vunpack.c.h.b16 %v407
        %v654 = vunpack.c.l.b16 %v408
        %v655 = vunpack.c.h.b16 %v408
        %v656 = vunpack.c.l.b16 %v409
        %v657 = vunpack.c.h.b16 %v409
        %v658 = vunpack.c.l.b16 %v410
        %v659 = vunpack.c.h.b16 %v410
        %v660 = vunpack.c.l.b16 %v411
        %v661 = vunpack.c.h.b16 %v411
        %v662 = vunpack.c.l.b16 %v412
        %v663 = vunpack.c.h.b16 %v412
        %v664 = vunpack.c.l.b16 %v413
        %v665 = vunpack.c.h.b16 %v413
        %v666 = vunpack.c.l.b16 %v414
        %v667 = vunpack.c.h.b16 %v414
        %v668 = vunpack.c.l.b16 %v415
        %v669 = vunpack.c.h.b16 %v415
        %v670 = vpack.c.b16 %v546, %v542
        %v671 = vpack.c.b16 %v547, %v543
        %v672 = vpack.c.b16 %v548, %v544
        %v673 = vpack.c.b16 %v549, %v545
        %v674 = vpack.c.b16 %v554, %v550
        %v675 = vpack.c.b16 %v555, %v551
        %v676 = vpack.c.b16 %v556, %v552
        %v677 = vpack.c.b16 %v557, %v553
        %v678 = vpack.c.b16 %v562, %v558
        %v679 = vpack.c.b16 %v563, %v559
        %v680 = vpack.c.b16 %v564, %v560
        %v681 = vpack.c.b16 %v565, %v561
        %v682 = vpack.c.b16 %v570, %v566
        %v683 = vpack.c.b16 %v571, %v567
        %v684 = vpack.c.b16 %v572, %v568
        %v685 = vpack.c.b16 %v573, %v569
        %v686 = vpack.c.b16 %v578, %v574
        %v687 = vpack.c.b16 %v579, %v575
        %v688 = vpack.c.b16 %v580, %v576
        %v689 = vpack.c.b16 %v581, %v577
        %v690 = vpack.c.b16 %v586, %v582
        %v691 = vpack.c.b16 %v587, %v583
        %v692 = vpack.c.b16 %v588, %v584
        %v693 = vpack.c.b16 %v589, %v585
        %v694 = vpack.c.b16 %v594, %v590
        %v695 = vpack.c.b16 %v595, %v591
        %v696 = vpack.c.b16 %v596, %v592
        %v697 = vpack.c.b16 %v597, %v593
        %v698 = vpack.c.b16 %v602, %v598
        %v699 = vpack.c.b16 %v603, %v599
        %v700 = vpack.c.b16 %v604, %v600
        %v701 = vpack.c.b16 %v605, %v601
        %v702 = vpack.c.b16 %v610, %v606
        %v703 = vpack.c.b16 %v611, %v607
        %v704 = vpack.c.b16 %v612, %v608
        %v705 = vpack.c.b16 %v613, %v609
        %v706 = vpack.c.b16 %v618, %v614
        %v707 = vpack.c.b16 %v619, %v615
        %v708 = vpack.c.b16 %v620, %v616
        %v709 = vpack.c.b16 %v621, %v617
        %v710 = vpack.c.b16 %v626, %v622
        %v711 = vpack.c.b16 %v627, %v623
        %v712 = vpack.c.b16 %v628, %v624
        %v713 = vpack.c.b16 %v629, %v625
        %v714 = vpack.c.b16 %v634, %v630
        %v715 = vpack.c.b16 %v635, %v631
        %v716 = vpack.c.b16 %v636, %v632
        %v717 = vpack.c.b16 %v637, %v633
        %v718 = vpack.c.b16 %v642, %v638
        %v719 = vpack.c.b16 %v643, %v639
        %v720 = vpack.c.b16 %v644, %v640
        %v721 = vpack.c.b16 %v645, %v641
        %v722 = vpack.c.b16 %v650, %v646
        %v723 = vpack.c.b16 %v651, %v647
        %v724 = vpack.c.b16 %v652, %v648
        %v725 = vpack.c.b16 %v653, %v649
        %v726 = vpack.c.b16 %v658, %v654
        %v727 = vpack.c.b16 %v659, %v655
        %v728 = vpack.c.b16 %v660, %v656
        %v729 = vpack.c.b16 %v661, %v657
        %v730 = vpack.c.b16 %v666, %v662
        %v731 = vpack.c.b16 %v667, %v663
        %v732 = vpack.c.b16 %v668, %v664
        %v733 = vpack.c.b16 %v669, %v665
        %798 = vmatprep.subr.bf16.mxu0 %v671
        %799 = vmatpush1.bf16.msra.mxu0 %v670
        %800 = vmatprep.subr.bf16.mxu0 %v675
        %801 = vmatpush1.bf16.msra.mxu0 %v674
        %802 = vmatprep.subr.bf16.mxu0 %v679
        %803 = vmatpush1.bf16.msra.mxu0 %v678
        %804 = vmatprep.subr.bf16.mxu0 %v683
        %805 = vmatpush1.bf16.msra.mxu0 %v682
        %806 = vmatprep.subr.bf16.mxu0 %v687
        %807 = vmatpush1.bf16.msra.mxu0 %v686
        %808 = vmatprep.subr.bf16.mxu0 %v691
        %809 = vmatpush1.bf16.msra.mxu0 %v690
        %810 = vmatprep.subr.bf16.mxu0 %v695
        %811 = vmatpush1.bf16.msra.mxu0 %v694
        %812 = vmatprep.subr.bf16.mxu0 %v699
        %813 = vmatpush1.bf16.msra.mxu0 %v698
        %814 = vmatprep.subr.bf16.mxu0 %v703
        %815 = vmatpush1.bf16.msra.mxu0 %v702
        %816 = vmatprep.subr.bf16.mxu0 %v707
        %817 = vmatpush1.bf16.msra.mxu0 %v706
        %818 = vmatprep.subr.bf16.mxu0 %v711
        %819 = vmatpush1.bf16.msra.mxu0 %v710
        %820 = vmatprep.subr.bf16.mxu0 %v715
        %821 = vmatpush1.bf16.msra.mxu0 %v714
        %822 = vmatprep.subr.bf16.mxu0 %v719
        %823 = vmatpush1.bf16.msra.mxu0 %v718
        %824 = vmatprep.subr.bf16.mxu0 %v723
        %825 = vmatpush1.bf16.msra.mxu0 %v722
        %826 = vmatprep.subr.bf16.mxu0 %v727
        %827 = vmatpush1.bf16.msra.mxu0 %v726
        %828 = vmatprep.subr.bf16.mxu0 %v731
        %829 = vmatpush1.bf16.msra.mxu0 %v730
        %830 = vmatprep.mubr.bf16.mxu0 %v463
        %831 = vmatmul.mubr.bf16.gmra.mrb[0].mxu0 %v462
        %v832 = vpop.f32.mrb[0].mxu0
        %v833 = vadd.f32 %v421, %v832
        %v834 = vpop.f32.mrb[0].mxu0
        %v835 = vadd.f32 %v425, %v834
        %v836 = vpop.f32.mrb[0].mxu0
        %v837 = vadd.f32 %v421, %v836
        %v838 = vpop.f32.mrb[0].mxu0
        %v839 = vadd.f32 %v425, %v838
        %840 = vmatprep.mubr.bf16.mxu0 %v465
        %841 = vmatmul.mubr.bf16.gmra.mrb[0].mxu0 %v464
        %v842 = vpop.f32.mrb[0].mxu0
        %v843 = vadd.f32 %v421, %v842
        %v844 = vpop.f32.mrb[0].mxu0
        %v845 = vadd.f32 %v425, %v844
        %v846 = vpop.f32.mrb[0].mxu0
        %v847 = vadd.f32 %v421, %v846
        %v848 = vpop.f32.mrb[0].mxu0
        %v849 = vadd.f32 %v425, %v848
        %850 = vmatprep.mubr.bf16.mxu0 %v467
        %851 = vmatmul.mubr.bf16.gmra.mrb[0].mxu0 %v466
        %v852 = vpop.f32.mrb[0].mxu0
        %v853 = vadd.f32 %v421, %v852
        %v854 = vpop.f32.mrb[0].mxu0
        %v855 = vadd.f32 %v425, %v854
        %v856 = vpop.f32.mrb[0].mxu0
        %v857 = vadd.f32 %v421, %v856
        %v858 = vpop.f32.mrb[0].mxu0
        %v859 = vadd.f32 %v425, %v858
        %860 = vmatprep.mubr.bf16.mxu0 %v469
        %861 = vmatmul.mubr.bf16.gmra.mrb[0].mxu0 %v468
        %v862 = vpop.f32.mrb[0].mxu0
        %v863 = vadd.f32 %v421, %v862
        %v864 = vpop.f32.mrb[0].mxu0
        %v865 = vadd.f32 %v425, %v864
        %v866 = vpop.f32.mrb[0].mxu0
        %v867 = vadd.f32 %v421, %v866
        %v868 = vpop.f32.mrb[0].mxu0
        %v869 = vadd.f32 %v425, %v868
        %870 = vdwg.mxu0
        %871 = vmatprep.subr.bf16.mxu0 %v673
        %872 = vmatpush1.bf16.msra.mxu0 %v672
        %873 = vmatprep.subr.bf16.mxu0 %v677
        %874 = vmatpush1.bf16.msra.mxu0 %v676
        %875 = vmatprep.subr.bf16.mxu0 %v681
        %876 = vmatpush1.bf16.msra.mxu0 %v680
        %877 = vmatprep.subr.bf16.mxu0 %v685
        %878 = vmatpush1.bf16.msra.mxu0 %v684
        %879 = vmatprep.subr.bf16.mxu0 %v689
        %880 = vmatpush1.bf16.msra.mxu0 %v688
        %881 = vmatprep.subr.bf16.mxu0 %v693
        %882 = vmatpush1.bf16.msra.mxu0 %v692
        %883 = vmatprep.subr.bf16.mxu0 %v697
        %884 = vmatpush1.bf16.msra.mxu0 %v696
        %885 = vmatprep.subr.bf16.mxu0 %v701
        %886 = vmatpush1.bf16.msra.mxu0 %v700
        %887 = vmatprep.subr.bf16.mxu0 %v705
        %888 = vmatpush1.bf16.msra.mxu0 %v704
        %889 = vmatprep.subr.bf16.mxu0 %v709
        %890 = vmatpush1.bf16.msra.mxu0 %v708
        %891 = vmatprep.subr.bf16.mxu0 %v713
        %892 = vmatpush1.bf16.msra.mxu0 %v712
        %893 = vmatprep.subr.bf16.mxu0 %v717
        %894 = vmatpush1.bf16.msra.mxu0 %v716
        %895 = vmatprep.subr.bf16.mxu0 %v721
        %896 = vmatpush1.bf16.msra.mxu0 %v720
        %897 = vmatprep.subr.bf16.mxu0 %v725
        %898 = vmatpush1.bf16.msra.mxu0 %v724
        %899 = vmatprep.subr.bf16.mxu0 %v729
        %900 = vmatpush1.bf16.msra.mxu0 %v728
        %901 = vmatprep.subr.bf16.mxu0 %v733
        %902 = vmatpush1.bf16.msra.mxu0 %v732
        %903 = vmatprep.mubr.bf16.mxu0 %v463
        %904 = vmatmul.mubr.bf16.gmra.mrb[0].mxu0 %v462
        %v905 = vpop.f32.mrb[0].mxu0
        %v906 = vadd.f32 %v429, %v905
        %v907 = vpop.f32.mrb[0].mxu0
        %v908 = vadd.f32 %v433, %v907
        %v909 = vpop.f32.mrb[0].mxu0
        %v910 = vadd.f32 %v429, %v909
        %v911 = vpop.f32.mrb[0].mxu0
        %v912 = vadd.f32 %v433, %v911
        %913 = vmatprep.mubr.bf16.mxu0 %v465
        %914 = vmatmul.mubr.bf16.gmra.mrb[0].mxu0 %v464
        %v915 = vpop.f32.mrb[0].mxu0
        %v916 = vadd.f32 %v429, %v915
        %v917 = vpop.f32.mrb[0].mxu0
        %v918 = vadd.f32 %v433, %v917
        %v919 = vpop.f32.mrb[0].mxu0
        %v920 = vadd.f32 %v429, %v919
        %v921 = vpop.f32.mrb[0].mxu0
        %v922 = vadd.f32 %v433, %v921
        %923 = vmatprep.mubr.bf16.mxu0 %v467
        %924 = vmatmul.mubr.bf16.gmra.mrb[0].mxu0 %v466
        %v925 = vpop.f32.mrb[0].mxu0
        %v926 = vadd.f32 %v429, %v925
        %v927 = vpop.f32.mrb[0].mxu0
        %v928 = vadd.f32 %v433, %v927
        %v929 = vpop.f32.mrb[0].mxu0
        %v930 = vadd.f32 %v429, %v929
        %v931 = vpop.f32.mrb[0].mxu0
        %v932 = vadd.f32 %v433, %v931
        %933 = vmatprep.mubr.bf16.mxu0 %v469
        %934 = vmatmul.mubr.bf16.gmra.mrb[0].mxu0 %v468
        %v935 = vpop.f32.mrb[0].mxu0
        %v936 = vadd.f32 %v429, %v935
        %v937 = vpop.f32.mrb[0].mxu0
        %v938 = vadd.f32 %v433, %v937
        %v939 = vpop.f32.mrb[0].mxu0
        %v940 = vadd.f32 %v429, %v939
        %v941 = vpop.f32.mrb[0].mxu0
        %v942 = vadd.f32 %v433, %v941
        %943 = vdwg.mxu0
        %944 = vst [vmem:[#allocation2] sm:$0xff] %v833
        %945 = vst [vmem:[#allocation2 + $0x8] sm:$0xff] %v835
        %946 = vst [vmem:[#allocation2 + $0x10] sm:$0xff] %v906
        %947 = vst [vmem:[#allocation2 + $0x18] sm:$0xff] %v908
        %948 = vst [vmem:[#allocation2 + $0x20] sm:$0xff] %v837
        %949 = vst [vmem:[#allocation2 + $0x28] sm:$0xff] %v839
        %950 = vst [vmem:[#allocation2 + $0x30] sm:$0xff] %v910
        %951 = vst [vmem:[#allocation2 + $0x38] sm:$0xff] %v912
        %952 = vst [vmem:[#allocation2 + $0x40] sm:$0xff] %v843
        %953 = vst [vmem:[#allocation2 + $0x48] sm:$0xff] %v845
        %954 = vst [vmem:[#allocation2 + $0x50] sm:$0xff] %v916
        %955 = vst [vmem:[#allocation2 + $0x58] sm:$0xff] %v918
        %956 = vst [vmem:[#allocation2 + $0x60] sm:$0xff] %v847
        %957 = vst [vmem:[#allocation2 + $0x68] sm:$0xff] %v849
        %958 = vst [vmem:[#allocation2 + $0x70] sm:$0xff] %v920
        %959 = vst [vmem:[#allocation2 + $0x78] sm:$0xff] %v922
        %960 = vst [vmem:[#allocation2 + $0x80] sm:$0xff] %v853
        %961 = vst [vmem:[#allocation2 + $0x88] sm:$0xff] %v855
        %962 = vst [vmem:[#allocation2 + $0x90] sm:$0xff] %v926
        %963 = vst [vmem:[#allocation2 + $0x98] sm:$0xff] %v928
        %964 = vst [vmem:[#allocation2 + $0xa0] sm:$0xff] %v857
        %965 = vst [vmem:[#allocation2 + $0xa8] sm:$0xff] %v859
        %966 = vst [vmem:[#allocation2 + $0xb0] sm:$0xff] %v930
        %967 = vst [vmem:[#allocation2 + $0xb8] sm:$0xff] %v932
        %968 = vst [vmem:[#allocation2 + $0xc0] sm:$0xff] %v863
        %969 = vst [vmem:[#allocation2 + $0xc8] sm:$0xff] %v865
        %970 = vst [vmem:[#allocation2 + $0xd0] sm:$0xff] %v936
        %971 = vst [vmem:[#allocation2 + $0xd8] sm:$0xff] %v938
        %972 = vst [vmem:[#allocation2 + $0xe0] sm:$0xff] %v867
        %973 = vst [vmem:[#allocation2 + $0xe8] sm:$0xff] %v869
        %974 = vst [vmem:[#allocation2 + $0xf0] sm:$0xff] %v940
        %975 = vst [vmem:[#allocation2 + $0xf8] sm:$0xff] %v942
        %v976 = vld [vmem:[%s4] sm:$0xf]
        %v978 = vlaneseq
        %v979 = vshrl.u32 %v978, 7
        %v980 = vsub.s32 0, %v979
        %v981 = vrot.slane %v976, %v980
        %v982 = vlaneseq
        %v983 = vshrl.u32 %v982, 7
        %v984 = vsub.s32 1, %v983
        %v985 = vrot.slane %v976, %v984
        %v986 = vlaneseq
        %v987 = vshrl.u32 %v986, 7
        %v988 = vsub.s32 2, %v987
        %v989 = vrot.slane %v976, %v988
        %v990 = vlaneseq
        %v991 = vshrl.u32 %v990, 7
        %v992 = vsub.s32 3, %v991
        %v993 = vrot.slane %v976, %v992
        %v998 = vld [vmem:[#allocation2] ss:$8 sm:$0xf]
        %s999 = scalar_lea.vmem [#allocation2], 32
        %v1000 = vld [vmem:[%s999] ss:$8 sm:$0xf]
        %s1001 = scalar_lea.vmem [#allocation2], 64
        %v1002 = vld [vmem:[%s1001] ss:$8 sm:$0xf]
        %s1003 = scalar_lea.vmem [#allocation2], 96
        %v1004 = vld [vmem:[%s1003] ss:$8 sm:$0xf]
        %s1005 = scalar_lea.vmem [#allocation2], 128
        %v1006 = vld [vmem:[%s1005] ss:$8 sm:$0xf]
        %s1007 = scalar_lea.vmem [#allocation2], 160
        %v1008 = vld [vmem:[%s1007] ss:$8 sm:$0xf]
        %s1009 = scalar_lea.vmem [#allocation2], 192
        %v1010 = vld [vmem:[%s1009] ss:$8 sm:$0xf]
        %s1011 = scalar_lea.vmem [#allocation2], 224
        %v1012 = vld [vmem:[%s1011] ss:$8 sm:$0xf]
        %v1013 = vadd.f32 %v998, 0.0
        %v1014 = vadd.f32 %v1000, 0.0
        %v1015 = vadd.f32 %v1002, 0.0
        %v1016 = vadd.f32 %v1004, 0.0
        %v1017 = vadd.f32 %v1006, 0.0
        %v1018 = vadd.f32 %v1008, 0.0
        %v1019 = vadd.f32 %v1010, 0.0
        %v1020 = vadd.f32 %v1012, 0.0
        %v1021 = vmul.f32 %v1013, 0.5
        %v1022 = vmul.f32 %v1014, 0.5
        %v1023 = vmul.f32 %v1015, 0.5
        %v1024 = vmul.f32 %v1016, 0.5
        %v1025 = vmul.f32 %v1017, 0.5
        %v1026 = vmul.f32 %v1018, 0.5
        %v1027 = vmul.f32 %v1019, 0.5
        %v1028 = vmul.f32 %v1020, 0.5
        %v1029 = vtanh.pop %v1021
        %v1030 = vtanh.pop %v1022
        %v1031 = vtanh.pop %v1023
        %v1032 = vtanh.pop %v1024
        %v1033 = vtanh.pop %v1025
        %v1034 = vtanh.pop %v1026
        %v1035 = vtanh.pop %v1027
        %v1036 = vtanh.pop %v1028
        %v1037 = vmul.f32 %v1029, 0.5
        %v1038 = vmul.f32 %v1030, 0.5
        %v1039 = vmul.f32 %v1031, 0.5
        %v1040 = vmul.f32 %v1032, 0.5
        %v1041 = vmul.f32 %v1033, 0.5
        %v1042 = vmul.f32 %v1034, 0.5
        %v1043 = vmul.f32 %v1035, 0.5
        %v1044 = vmul.f32 %v1036, 0.5
        %v1045 = vadd.f32 %v1037, 0.5
        %v1046 = vadd.f32 %v1038, 0.5
        %v1047 = vadd.f32 %v1039, 0.5
        %v1048 = vadd.f32 %v1040, 0.5
        %v1049 = vadd.f32 %v1041, 0.5
        %v1050 = vadd.f32 %v1042, 0.5
        %v1051 = vadd.f32 %v1043, 0.5
        %v1052 = vadd.f32 %v1044, 0.5
        %v1061 = vrot.slane %v1013, 1
        %v1062 = vrot.slane %v1014, 1
        %v1063 = vrot.slane %v1015, 1
        %v1064 = vrot.slane %v1016, 1
        %v1065 = vrot.slane %v1017, 1
        %v1066 = vrot.slane %v1018, 1
        %v1067 = vrot.slane %v1019, 1
        %v1068 = vrot.slane %v1020, 1
        %v1077 = vmul.f32 %v1061, 0.5
        %v1078 = vmul.f32 %v1062, 0.5
        %v1079 = vmul.f32 %v1063, 0.5
        %v1080 = vmul.f32 %v1064, 0.5
        %v1081 = vmul.f32 %v1065, 0.5
        %v1082 = vmul.f32 %v1066, 0.5
        %v1083 = vmul.f32 %v1067, 0.5
        %v1084 = vmul.f32 %v1068, 0.5
        %v1085 = vtanh.pop %v1077
        %v1086 = vtanh.pop %v1078
        %v1087 = vtanh.pop %v1079
        %v1088 = vtanh.pop %v1080
        %v1089 = vtanh.pop %v1081
        %v1090 = vtanh.pop %v1082
        %v1091 = vtanh.pop %v1083
        %v1092 = vtanh.pop %v1084
        %v1093 = vmul.f32 %v1085, 0.5
        %v1094 = vmul.f32 %v1086, 0.5
        %v1095 = vmul.f32 %v1087, 0.5
        %v1096 = vmul.f32 %v1088, 0.5
        %v1097 = vmul.f32 %v1089, 0.5
        %v1098 = vmul.f32 %v1090, 0.5
        %v1099 = vmul.f32 %v1091, 0.5
        %v1100 = vmul.f32 %v1092, 0.5
        %v1101 = vadd.f32 %v1093, 0.5
        %v1102 = vadd.f32 %v1094, 0.5
        %v1103 = vadd.f32 %v1095, 0.5
        %v1104 = vadd.f32 %v1096, 0.5
        %v1105 = vadd.f32 %v1097, 0.5
        %v1106 = vadd.f32 %v1098, 0.5
        %v1107 = vadd.f32 %v1099, 0.5
        %v1108 = vadd.f32 %v1100, 0.5
        %v1109 = vrot.slane %v1013, 2
        %v1110 = vrot.slane %v1014, 2
        %v1111 = vrot.slane %v1015, 2
        %v1112 = vrot.slane %v1016, 2
        %v1113 = vrot.slane %v1017, 2
        %v1114 = vrot.slane %v1018, 2
        %v1115 = vrot.slane %v1019, 2
        %v1116 = vrot.slane %v1020, 2
        %v1125 = vtanh.pop %v1109
        %v1126 = vtanh.pop %v1110
        %v1127 = vtanh.pop %v1111
        %v1128 = vtanh.pop %v1112
        %v1129 = vtanh.pop %v1113
        %v1130 = vtanh.pop %v1114
        %v1131 = vtanh.pop %v1115
        %v1132 = vtanh.pop %v1116
        %v1133 = vrot.slane %v1013, 3
        %v1134 = vrot.slane %v1014, 3
        %v1135 = vrot.slane %v1015, 3
        %v1136 = vrot.slane %v1016, 3
        %v1137 = vrot.slane %v1017, 3
        %v1138 = vrot.slane %v1018, 3
        %v1139 = vrot.slane %v1019, 3
        %v1140 = vrot.slane %v1020, 3
        %v1149 = vmul.f32 %v1133, 0.5
        %v1150 = vmul.f32 %v1134, 0.5
        %v1151 = vmul.f32 %v1135, 0.5
        %v1152 = vmul.f32 %v1136, 0.5
        %v1153 = vmul.f32 %v1137, 0.5
        %v1154 = vmul.f32 %v1138, 0.5
        %v1155 = vmul.f32 %v1139, 0.5
        %v1156 = vmul.f32 %v1140, 0.5
        %v1157 = vtanh.pop %v1149
        %v1158 = vtanh.pop %v1150
        %v1159 = vtanh.pop %v1151
        %v1160 = vtanh.pop %v1152
        %v1161 = vtanh.pop %v1153
        %v1162 = vtanh.pop %v1154
        %v1163 = vtanh.pop %v1155
        %v1164 = vtanh.pop %v1156
        %v1165 = vmul.f32 %v1157, 0.5
        %v1166 = vmul.f32 %v1158, 0.5
        %v1167 = vmul.f32 %v1159, 0.5
        %v1168 = vmul.f32 %v1160, 0.5
        %v1169 = vmul.f32 %v1161, 0.5
        %v1170 = vmul.f32 %v1162, 0.5
        %v1171 = vmul.f32 %v1163, 0.5
        %v1172 = vmul.f32 %v1164, 0.5
        %v1173 = vadd.f32 %v1165, 0.5
        %v1174 = vadd.f32 %v1166, 0.5
        %v1175 = vadd.f32 %v1167, 0.5
        %v1176 = vadd.f32 %v1168, 0.5
        %v1177 = vadd.f32 %v1169, 0.5
        %v1178 = vadd.f32 %v1170, 0.5
        %v1179 = vadd.f32 %v1171, 0.5
        %v1180 = vadd.f32 %v1172, 0.5
        %v1181 = vmul.f32 %v1101, 0.0
        %v1182 = vmul.f32 %v1102, 0.0
        %v1183 = vmul.f32 %v1103, 0.0
        %v1184 = vmul.f32 %v1104, 0.0
        %v1185 = vmul.f32 %v1105, 0.0
        %v1186 = vmul.f32 %v1106, 0.0
        %v1187 = vmul.f32 %v1107, 0.0
        %v1188 = vmul.f32 %v1108, 0.0
        %v1189 = vmul.f32 %v1045, %v1125
        %v1190 = vmul.f32 %v1046, %v1126
        %v1191 = vmul.f32 %v1047, %v1127
        %v1192 = vmul.f32 %v1048, %v1128
        %v1193 = vmul.f32 %v1049, %v1129
        %v1194 = vmul.f32 %v1050, %v1130
        %v1195 = vmul.f32 %v1051, %v1131
        %v1196 = vmul.f32 %v1052, %v1132
        %v1197 = vadd.f32 %v1181, %v1189
        %v1198 = vadd.f32 %v1182, %v1190
        %v1199 = vadd.f32 %v1183, %v1191
        %v1200 = vadd.f32 %v1184, %v1192
        %v1201 = vadd.f32 %v1185, %v1193
        %v1202 = vadd.f32 %v1186, %v1194
        %v1203 = vadd.f32 %v1187, %v1195
        %v1204 = vadd.f32 %v1188, %v1196
        %v1205 = vtanh.pop %v1197
        %v1206 = vtanh.pop %v1198
        %v1207 = vtanh.pop %v1199
        %v1208 = vtanh.pop %v1200
        %v1209 = vtanh.pop %v1201
        %v1210 = vtanh.pop %v1202
        %v1211 = vtanh.pop %v1203
        %v1212 = vtanh.pop %v1204
        %v1213 = vmul.f32 %v1173, %v1205
        %v1214 = vmul.f32 %v1174, %v1206
        %v1215 = vmul.f32 %v1175, %v1207
        %v1216 = vmul.f32 %v1176, %v1208
        %v1217 = vmul.f32 %v1177, %v1209
        %v1218 = vmul.f32 %v1178, %v1210
        %v1219 = vmul.f32 %v1179, %v1211
        %v1220 = vmul.f32 %v1180, %v1212
        %v1229 = vcombine.low %v1213, %v1214
        %v1230 = vcombine.low %v1215, %v1216
        %v1231 = vcombine.low %v1217, %v1218
        %v1232 = vcombine.low %v1219, %v1220
        %v1234 = vunpack.c.l.s4 1966171168
        %v1235 = vunpack.c.0.s8 %v1234
        %v1236 = vlaneseq
        %v1237 = vshrl.u32 %v1236, 7
        %v1238 = vsub.s32 %v1235, %v1237
        %v1239 = vrot.slane %v1229, %v1238
        %v1241 = vunpack.c.l.s4 1966171168
        %v1242 = vunpack.c.0.s8 %v1241
        %v1243 = vlaneseq
        %v1244 = vshrl.u32 %v1243, 7
        %v1245 = vsub.s32 %v1242, %v1244
        %v1246 = vrot.slane %v1230, %v1245
        %v1248 = vunpack.c.l.s4 1966171168
        %v1249 = vunpack.c.0.s8 %v1248
        %v1250 = vlaneseq
        %v1251 = vshrl.u32 %v1250, 7
        %v1252 = vsub.s32 %v1249, %v1251
        %v1253 = vrot.slane %v1231, %v1252
        %v1255 = vunpack.c.l.s4 1966171168
        %v1256 = vunpack.c.0.s8 %v1255
        %v1257 = vlaneseq
        %v1258 = vshrl.u32 %v1257, 7
        %v1259 = vsub.s32 %v1256, %v1258
        %v1260 = vrot.slane %v1232, %v1259
        %v1261 = vcombine.low %v1239, %v1246
        %v1262 = vcombine.low %v1253, %v1260
        %v1264 = vunpack.c.l.s4 1966171168
        %v1265 = vunpack.c.0.s8 %v1264
        %v1266 = vlaneseq
        %v1267 = vshrl.u32 %v1266, 7
        %v1268 = vsub.s32 %v1265, %v1267
        %v1269 = vrot.slane %v1261, %v1268
        %v1271 = vunpack.c.l.s4 1966171168
        %v1272 = vunpack.c.0.s8 %v1271
        %v1273 = vlaneseq
        %v1274 = vshrl.u32 %v1273, 7
        %v1275 = vsub.s32 %v1272, %v1274
        %v1276 = vrot.slane %v1262, %v1275
        %v1277 = vcombine.low %v1269, %v1276
        %v1279 = vpack.c.bf16 %v1277, %v1277
        %v1280 = vpack.c.bf16 0.0, 0.0
        %v1281 = vld [vmem:[#allocation8] sm:$0xff]
        %v1282 = vld [vmem:[#allocation8 + $0x8] sm:$0xff]
        %v1283 = vld [vmem:[#allocation8 + $0x10] sm:$0xff]
        %v1284 = vld [vmem:[#allocation8 + $0x18] sm:$0xff]
        %v1285 = vld [vmem:[#allocation8 + $0x20] sm:$0xff]
        %v1286 = vld [vmem:[#allocation8 + $0x28] sm:$0xff]
        %v1287 = vld [vmem:[#allocation8 + $0x30] sm:$0xff]
        %v1288 = vld [vmem:[#allocation8 + $0x38] sm:$0xff]
        %v1289 = vld [vmem:[#allocation8 + $0x40] sm:$0xff]
        %v1290 = vld [vmem:[#allocation8 + $0x48] sm:$0xff]
        %v1291 = vld [vmem:[#allocation8 + $0x50] sm:$0xff]
        %v1292 = vld [vmem:[#allocation8 + $0x58] sm:$0xff]
        %v1293 = vld [vmem:[#allocation8 + $0x60] sm:$0xff]
        %v1294 = vld [vmem:[#allocation8 + $0x68] sm:$0xff]
        %v1295 = vld [vmem:[#allocation8 + $0x70] sm:$0xff]
        %v1296 = vld [vmem:[#allocation8 + $0x78] sm:$0xff]
        %v1297 = vld [vmem:[#allocation8 + $0x80] sm:$0xff]
        %v1298 = vld [vmem:[#allocation8 + $0x88] sm:$0xff]
        %v1299 = vld [vmem:[#allocation8 + $0x90] sm:$0xff]
        %v1300 = vld [vmem:[#allocation8 + $0x98] sm:$0xff]
        %v1301 = vld [vmem:[#allocation8 + $0xa0] sm:$0xff]
        %v1302 = vld [vmem:[#allocation8 + $0xa8] sm:$0xff]
        %v1303 = vld [vmem:[#allocation8 + $0xb0] sm:$0xff]
        %v1304 = vld [vmem:[#allocation8 + $0xb8] sm:$0xff]
        %v1305 = vld [vmem:[#allocation8 + $0xc0] sm:$0xff]
        %v1306 = vld [vmem:[#allocation8 + $0xc8] sm:$0xff]
        %v1307 = vld [vmem:[#allocation8 + $0xd0] sm:$0xff]
        %v1308 = vld [vmem:[#allocation8 + $0xd8] sm:$0xff]
        %v1309 = vld [vmem:[#allocation8 + $0xe0] sm:$0xff]
        %v1310 = vld [vmem:[#allocation8 + $0xe8] sm:$0xff]
        %v1311 = vld [vmem:[#allocation8 + $0xf0] sm:$0xff]
        %v1312 = vld [vmem:[#allocation8 + $0xf8] sm:$0xff]
        %v1313 = vld [vmem:[#allocation8 + $0x100] sm:$0xff]
        %v1314 = vld [vmem:[#allocation8 + $0x108] sm:$0xff]
        %v1315 = vld [vmem:[#allocation8 + $0x110] sm:$0xff]
        %v1316 = vld [vmem:[#allocation8 + $0x118] sm:$0xff]
        %v1317 = vld [vmem:[#allocation8 + $0x120] sm:$0xff]
        %v1318 = vld [vmem:[#allocation8 + $0x128] sm:$0xff]
        %v1319 = vld [vmem:[#allocation8 + $0x130] sm:$0xff]
        %v1320 = vld [vmem:[#allocation8 + $0x138] sm:$0xff]
        %v1321 = vld [vmem:[#allocation8 + $0x140] sm:$0xff]
        %v1322 = vld [vmem:[#allocation8 + $0x148] sm:$0xff]
        %v1323 = vld [vmem:[#allocation8 + $0x150] sm:$0xff]
        %v1324 = vld [vmem:[#allocation8 + $0x158] sm:$0xff]
        %v1325 = vld [vmem:[#allocation8 + $0x160] sm:$0xff]
        %v1326 = vld [vmem:[#allocation8 + $0x168] sm:$0xff]
        %v1327 = vld [vmem:[#allocation8 + $0x170] sm:$0xff]
        %v1328 = vld [vmem:[#allocation8 + $0x178] sm:$0xff]
        %v1329 = vld [vmem:[#allocation8 + $0x180] sm:$0xff]
        %v1330 = vld [vmem:[#allocation8 + $0x188] sm:$0xff]
        %v1331 = vld [vmem:[#allocation8 + $0x190] sm:$0xff]
        %v1332 = vld [vmem:[#allocation8 + $0x198] sm:$0xff]
        %v1333 = vld [vmem:[#allocation8 + $0x1a0] sm:$0xff]
        %v1334 = vld [vmem:[#allocation8 + $0x1a8] sm:$0xff]
        %v1335 = vld [vmem:[#allocation8 + $0x1b0] sm:$0xff]
        %v1336 = vld [vmem:[#allocation8 + $0x1b8] sm:$0xff]
        %v1337 = vld [vmem:[#allocation8 + $0x1c0] sm:$0xff]
        %v1338 = vld [vmem:[#allocation8 + $0x1c8] sm:$0xff]
        %v1339 = vld [vmem:[#allocation8 + $0x1d0] sm:$0xff]
        %v1340 = vld [vmem:[#allocation8 + $0x1d8] sm:$0xff]
        %v1341 = vld [vmem:[#allocation8 + $0x1e0] sm:$0xff]
        %v1342 = vld [vmem:[#allocation8 + $0x1e8] sm:$0xff]
        %v1343 = vld [vmem:[#allocation8 + $0x1f0] sm:$0xff]
        %v1344 = vld [vmem:[#allocation8 + $0x1f8] sm:$0xff]
        %v1345 = vld [vmem:[#allocation8 + $0x200] sm:$0xff]
        %v1346 = vld [vmem:[#allocation8 + $0x208] sm:$0xff]
        %v1347 = vld [vmem:[#allocation8 + $0x210] sm:$0xff]
        %v1348 = vld [vmem:[#allocation8 + $0x218] sm:$0xff]
        %v1349 = vld [vmem:[#allocation8 + $0x220] sm:$0xff]
        %v1350 = vld [vmem:[#allocation8 + $0x228] sm:$0xff]
        %v1351 = vld [vmem:[#allocation8 + $0x230] sm:$0xff]
        %v1352 = vld [vmem:[#allocation8 + $0x238] sm:$0xff]
        %v1353 = vld [vmem:[#allocation8 + $0x240] sm:$0xff]
        %v1354 = vld [vmem:[#allocation8 + $0x248] sm:$0xff]
        %v1355 = vld [vmem:[#allocation8 + $0x250] sm:$0xff]
        %v1356 = vld [vmem:[#allocation8 + $0x258] sm:$0xff]
        %v1357 = vld [vmem:[#allocation8 + $0x260] sm:$0xff]
        %v1358 = vld [vmem:[#allocation8 + $0x268] sm:$0xff]
        %v1359 = vld [vmem:[#allocation8 + $0x270] sm:$0xff]
        %v1360 = vld [vmem:[#allocation8 + $0x278] sm:$0xff]
        %v1361 = vld [vmem:[#allocation8 + $0x280] sm:$0xff]
        %v1362 = vld [vmem:[#allocation8 + $0x288] sm:$0xff]
        %v1363 = vld [vmem:[#allocation8 + $0x290] sm:$0xff]
        %v1364 = vld [vmem:[#allocation8 + $0x298] sm:$0xff]
        %v1365 = vld [vmem:[#allocation8 + $0x2a0] sm:$0xff]
        %v1366 = vld [vmem:[#allocation8 + $0x2a8] sm:$0xff]
        %v1367 = vld [vmem:[#allocation8 + $0x2b0] sm:$0xff]
        %v1368 = vld [vmem:[#allocation8 + $0x2b8] sm:$0xff]
        %v1369 = vld [vmem:[#allocation8 + $0x2c0] sm:$0xff]
        %v1370 = vld [vmem:[#allocation8 + $0x2c8] sm:$0xff]
        %v1371 = vld [vmem:[#allocation8 + $0x2d0] sm:$0xff]
        %v1372 = vld [vmem:[#allocation8 + $0x2d8] sm:$0xff]
        %v1373 = vld [vmem:[#allocation8 + $0x2e0] sm:$0xff]
        %v1374 = vld [vmem:[#allocation8 + $0x2e8] sm:$0xff]
        %v1375 = vld [vmem:[#allocation8 + $0x2f0] sm:$0xff]
        %v1376 = vld [vmem:[#allocation8 + $0x2f8] sm:$0xff]
        %v1377 = vld [vmem:[#allocation8 + $0x300] sm:$0xff]
        %v1378 = vld [vmem:[#allocation8 + $0x308] sm:$0xff]
        %v1379 = vld [vmem:[#allocation8 + $0x310] sm:$0xff]
        %v1380 = vld [vmem:[#allocation8 + $0x318] sm:$0xff]
        %v1381 = vld [vmem:[#allocation8 + $0x320] sm:$0xff]
        %v1382 = vld [vmem:[#allocation8 + $0x328] sm:$0xff]
        %v1383 = vld [vmem:[#allocation8 + $0x330] sm:$0xff]
        %v1384 = vld [vmem:[#allocation8 + $0x338] sm:$0xff]
        %v1385 = vld [vmem:[#allocation8 + $0x340] sm:$0xff]
        %v1386 = vld [vmem:[#allocation8 + $0x348] sm:$0xff]
        %v1387 = vld [vmem:[#allocation8 + $0x350] sm:$0xff]
        %v1388 = vld [vmem:[#allocation8 + $0x358] sm:$0xff]
        %v1389 = vld [vmem:[#allocation8 + $0x360] sm:$0xff]
        %v1390 = vld [vmem:[#allocation8 + $0x368] sm:$0xff]
        %v1391 = vld [vmem:[#allocation8 + $0x370] sm:$0xff]
        %v1392 = vld [vmem:[#allocation8 + $0x378] sm:$0xff]
        %v1393 = vld [vmem:[#allocation8 + $0x380] sm:$0xff]
        %v1394 = vld [vmem:[#allocation8 + $0x388] sm:$0xff]
        %v1395 = vld [vmem:[#allocation8 + $0x390] sm:$0xff]
        %v1396 = vld [vmem:[#allocation8 + $0x398] sm:$0xff]
        %v1397 = vld [vmem:[#allocation8 + $0x3a0] sm:$0xff]
        %v1398 = vld [vmem:[#allocation8 + $0x3a8] sm:$0xff]
        %v1399 = vld [vmem:[#allocation8 + $0x3b0] sm:$0xff]
        %v1400 = vld [vmem:[#allocation8 + $0x3b8] sm:$0xff]
        %v1401 = vld [vmem:[#allocation8 + $0x3c0] sm:$0xff]
        %v1402 = vld [vmem:[#allocation8 + $0x3c8] sm:$0xff]
        %v1403 = vld [vmem:[#allocation8 + $0x3d0] sm:$0xff]
        %v1404 = vld [vmem:[#allocation8 + $0x3d8] sm:$0xff]
        %v1405 = vld [vmem:[#allocation8 + $0x3e0] sm:$0xff]
        %v1406 = vld [vmem:[#allocation8 + $0x3e8] sm:$0xff]
        %v1407 = vld [vmem:[#allocation8 + $0x3f0] sm:$0xff]
        %v1408 = vld [vmem:[#allocation8 + $0x3f8] sm:$0xff]
        %v1537 = vunpack.c.l.b16 %v1281
        %v1538 = vunpack.c.h.b16 %v1281
        %v1539 = vunpack.c.l.b16 %v1282
        %v1540 = vunpack.c.h.b16 %v1282
        %v1541 = vunpack.c.l.b16 %v1283
        %v1542 = vunpack.c.h.b16 %v1283
        %v1543 = vunpack.c.l.b16 %v1284
        %v1544 = vunpack.c.h.b16 %v1284
        %v1545 = vunpack.c.l.b16 %v1285
        %v1546 = vunpack.c.h.b16 %v1285
        %v1547 = vunpack.c.l.b16 %v1286
        %v1548 = vunpack.c.h.b16 %v1286
        %v1549 = vunpack.c.l.b16 %v1287
        %v1550 = vunpack.c.h.b16 %v1287
        %v1551 = vunpack.c.l.b16 %v1288
        %v1552 = vunpack.c.h.b16 %v1288
        %v1553 = vunpack.c.l.b16 %v1289
        %v1554 = vunpack.c.h.b16 %v1289
        %v1555 = vunpack.c.l.b16 %v1290
        %v1556 = vunpack.c.h.b16 %v1290
        %v1557 = vunpack.c.l.b16 %v1291
        %v1558 = vunpack.c.h.b16 %v1291
        %v1559 = vunpack.c.l.b16 %v1292
        %v1560 = vunpack.c.h.b16 %v1292
        %v1561 = vunpack.c.l.b16 %v1293
        %v1562 = vunpack.c.h.b16 %v1293
        %v1563 = vunpack.c.l.b16 %v1294
        %v1564 = vunpack.c.h.b16 %v1294
        %v1565 = vunpack.c.l.b16 %v1295
        %v1566 = vunpack.c.h.b16 %v1295
        %v1567 = vunpack.c.l.b16 %v1296
        %v1568 = vunpack.c.h.b16 %v1296
        %v1569 = vunpack.c.l.b16 %v1297
        %v1570 = vunpack.c.h.b16 %v1297
        %v1571 = vunpack.c.l.b16 %v1298
        %v1572 = vunpack.c.h.b16 %v1298
        %v1573 = vunpack.c.l.b16 %v1299
        %v1574 = vunpack.c.h.b16 %v1299
        %v1575 = vunpack.c.l.b16 %v1300
        %v1576 = vunpack.c.h.b16 %v1300
        %v1577 = vunpack.c.l.b16 %v1301
        %v1578 = vunpack.c.h.b16 %v1301
        %v1579 = vunpack.c.l.b16 %v1302
        %v1580 = vunpack.c.h.b16 %v1302
        %v1581 = vunpack.c.l.b16 %v1303
        %v1582 = vunpack.c.h.b16 %v1303
        %v1583 = vunpack.c.l.b16 %v1304
        %v1584 = vunpack.c.h.b16 %v1304
        %v1585 = vunpack.c.l.b16 %v1305
        %v1586 = vunpack.c.h.b16 %v1305
        %v1587 = vunpack.c.l.b16 %v1306
        %v1588 = vunpack.c.h.b16 %v1306
        %v1589 = vunpack.c.l.b16 %v1307
        %v1590 = vunpack.c.h.b16 %v1307
        %v1591 = vunpack.c.l.b16 %v1308
        %v1592 = vunpack.c.h.b16 %v1308
        %v1593 = vunpack.c.l.b16 %v1309
        %v1594 = vunpack.c.h.b16 %v1309
        %v1595 = vunpack.c.l.b16 %v1310
        %v1596 = vunpack.c.h.b16 %v1310
        %v1597 = vunpack.c.l.b16 %v1311
        %v1598 = vunpack.c.h.b16 %v1311
        %v1599 = vunpack.c.l.b16 %v1312
        %v1600 = vunpack.c.h.b16 %v1312
        %v1601 = vunpack.c.l.b16 %v1313
        %v1602 = vunpack.c.h.b16 %v1313
        %v1603 = vunpack.c.l.b16 %v1314
        %v1604 = vunpack.c.h.b16 %v1314
        %v1605 = vunpack.c.l.b16 %v1315
        %v1606 = vunpack.c.h.b16 %v1315
        %v1607 = vunpack.c.l.b16 %v1316
        %v1608 = vunpack.c.h.b16 %v1316
        %v1609 = vunpack.c.l.b16 %v1317
        %v1610 = vunpack.c.h.b16 %v1317
        %v1611 = vunpack.c.l.b16 %v1318
        %v1612 = vunpack.c.h.b16 %v1318
        %v1613 = vunpack.c.l.b16 %v1319
        %v1614 = vunpack.c.h.b16 %v1319
        %v1615 = vunpack.c.l.b16 %v1320
        %v1616 = vunpack.c.h.b16 %v1320
        %v1617 = vunpack.c.l.b16 %v1321
        %v1618 = vunpack.c.h.b16 %v1321
        %v1619 = vunpack.c.l.b16 %v1322
        %v1620 = vunpack.c.h.b16 %v1322
        %v1621 = vunpack.c.l.b16 %v1323
        %v1622 = vunpack.c.h.b16 %v1323
        %v1623 = vunpack.c.l.b16 %v1324
        %v1624 = vunpack.c.h.b16 %v1324
        %v1625 = vunpack.c.l.b16 %v1325
        %v1626 = vunpack.c.h.b16 %v1325
        %v1627 = vunpack.c.l.b16 %v1326
        %v1628 = vunpack.c.h.b16 %v1326
        %v1629 = vunpack.c.l.b16 %v1327
        %v1630 = vunpack.c.h.b16 %v1327
        %v1631 = vunpack.c.l.b16 %v1328
        %v1632 = vunpack.c.h.b16 %v1328
        %v1633 = vunpack.c.l.b16 %v1329
        %v1634 = vunpack.c.h.b16 %v1329
        %v1635 = vunpack.c.l.b16 %v1330
        %v1636 = vunpack.c.h.b16 %v1330
        %v1637 = vunpack.c.l.b16 %v1331
        %v1638 = vunpack.c.h.b16 %v1331
        %v1639 = vunpack.c.l.b16 %v1332
        %v1640 = vunpack.c.h.b16 %v1332
        %v1641 = vunpack.c.l.b16 %v1333
        %v1642 = vunpack.c.h.b16 %v1333
        %v1643 = vunpack.c.l.b16 %v1334
        %v1644 = vunpack.c.h.b16 %v1334
        %v1645 = vunpack.c.l.b16 %v1335
        %v1646 = vunpack.c.h.b16 %v1335
        %v1647 = vunpack.c.l.b16 %v1336
        %v1648 = vunpack.c.h.b16 %v1336
        %v1649 = vunpack.c.l.b16 %v1337
        %v1650 = vunpack.c.h.b16 %v1337
        %v1651 = vunpack.c.l.b16 %v1338
        %v1652 = vunpack.c.h.b16 %v1338
        %v1653 = vunpack.c.l.b16 %v1339
        %v1654 = vunpack.c.h.b16 %v1339
        %v1655 = vunpack.c.l.b16 %v1340
        %v1656 = vunpack.c.h.b16 %v1340
        %v1657 = vunpack.c.l.b16 %v1341
        %v1658 = vunpack.c.h.b16 %v1341
        %v1659 = vunpack.c.l.b16 %v1342
        %v1660 = vunpack.c.h.b16 %v1342
        %v1661 = vunpack.c.l.b16 %v1343
        %v1662 = vunpack.c.h.b16 %v1343
        %v1663 = vunpack.c.l.b16 %v1344
        %v1664 = vunpack.c.h.b16 %v1344
        %v1665 = vunpack.c.l.b16 %v1345
        %v1666 = vunpack.c.h.b16 %v1345
        %v1667 = vunpack.c.l.b16 %v1346
        %v1668 = vunpack.c.h.b16 %v1346
        %v1669 = vunpack.c.l.b16 %v1347
        %v1670 = vunpack.c.h.b16 %v1347
        %v1671 = vunpack.c.l.b16 %v1348
        %v1672 = vunpack.c.h.b16 %v1348
        %v1673 = vunpack.c.l.b16 %v1349
        %v1674 = vunpack.c.h.b16 %v1349
        %v1675 = vunpack.c.l.b16 %v1350
        %v1676 = vunpack.c.h.b16 %v1350
        %v1677 = vunpack.c.l.b16 %v1351
        %v1678 = vunpack.c.h.b16 %v1351
        %v1679 = vunpack.c.l.b16 %v1352
        %v1680 = vunpack.c.h.b16 %v1352
        %v1681 = vunpack.c.l.b16 %v1353
        %v1682 = vunpack.c.h.b16 %v1353
        %v1683 = vunpack.c.l.b16 %v1354
        %v1684 = vunpack.c.h.b16 %v1354
        %v1685 = vunpack.c.l.b16 %v1355
        %v1686 = vunpack.c.h.b16 %v1355
        %v1687 = vunpack.c.l.b16 %v1356
        %v1688 = vunpack.c.h.b16 %v1356
        %v1689 = vunpack.c.l.b16 %v1357
        %v1690 = vunpack.c.h.b16 %v1357
        %v1691 = vunpack.c.l.b16 %v1358
        %v1692 = vunpack.c.h.b16 %v1358
        %v1693 = vunpack.c.l.b16 %v1359
        %v1694 = vunpack.c.h.b16 %v1359
        %v1695 = vunpack.c.l.b16 %v1360
        %v1696 = vunpack.c.h.b16 %v1360
        %v1697 = vunpack.c.l.b16 %v1361
        %v1698 = vunpack.c.h.b16 %v1361
        %v1699 = vunpack.c.l.b16 %v1362
        %v1700 = vunpack.c.h.b16 %v1362
        %v1701 = vunpack.c.l.b16 %v1363
        %v1702 = vunpack.c.h.b16 %v1363
        %v1703 = vunpack.c.l.b16 %v1364
        %v1704 = vunpack.c.h.b16 %v1364
        %v1705 = vunpack.c.l.b16 %v1365
        %v1706 = vunpack.c.h.b16 %v1365
        %v1707 = vunpack.c.l.b16 %v1366
        %v1708 = vunpack.c.h.b16 %v1366
        %v1709 = vunpack.c.l.b16 %v1367
        %v1710 = vunpack.c.h.b16 %v1367
        %v1711 = vunpack.c.l.b16 %v1368
        %v1712 = vunpack.c.h.b16 %v1368
        %v1713 = vunpack.c.l.b16 %v1369
        %v1714 = vunpack.c.h.b16 %v1369
        %v1715 = vunpack.c.l.b16 %v1370
        %v1716 = vunpack.c.h.b16 %v1370
        %v1717 = vunpack.c.l.b16 %v1371
        %v1718 = vunpack.c.h.b16 %v1371
        %v1719 = vunpack.c.l.b16 %v1372
        %v1720 = vunpack.c.h.b16 %v1372
        %v1721 = vunpack.c.l.b16 %v1373
        %v1722 = vunpack.c.h.b16 %v1373
        %v1723 = vunpack.c.l.b16 %v1374
        %v1724 = vunpack.c.h.b16 %v1374
        %v1725 = vunpack.c.l.b16 %v1375
        %v1726 = vunpack.c.h.b16 %v1375
        %v1727 = vunpack.c.l.b16 %v1376
        %v1728 = vunpack.c.h.b16 %v1376
        %v1729 = vunpack.c.l.b16 %v1377
        %v1730 = vunpack.c.h.b16 %v1377
        %v1731 = vunpack.c.l.b16 %v1378
        %v1732 = vunpack.c.h.b16 %v1378
        %v1733 = vunpack.c.l.b16 %v1379
        %v1734 = vunpack.c.h.b16 %v1379
        %v1735 = vunpack.c.l.b16 %v1380
        %v1736 = vunpack.c.h.b16 %v1380
        %v1737 = vunpack.c.l.b16 %v1381
        %v1738 = vunpack.c.h.b16 %v1381
        %v1739 = vunpack.c.l.b16 %v1382
        %v1740 = vunpack.c.h.b16 %v1382
        %v1741 = vunpack.c.l.b16 %v1383
        %v1742 = vunpack.c.h.b16 %v1383
        %v1743 = vunpack.c.l.b16 %v1384
        %v1744 = vunpack.c.h.b16 %v1384
        %v1745 = vunpack.c.l.b16 %v1385
        %v1746 = vunpack.c.h.b16 %v1385
        %v1747 = vunpack.c.l.b16 %v1386
        %v1748 = vunpack.c.h.b16 %v1386
        %v1749 = vunpack.c.l.b16 %v1387
        %v1750 = vunpack.c.h.b16 %v1387
        %v1751 = vunpack.c.l.b16 %v1388
        %v1752 = vunpack.c.h.b16 %v1388
        %v1753 = vunpack.c.l.b16 %v1389
        %v1754 = vunpack.c.h.b16 %v1389
        %v1755 = vunpack.c.l.b16 %v1390
        %v1756 = vunpack.c.h.b16 %v1390
        %v1757 = vunpack.c.l.b16 %v1391
        %v1758 = vunpack.c.h.b16 %v1391
        %v1759 = vunpack.c.l.b16 %v1392
        %v1760 = vunpack.c.h.b16 %v1392
        %v1761 = vunpack.c.l.b16 %v1393
        %v1762 = vunpack.c.h.b16 %v1393
        %v1763 = vunpack.c.l.b16 %v1394
        %v1764 = vunpack.c.h.b16 %v1394
        %v1765 = vunpack.c.l.b16 %v1395
        %v1766 = vunpack.c.h.b16 %v1395
        %v1767 = vunpack.c.l.b16 %v1396
        %v1768 = vunpack.c.h.b16 %v1396
        %v1769 = vunpack.c.l.b16 %v1397
        %v1770 = vunpack.c.h.b16 %v1397
        %v1771 = vunpack.c.l.b16 %v1398
        %v1772 = vunpack.c.h.b16 %v1398
        %v1773 = vunpack.c.l.b16 %v1399
        %v1774 = vunpack.c.h.b16 %v1399
        %v1775 = vunpack.c.l.b16 %v1400
        %v1776 = vunpack.c.h.b16 %v1400
        %v1777 = vunpack.c.l.b16 %v1401
        %v1778 = vunpack.c.h.b16 %v1401
        %v1779 = vunpack.c.l.b16 %v1402
        %v1780 = vunpack.c.h.b16 %v1402
        %v1781 = vunpack.c.l.b16 %v1403
        %v1782 = vunpack.c.h.b16 %v1403
        %v1783 = vunpack.c.l.b16 %v1404
        %v1784 = vunpack.c.h.b16 %v1404
        %v1785 = vunpack.c.l.b16 %v1405
        %v1786 = vunpack.c.h.b16 %v1405
        %v1787 = vunpack.c.l.b16 %v1406
        %v1788 = vunpack.c.h.b16 %v1406
        %v1789 = vunpack.c.l.b16 %v1407
        %v1790 = vunpack.c.h.b16 %v1407
        %v1791 = vunpack.c.l.b16 %v1408
        %v1792 = vunpack.c.h.b16 %v1408
        %v1793 = vpack.c.b16 %v1545, %v1537
        %v1794 = vpack.c.b16 %v1546, %v1538
        %v1795 = vpack.c.b16 %v1547, %v1539
        %v1796 = vpack.c.b16 %v1548, %v1540
        %v1797 = vpack.c.b16 %v1549, %v1541
        %v1798 = vpack.c.b16 %v1550, %v1542
        %v1799 = vpack.c.b16 %v1551, %v1543
        %v1800 = vpack.c.b16 %v1552, %v1544
        %v1801 = vpack.c.b16 %v1561, %v1553
        %v1802 = vpack.c.b16 %v1562, %v1554
        %v1803 = vpack.c.b16 %v1563, %v1555
        %v1804 = vpack.c.b16 %v1564, %v1556
        %v1805 = vpack.c.b16 %v1565, %v1557
        %v1806 = vpack.c.b16 %v1566, %v1558
        %v1807 = vpack.c.b16 %v1567, %v1559
        %v1808 = vpack.c.b16 %v1568, %v1560
        %v1809 = vpack.c.b16 %v1577, %v1569
        %v1810 = vpack.c.b16 %v1578, %v1570
        %v1811 = vpack.c.b16 %v1579, %v1571
        %v1812 = vpack.c.b16 %v1580, %v1572
        %v1813 = vpack.c.b16 %v1581, %v1573
        %v1814 = vpack.c.b16 %v1582, %v1574
        %v1815 = vpack.c.b16 %v1583, %v1575
        %v1816 = vpack.c.b16 %v1584, %v1576
        %v1817 = vpack.c.b16 %v1593, %v1585
        %v1818 = vpack.c.b16 %v1594, %v1586
        %v1819 = vpack.c.b16 %v1595, %v1587
        %v1820 = vpack.c.b16 %v1596, %v1588
        %v1821 = vpack.c.b16 %v1597, %v1589
        %v1822 = vpack.c.b16 %v1598, %v1590
        %v1823 = vpack.c.b16 %v1599, %v1591
        %v1824 = vpack.c.b16 %v1600, %v1592
        %v1825 = vpack.c.b16 %v1609, %v1601
        %v1826 = vpack.c.b16 %v1610, %v1602
        %v1827 = vpack.c.b16 %v1611, %v1603
        %v1828 = vpack.c.b16 %v1612, %v1604
        %v1829 = vpack.c.b16 %v1613, %v1605
        %v1830 = vpack.c.b16 %v1614, %v1606
        %v1831 = vpack.c.b16 %v1615, %v1607
        %v1832 = vpack.c.b16 %v1616, %v1608
        %v1833 = vpack.c.b16 %v1625, %v1617
        %v1834 = vpack.c.b16 %v1626, %v1618
        %v1835 = vpack.c.b16 %v1627, %v1619
        %v1836 = vpack.c.b16 %v1628, %v1620
        %v1837 = vpack.c.b16 %v1629, %v1621
        %v1838 = vpack.c.b16 %v1630, %v1622
        %v1839 = vpack.c.b16 %v1631, %v1623
        %v1840 = vpack.c.b16 %v1632, %v1624
        %v1841 = vpack.c.b16 %v1641, %v1633
        %v1842 = vpack.c.b16 %v1642, %v1634
        %v1843 = vpack.c.b16 %v1643, %v1635
        %v1844 = vpack.c.b16 %v1644, %v1636
        %v1845 = vpack.c.b16 %v1645, %v1637
        %v1846 = vpack.c.b16 %v1646, %v1638
        %v1847 = vpack.c.b16 %v1647, %v1639
        %v1848 = vpack.c.b16 %v1648, %v1640
        %v1849 = vpack.c.b16 %v1657, %v1649
        %v1850 = vpack.c.b16 %v1658, %v1650
        %v1851 = vpack.c.b16 %v1659, %v1651
        %v1852 = vpack.c.b16 %v1660, %v1652
        %v1853 = vpack.c.b16 %v1661, %v1653
        %v1854 = vpack.c.b16 %v1662, %v1654
        %v1855 = vpack.c.b16 %v1663, %v1655
        %v1856 = vpack.c.b16 %v1664, %v1656
        %v1857 = vpack.c.b16 %v1673, %v1665
        %v1858 = vpack.c.b16 %v1674, %v1666
        %v1859 = vpack.c.b16 %v1675, %v1667
        %v1860 = vpack.c.b16 %v1676, %v1668
        %v1861 = vpack.c.b16 %v1677, %v1669
        %v1862 = vpack.c.b16 %v1678, %v1670
        %v1863 = vpack.c.b16 %v1679, %v1671
        %v1864 = vpack.c.b16 %v1680, %v1672
        %v1865 = vpack.c.b16 %v1689, %v1681
        %v1866 = vpack.c.b16 %v1690, %v1682
        %v1867 = vpack.c.b16 %v1691, %v1683
        %v1868 = vpack.c.b16 %v1692, %v1684
        %v1869 = vpack.c.b16 %v1693, %v1685
        %v1870 = vpack.c.b16 %v1694, %v1686
        %v1871 = vpack.c.b16 %v1695, %v1687
        %v1872 = vpack.c.b16 %v1696, %v1688
        %v1873 = vpack.c.b16 %v1705, %v1697
        %v1874 = vpack.c.b16 %v1706, %v1698
        %v1875 = vpack.c.b16 %v1707, %v1699
        %v1876 = vpack.c.b16 %v1708, %v1700
        %v1877 = vpack.c.b16 %v1709, %v1701
        %v1878 = vpack.c.b16 %v1710, %v1702
        %v1879 = vpack.c.b16 %v1711, %v1703
        %v1880 = vpack.c.b16 %v1712, %v1704
        %v1881 = vpack.c.b16 %v1721, %v1713
        %v1882 = vpack.c.b16 %v1722, %v1714
        %v1883 = vpack.c.b16 %v1723, %v1715
        %v1884 = vpack.c.b16 %v1724, %v1716
        %v1885 = vpack.c.b16 %v1725, %v1717
        %v1886 = vpack.c.b16 %v1726, %v1718
        %v1887 = vpack.c.b16 %v1727, %v1719
        %v1888 = vpack.c.b16 %v1728, %v1720
        %v1889 = vpack.c.b16 %v1737, %v1729
        %v1890 = vpack.c.b16 %v1738, %v1730
        %v1891 = vpack.c.b16 %v1739, %v1731
        %v1892 = vpack.c.b16 %v1740, %v1732
        %v1893 = vpack.c.b16 %v1741, %v1733
        %v1894 = vpack.c.b16 %v1742, %v1734
        %v1895 = vpack.c.b16 %v1743, %v1735
        %v1896 = vpack.c.b16 %v1744, %v1736
        %v1897 = vpack.c.b16 %v1753, %v1745
        %v1898 = vpack.c.b16 %v1754, %v1746
        %v1899 = vpack.c.b16 %v1755, %v1747
        %v1900 = vpack.c.b16 %v1756, %v1748
        %v1901 = vpack.c.b16 %v1757, %v1749
        %v1902 = vpack.c.b16 %v1758, %v1750
        %v1903 = vpack.c.b16 %v1759, %v1751
        %v1904 = vpack.c.b16 %v1760, %v1752
        %v1905 = vpack.c.b16 %v1769, %v1761
        %v1906 = vpack.c.b16 %v1770, %v1762
        %v1907 = vpack.c.b16 %v1771, %v1763
        %v1908 = vpack.c.b16 %v1772, %v1764
        %v1909 = vpack.c.b16 %v1773, %v1765
        %v1910 = vpack.c.b16 %v1774, %v1766
        %v1911 = vpack.c.b16 %v1775, %v1767
        %v1912 = vpack.c.b16 %v1776, %v1768
        %v1913 = vpack.c.b16 %v1785, %v1777
        %v1914 = vpack.c.b16 %v1786, %v1778
        %v1915 = vpack.c.b16 %v1787, %v1779
        %v1916 = vpack.c.b16 %v1788, %v1780
        %v1917 = vpack.c.b16 %v1789, %v1781
        %v1918 = vpack.c.b16 %v1790, %v1782
        %v1919 = vpack.c.b16 %v1791, %v1783
        %v1920 = vpack.c.b16 %v1792, %v1784
        %2049 = vmatprep.subr.bf16.mxu0 %v1794
        %2050 = vmatpush1.bf16.msra.mxu0 %v1793
        %2051 = vmatprep.subr.bf16.mxu0 %v1802
        %2052 = vmatpush1.bf16.msra.mxu0 %v1801
        %2053 = vmatprep.subr.bf16.mxu0 %v1810
        %2054 = vmatpush1.bf16.msra.mxu0 %v1809
        %2055 = vmatprep.subr.bf16.mxu0 %v1818
        %2056 = vmatpush1.bf16.msra.mxu0 %v1817
        %2057 = vmatprep.subr.bf16.mxu0 %v1826
        %2058 = vmatpush1.bf16.msra.mxu0 %v1825
        %2059 = vmatprep.subr.bf16.mxu0 %v1834
        %2060 = vmatpush1.bf16.msra.mxu0 %v1833
        %2061 = vmatprep.subr.bf16.mxu0 %v1842
        %2062 = vmatpush1.bf16.msra.mxu0 %v1841
        %2063 = vmatprep.subr.bf16.mxu0 %v1850
        %2064 = vmatpush1.bf16.msra.mxu0 %v1849
        %2065 = vmatprep.subr.bf16.mxu0 %v1858
        %2066 = vmatpush1.bf16.msra.mxu0 %v1857
        %2067 = vmatprep.subr.bf16.mxu0 %v1866
        %2068 = vmatpush1.bf16.msra.mxu0 %v1865
        %2069 = vmatprep.subr.bf16.mxu0 %v1874
        %2070 = vmatpush1.bf16.msra.mxu0 %v1873
        %2071 = vmatprep.subr.bf16.mxu0 %v1882
        %2072 = vmatpush1.bf16.msra.mxu0 %v1881
        %2073 = vmatprep.subr.bf16.mxu0 %v1890
        %2074 = vmatpush1.bf16.msra.mxu0 %v1889
        %2075 = vmatprep.subr.bf16.mxu0 %v1898
        %2076 = vmatpush1.bf16.msra.mxu0 %v1897
        %2077 = vmatprep.subr.bf16.mxu0 %v1906
        %2078 = vmatpush1.bf16.msra.mxu0 %v1905
        %2079 = vmatprep.subr.bf16.mxu0 %v1914
        %2080 = vmatpush1.bf16.msra.mxu0 %v1913
        %2081 = vmatprep.mubr.bf16.mxu0 %v1280
        %2082 = vmatmul.mubr.bf16.gmra.mrb[0].mxu0 %v1279
        %v2083 = vpop.f32.mrb[0].mxu0
        %v2084 = vadd.f32 0.0, %v2083
        %v2085 = vpop.f32.mrb[0].mxu0
        %v2086 = vadd.f32 0.0, %v2085
        %v2087 = vpop.f32.mrb[0].mxu0
        %v2088 = vpop.f32.mrb[0].mxu0
        %2089 = vdwg.mxu0
        %2090 = vmatprep.subr.bf16.mxu0 %v1796
        %2091 = vmatpush1.bf16.msra.mxu0 %v1795
        %2092 = vmatprep.subr.bf16.mxu0 %v1804
        %2093 = vmatpush1.bf16.msra.mxu0 %v1803
        %2094 = vmatprep.subr.bf16.mxu0 %v1812
        %2095 = vmatpush1.bf16.msra.mxu0 %v1811
        %2096 = vmatprep.subr.bf16.mxu0 %v1820
        %2097 = vmatpush1.bf16.msra.mxu0 %v1819
        %2098 = vmatprep.subr.bf16.mxu0 %v1828
        %2099 = vmatpush1.bf16.msra.mxu0 %v1827
        %2100 = vmatprep.subr.bf16.mxu0 %v1836
        %2101 = vmatpush1.bf16.msra.mxu0 %v1835
        %2102 = vmatprep.subr.bf16.mxu0 %v1844
        %2103 = vmatpush1.bf16.msra.mxu0 %v1843
        %2104 = vmatprep.subr.bf16.mxu0 %v1852
        %2105 = vmatpush1.bf16.msra.mxu0 %v1851
        %2106 = vmatprep.subr.bf16.mxu0 %v1860
        %2107 = vmatpush1.bf16.msra.mxu0 %v1859
        %2108 = vmatprep.subr.bf16.mxu0 %v1868
        %2109 = vmatpush1.bf16.msra.mxu0 %v1867
        %2110 = vmatprep.subr.bf16.mxu0 %v1876
        %2111 = vmatpush1.bf16.msra.mxu0 %v1875
        %2112 = vmatprep.subr.bf16.mxu0 %v1884
        %2113 = vmatpush1.bf16.msra.mxu0 %v1883
        %2114 = vmatprep.subr.bf16.mxu0 %v1892
        %2115 = vmatpush1.bf16.msra.mxu0 %v1891
        %2116 = vmatprep.subr.bf16.mxu0 %v1900
        %2117 = vmatpush1.bf16.msra.mxu0 %v1899
        %2118 = vmatprep.subr.bf16.mxu0 %v1908
        %2119 = vmatpush1.bf16.msra.mxu0 %v1907
        %2120 = vmatprep.subr.bf16.mxu0 %v1916
        %2121 = vmatpush1.bf16.msra.mxu0 %v1915
        %2122 = vmatprep.mubr.bf16.mxu0 %v1280
        %2123 = vmatmul.mubr.bf16.gmra.mrb[0].mxu0 %v1279
        %v2124 = vpop.f32.mrb[0].mxu0
        %v2125 = vadd.f32 0.0, %v2124
        %v2126 = vpop.f32.mrb[0].mxu0
        %v2127 = vadd.f32 0.0, %v2126
        %v2128 = vpop.f32.mrb[0].mxu0
        %v2129 = vpop.f32.mrb[0].mxu0
        %2130 = vdwg.mxu0
        %2131 = vmatprep.subr.bf16.mxu0 %v1798
        %2132 = vmatpush1.bf16.msra.mxu0 %v1797
        %2133 = vmatprep.subr.bf16.mxu0 %v1806
        %2134 = vmatpush1.bf16.msra.mxu0 %v1805
        %2135 = vmatprep.subr.bf16.mxu0 %v1814
        %2136 = vmatpush1.bf16.msra.mxu0 %v1813
        %2137 = vmatprep.subr.bf16.mxu0 %v1822
        %2138 = vmatpush1.bf16.msra.mxu0 %v1821
        %2139 = vmatprep.subr.bf16.mxu0 %v1830
        %2140 = vmatpush1.bf16.msra.mxu0 %v1829
        %2141 = vmatprep.subr.bf16.mxu0 %v1838
        %2142 = vmatpush1.bf16.msra.mxu0 %v1837
        %2143 = vmatprep.subr.bf16.mxu0 %v1846
        %2144 = vmatpush1.bf16.msra.mxu0 %v1845
        %2145 = vmatprep.subr.bf16.mxu0 %v1854
        %2146 = vmatpush1.bf16.msra.mxu0 %v1853
        %2147 = vmatprep.subr.bf16.mxu0 %v1862
        %2148 = vmatpush1.bf16.msra.mxu0 %v1861
        %2149 = vmatprep.subr.bf16.mxu0 %v1870
        %2150 = vmatpush1.bf16.msra.mxu0 %v1869
        %2151 = vmatprep.subr.bf16.mxu0 %v1878
        %2152 = vmatpush1.bf16.msra.mxu0 %v1877
        %2153 = vmatprep.subr.bf16.mxu0 %v1886
        %2154 = vmatpush1.bf16.msra.mxu0 %v1885
        %2155 = vmatprep.subr.bf16.mxu0 %v1894
        %2156 = vmatpush1.bf16.msra.mxu0 %v1893
        %2157 = vmatprep.subr.bf16.mxu0 %v1902
        %2158 = vmatpush1.bf16.msra.mxu0 %v1901
        %2159 = vmatprep.subr.bf16.mxu0 %v1910
        %2160 = vmatpush1.bf16.msra.mxu0 %v1909
        %2161 = vmatprep.subr.bf16.mxu0 %v1918
        %2162 = vmatpush1.bf16.msra.mxu0 %v1917
        %2163 = vmatprep.mubr.bf16.mxu0 %v1280
        %2164 = vmatmul.mubr.bf16.gmra.mrb[0].mxu0 %v1279
        %v2165 = vpop.f32.mrb[0].mxu0
        %v2166 = vadd.f32 0.0, %v2165
        %v2167 = vpop.f32.mrb[0].mxu0
        %v2168 = vadd.f32 0.0, %v2167
        %v2169 = vpop.f32.mrb[0].mxu0
        %v2170 = vpop.f32.mrb[0].mxu0
        %2171 = vdwg.mxu0
        %2172 = vmatprep.subr.bf16.mxu0 %v1800
        %2173 = vmatpush1.bf16.msra.mxu0 %v1799
        %2174 = vmatprep.subr.bf16.mxu0 %v1808
        %2175 = vmatpush1.bf16.msra.mxu0 %v1807
        %2176 = vmatprep.subr.bf16.mxu0 %v1816
        %2177 = vmatpush1.bf16.msra.mxu0 %v1815
        %2178 = vmatprep.subr.bf16.mxu0 %v1824
        %2179 = vmatpush1.bf16.msra.mxu0 %v1823
        %2180 = vmatprep.subr.bf16.mxu0 %v1832
        %2181 = vmatpush1.bf16.msra.mxu0 %v1831
        %2182 = vmatprep.subr.bf16.mxu0 %v1840
        %2183 = vmatpush1.bf16.msra.mxu0 %v1839
        %2184 = vmatprep.subr.bf16.mxu0 %v1848
        %2185 = vmatpush1.bf16.msra.mxu0 %v1847
        %2186 = vmatprep.subr.bf16.mxu0 %v1856
        %2187 = vmatpush1.bf16.msra.mxu0 %v1855
        %2188 = vmatprep.subr.bf16.mxu0 %v1864
        %2189 = vmatpush1.bf16.msra.mxu0 %v1863
        %2190 = vmatprep.subr.bf16.mxu0 %v1872
        %2191 = vmatpush1.bf16.msra.mxu0 %v1871
        %2192 = vmatprep.subr.bf16.mxu0 %v1880
        %2193 = vmatpush1.bf16.msra.mxu0 %v1879
        %2194 = vmatprep.subr.bf16.mxu0 %v1888
        %2195 = vmatpush1.bf16.msra.mxu0 %v1887
        %2196 = vmatprep.subr.bf16.mxu0 %v1896
        %2197 = vmatpush1.bf16.msra.mxu0 %v1895
        %2198 = vmatprep.subr.bf16.mxu0 %v1904
        %2199 = vmatpush1.bf16.msra.mxu0 %v1903
        %2200 = vmatprep.subr.bf16.mxu0 %v1912
        %2201 = vmatpush1.bf16.msra.mxu0 %v1911
        %2202 = vmatprep.subr.bf16.mxu0 %v1920
        %2203 = vmatpush1.bf16.msra.mxu0 %v1919
        %2204 = vmatprep.mubr.bf16.mxu0 %v1280
        %2205 = vmatmul.mubr.bf16.gmra.mrb[0].mxu0 %v1279
        %v2206 = vpop.f32.mrb[0].mxu0
        %v2207 = vadd.f32 0.0, %v2206
        %v2208 = vpop.f32.mrb[0].mxu0
        %v2209 = vadd.f32 0.0, %v2208
        %v2210 = vpop.f32.mrb[0].mxu0
        %v2211 = vpop.f32.mrb[0].mxu0
        %2212 = vdwg.mxu0
        %v2213 = vadd.f32 %v2166, %v981
        %v2214 = vadd.f32 %v2168, %v985
        %v2215 = vadd.f32 %v2207, %v989
        %v2216 = vadd.f32 %v2209, %v993
        %v2217 = vmul.f32 %v2213, 0.5
        %v2218 = vtanh.pop %v2217
        %v2219 = vmul.f32 %v2218, 0.5
        %v2220 = vadd.f32 %v2219, 0.5
        %v2221 = vmul.f32 %v2214, 0.5
        %v2222 = vtanh.pop %v2221
        %v2223 = vmul.f32 %v2222, 0.5
        %v2224 = vadd.f32 %v2223, 0.5
        %v2225 = vtanh.pop %v2215
        %v2226 = vmul.f32 %v2216, 0.5
        %v2227 = vtanh.pop %v2226
        %v2228 = vmul.f32 %v2227, 0.5
        %v2229 = vadd.f32 %v2228, 0.5
        %v2230 = vmul.f32 %v2224, 0.0
        %v2231 = vmul.f32 %v2220, %v2225
        %v2232 = vadd.f32 %v2230, %v2231
        %v2233 = vtanh.pop %v2232
        %v2234 = vmul.f32 %v2229, %v2233
        %s2235 = scalar_lea.vmem [#allocation2], 1
        %v2236 = vld [vmem:[%s2235] ss:$8 sm:$0xf]
        %s2237 = scalar_lea.vmem [#allocation2], 33
        %v2238 = vld [vmem:[%s2237] ss:$8 sm:$0xf]
        %s2239 = scalar_lea.vmem [#allocation2], 65
        %v2240 = vld [vmem:[%s2239] ss:$8 sm:$0xf]
        %s2241 = scalar_lea.vmem [#allocation2], 97
        %v2242 = vld [vmem:[%s2241] ss:$8 sm:$0xf]
        %s2243 = scalar_lea.vmem [#allocation2], 129
        %v2244 = vld [vmem:[%s2243] ss:$8 sm:$0xf]
        %s2245 = scalar_lea.vmem [#allocation2], 161
        %v2246 = vld [vmem:[%s2245] ss:$8 sm:$0xf]
        %s2247 = scalar_lea.vmem [#allocation2], 193
        %v2248 = vld [vmem:[%s2247] ss:$8 sm:$0xf]
        %s2249 = scalar_lea.vmem [#allocation2], 225
        %v2250 = vld [vmem:[%s2249] ss:$8 sm:$0xf]
        %v2255 = vcombine.low %v2084, %v2086
        %v2256 = vcombine.high %v2084, %v2086
        %v2257 = vcombine.low %v2125, %v2127
        %v2258 = vcombine.high %v2125, %v2127
        %v2260 = vunpack.c.l.s4 1966171168
        %v2261 = vunpack.c.0.s8 %v2260
        %v2262 = vlaneseq
        %v2263 = vshrl.u32 %v2262, 7
        %v2264 = vsub.s32 %v2261, %v2263
        %v2265 = vrot.slane %v2255, %v2264
        %v2267 = vunpack.c.l.s4 1966171168
        %v2268 = vunpack.c.0.s8 %v2267
        %v2269 = vlaneseq
        %v2270 = vshrl.u32 %v2269, 7
        %v2271 = vsub.s32 %v2268, %v2270
        %v2272 = vrot.slane %v2256, %v2271
        %v2274 = vunpack.c.l.s4 1966171168
        %v2275 = vunpack.c.0.s8 %v2274
        %v2276 = vlaneseq
        %v2277 = vshrl.u32 %v2276, 7
        %v2278 = vsub.s32 %v2275, %v2277
        %v2279 = vrot.slane %v2257, %v2278
        %v2281 = vunpack.c.l.s4 1966171168
        %v2282 = vunpack.c.0.s8 %v2281
        %v2283 = vlaneseq
        %v2284 = vshrl.u32 %v2283, 7
        %v2285 = vsub.s32 %v2282, %v2284
        %v2286 = vrot.slane %v2258, %v2285
        %v2287 = vcombine.low %v2265, %v2279
        %v2288 = vcombine.high %v2265, %v2279
        %v2289 = vcombine.low %v2272, %v2286
        %v2290 = vcombine.high %v2272, %v2286
        %v2292 = vunpack.c.l.s4 1966171168
        %v2293 = vunpack.c.0.s8 %v2292
        %v2294 = vlaneseq
        %v2295 = vshrl.u32 %v2294, 7
        %v2296 = vsub.s32 %v2293, %v2295
        %v2297 = vrot.slane %v2287, %v2296
        %v2299 = vunpack.c.l.s4 1966171168
        %v2300 = vunpack.c.0.s8 %v2299
        %v2301 = vlaneseq
        %v2302 = vshrl.u32 %v2301, 7
        %v2303 = vsub.s32 %v2300, %v2302
        %v2304 = vrot.slane %v2289, %v2303
        %v2306 = vunpack.c.l.s4 1966171168
        %v2307 = vunpack.c.0.s8 %v2306
        %v2308 = vlaneseq
        %v2309 = vshrl.u32 %v2308, 7
        %v2310 = vsub.s32 %v2307, %v2309
        %v2311 = vrot.slane %v2288, %v2310
        %v2313 = vunpack.c.l.s4 1966171168
        %v2314 = vunpack.c.0.s8 %v2313
        %v2315 = vlaneseq
        %v2316 = vshrl.u32 %v2315, 7
        %v2317 = vsub.s32 %v2314, %v2316
        %v2318 = vrot.slane %v2290, %v2317
        %v2319 = vcombine.high %v2297, %v2297
        %v2320 = vcombine.high %v2304, %v2304
        %v2321 = vcombine.high %v2311, %v2311
        %v2322 = vcombine.high %v2318, %v2318
        %v2331 = vadd.f32 %v2236, %v2297
        %v2332 = vadd.f32 %v2238, %v2311
        %v2333 = vadd.f32 %v2240, %v2319
        %v2334 = vadd.f32 %v2242, %v2321
        %v2335 = vadd.f32 %v2244, %v2304
        %v2336 = vadd.f32 %v2246, %v2318
        %v2337 = vadd.f32 %v2248, %v2320
        %v2338 = vadd.f32 %v2250, %v2322
        %v2339 = vmul.f32 %v2331, 0.5
        %v2340 = vmul.f32 %v2332, 0.5
        %v2341 = vmul.f32 %v2333, 0.5
        %v2342 = vmul.f32 %v2334, 0.5
        %v2343 = vmul.f32 %v2335, 0.5
        %v2344 = vmul.f32 %v2336, 0.5
        %v2345 = vmul.f32 %v2337, 0.5
        %v2346 = vmul.f32 %v2338, 0.5
        %v2347 = vtanh.pop %v2339
        %v2348 = vtanh.pop %v2340
        %v2349 = vtanh.pop %v2341
        %v2350 = vtanh.pop %v2342
        %v2351 = vtanh.pop %v2343
        %v2352 = vtanh.pop %v2344
        %v2353 = vtanh.pop %v2345
        %v2354 = vtanh.pop %v2346
        %v2355 = vmul.f32 %v2347, 0.5
        %v2356 = vmul.f32 %v2348, 0.5
        %v2357 = vmul.f32 %v2349, 0.5
        %v2358 = vmul.f32 %v2350, 0.5
        %v2359 = vmul.f32 %v2351, 0.5
        %v2360 = vmul.f32 %v2352, 0.5
        %v2361 = vmul.f32 %v2353, 0.5
        %v2362 = vmul.f32 %v2354, 0.5
        %v2363 = vadd.f32 %v2355, 0.5
        %v2364 = vadd.f32 %v2356, 0.5
        %v2365 = vadd.f32 %v2357, 0.5
        %v2366 = vadd.f32 %v2358, 0.5
        %v2367 = vadd.f32 %v2359, 0.5
        %v2368 = vadd.f32 %v2360, 0.5
        %v2369 = vadd.f32 %v2361, 0.5
        %v2370 = vadd.f32 %v2362, 0.5
        %v2379 = vrot.slane %v2331, 1
        %v2380 = vrot.slane %v2332, 1
        %v2381 = vrot.slane %v2333, 1
        %v2382 = vrot.slane %v2334, 1
        %v2383 = vrot.slane %v2335, 1
        %v2384 = vrot.slane %v2336, 1
        %v2385 = vrot.slane %v2337, 1
        %v2386 = vrot.slane %v2338, 1
        %v2395 = vmul.f32 %v2379, 0.5
        %v2396 = vmul.f32 %v2380, 0.5
        %v2397 = vmul.f32 %v2381, 0.5
        %v2398 = vmul.f32 %v2382, 0.5
        %v2399 = vmul.f32 %v2383, 0.5
        %v2400 = vmul.f32 %v2384, 0.5
        %v2401 = vmul.f32 %v2385, 0.5
        %v2402 = vmul.f32 %v2386, 0.5
        %v2403 = vtanh.pop %v2395
        %v2404 = vtanh.pop %v2396
        %v2405 = vtanh.pop %v2397
        %v2406 = vtanh.pop %v2398
        %v2407 = vtanh.pop %v2399
        %v2408 = vtanh.pop %v2400
        %v2409 = vtanh.pop %v2401
        %v2410 = vtanh.pop %v2402
        %v2411 = vmul.f32 %v2403, 0.5
        %v2412 = vmul.f32 %v2404, 0.5
        %v2413 = vmul.f32 %v2405, 0.5
        %v2414 = vmul.f32 %v2406, 0.5
        %v2415 = vmul.f32 %v2407, 0.5
        %v2416 = vmul.f32 %v2408, 0.5
        %v2417 = vmul.f32 %v2409, 0.5
        %v2418 = vmul.f32 %v2410, 0.5
        %v2419 = vadd.f32 %v2411, 0.5
        %v2420 = vadd.f32 %v2412, 0.5
        %v2421 = vadd.f32 %v2413, 0.5
        %v2422 = vadd.f32 %v2414, 0.5
        %v2423 = vadd.f32 %v2415, 0.5
        %v2424 = vadd.f32 %v2416, 0.5
        %v2425 = vadd.f32 %v2417, 0.5
        %v2426 = vadd.f32 %v2418, 0.5
        %v2427 = vrot.slane %v2331, 2
        %v2428 = vrot.slane %v2332, 2
        %v2429 = vrot.slane %v2333, 2
        %v2430 = vrot.slane %v2334, 2
        %v2431 = vrot.slane %v2335, 2
        %v2432 = vrot.slane %v2336, 2
        %v2433 = vrot.slane %v2337, 2
        %v2434 = vrot.slane %v2338, 2
        %v2443 = vtanh.pop %v2427
        %v2444 = vtanh.pop %v2428
        %v2445 = vtanh.pop %v2429
        %v2446 = vtanh.pop %v2430
        %v2447 = vtanh.pop %v2431
        %v2448 = vtanh.pop %v2432
        %v2449 = vtanh.pop %v2433
        %v2450 = vtanh.pop %v2434
        %v2451 = vrot.slane %v2331, 3
        %v2452 = vrot.slane %v2332, 3
        %v2453 = vrot.slane %v2333, 3
        %v2454 = vrot.slane %v2334, 3
        %v2455 = vrot.slane %v2335, 3
        %v2456 = vrot.slane %v2336, 3
        %v2457 = vrot.slane %v2337, 3
        %v2458 = vrot.slane %v2338, 3
        %v2467 = vmul.f32 %v2451, 0.5
        %v2468 = vmul.f32 %v2452, 0.5
        %v2469 = vmul.f32 %v2453, 0.5
        %v2470 = vmul.f32 %v2454, 0.5
        %v2471 = vmul.f32 %v2455, 0.5
        %v2472 = vmul.f32 %v2456, 0.5
        %v2473 = vmul.f32 %v2457, 0.5
        %v2474 = vmul.f32 %v2458, 0.5
        %v2475 = vtanh.pop %v2467
        %v2476 = vtanh.pop %v2468
        %v2477 = vtanh.pop %v2469
        %v2478 = vtanh.pop %v2470
        %v2479 = vtanh.pop %v2471
        %v2480 = vtanh.pop %v2472
        %v2481 = vtanh.pop %v2473
        %v2482 = vtanh.pop %v2474
        %v2483 = vmul.f32 %v2475, 0.5
        %v2484 = vmul.f32 %v2476, 0.5
        %v2485 = vmul.f32 %v2477, 0.5
        %v2486 = vmul.f32 %v2478, 0.5
        %v2487 = vmul.f32 %v2479, 0.5
        %v2488 = vmul.f32 %v2480, 0.5
        %v2489 = vmul.f32 %v2481, 0.5
        %v2490 = vmul.f32 %v2482, 0.5
        %v2491 = vadd.f32 %v2483, 0.5
        %v2492 = vadd.f32 %v2484, 0.5
        %v2493 = vadd.f32 %v2485, 0.5
        %v2494 = vadd.f32 %v2486, 0.5
        %v2495 = vadd.f32 %v2487, 0.5
        %v2496 = vadd.f32 %v2488, 0.5
        %v2497 = vadd.f32 %v2489, 0.5
        %v2498 = vadd.f32 %v2490, 0.5
        %v2499 = vmul.f32 %v2419, %v1197
        %v2500 = vmul.f32 %v2420, %v1198
        %v2501 = vmul.f32 %v2421, %v1199
        %v2502 = vmul.f32 %v2422, %v1200
        %v2503 = vmul.f32 %v2423, %v1201
        %v2504 = vmul.f32 %v2424, %v1202
        %v2505 = vmul.f32 %v2425, %v1203
        %v2506 = vmul.f32 %v2426, %v1204
        %v2507 = vmul.f32 %v2363, %v2443
        %v2508 = vmul.f32 %v2364, %v2444
        %v2509 = vmul.f32 %v2365, %v2445
        %v2510 = vmul.f32 %v2366, %v2446
        %v2511 = vmul.f32 %v2367, %v2447
        %v2512 = vmul.f32 %v2368, %v2448
        %v2513 = vmul.f32 %v2369, %v2449
        %v2514 = vmul.f32 %v2370, %v2450
        %v2515 = vadd.f32 %v2499, %v2507
        %v2516 = vadd.f32 %v2500, %v2508
        %v2517 = vadd.f32 %v2501, %v2509
        %v2518 = vadd.f32 %v2502, %v2510
        %v2519 = vadd.f32 %v2503, %v2511
        %v2520 = vadd.f32 %v2504, %v2512
        %v2521 = vadd.f32 %v2505, %v2513
        %v2522 = vadd.f32 %v2506, %v2514
        %v2523 = vtanh.pop %v2515
        %v2524 = vtanh.pop %v2516
        %v2525 = vtanh.pop %v2517
        %v2526 = vtanh.pop %v2518
        %v2527 = vtanh.pop %v2519
        %v2528 = vtanh.pop %v2520
        %v2529 = vtanh.pop %v2521
        %v2530 = vtanh.pop %v2522
        %v2531 = vmul.f32 %v2491, %v2523
        %v2532 = vmul.f32 %v2492, %v2524
        %v2533 = vmul.f32 %v2493, %v2525
        %v2534 = vmul.f32 %v2494, %v2526
        %v2535 = vmul.f32 %v2495, %v2527
        %v2536 = vmul.f32 %v2496, %v2528
        %v2537 = vmul.f32 %v2497, %v2529
        %v2538 = vmul.f32 %v2498, %v2530
        %v2547 = vcombine.low %v2531, %v2532
        %v2548 = vcombine.low %v2533, %v2534
        %v2549 = vcombine.low %v2535, %v2536
        %v2550 = vcombine.low %v2537, %v2538
        %v2552 = vunpack.c.l.s4 1966171168
        %v2553 = vunpack.c.0.s8 %v2552
        %v2554 = vlaneseq
        %v2555 = vshrl.u32 %v2554, 7
        %v2556 = vsub.s32 %v2553, %v2555
        %v2557 = vrot.slane %v2547, %v2556
        %v2559 = vunpack.c.l.s4 1966171168
        %v2560 = vunpack.c.0.s8 %v2559
        %v2561 = vlaneseq
        %v2562 = vshrl.u32 %v2561, 7
        %v2563 = vsub.s32 %v2560, %v2562
        %v2564 = vrot.slane %v2548, %v2563
        %v2566 = vunpack.c.l.s4 1966171168
        %v2567 = vunpack.c.0.s8 %v2566
        %v2568 = vlaneseq
        %v2569 = vshrl.u32 %v2568, 7
        %v2570 = vsub.s32 %v2567, %v2569
        %v2571 = vrot.slane %v2549, %v2570
        %v2573 = vunpack.c.l.s4 1966171168
        %v2574 = vunpack.c.0.s8 %v2573
        %v2575 = vlaneseq
        %v2576 = vshrl.u32 %v2575, 7
        %v2577 = vsub.s32 %v2574, %v2576
        %v2578 = vrot.slane %v2550, %v2577
        %v2579 = vcombine.low %v2557, %v2564
        %v2580 = vcombine.low %v2571, %v2578
        %v2582 = vunpack.c.l.s4 1966171168
        %v2583 = vunpack.c.0.s8 %v2582
        %v2584 = vlaneseq
        %v2585 = vshrl.u32 %v2584, 7
        %v2586 = vsub.s32 %v2583, %v2585
        %v2587 = vrot.slane %v2579, %v2586
        %v2589 = vunpack.c.l.s4 1966171168
        %v2590 = vunpack.c.0.s8 %v2589
        %v2591 = vlaneseq
        %v2592 = vshrl.u32 %v2591, 7
        %v2593 = vsub.s32 %v2590, %v2592
        %v2594 = vrot.slane %v2580, %v2593
        %v2595 = vcombine.low %v2587, %v2594
        %v2597 = vpack.c.bf16 %v2595, %v2595
        %v2598 = vpack.c.bf16 %v2234, %v2234
        %2599 = vmatprep.subr.bf16.mxu0 %v1794
        %2600 = vmatpush1.bf16.msra.mxu0 %v1793
        %2601 = vmatprep.subr.bf16.mxu0 %v1802
        %2602 = vmatpush1.bf16.msra.mxu0 %v1801
        %2603 = vmatprep.subr.bf16.mxu0 %v1810
        %2604 = vmatpush1.bf16.msra.mxu0 %v1809
        %2605 = vmatprep.subr.bf16.mxu0 %v1818
        %2606 = vmatpush1.bf16.msra.mxu0 %v1817
        %2607 = vmatprep.subr.bf16.mxu0 %v1826
        %2608 = vmatpush1.bf16.msra.mxu0 %v1825
        %2609 = vmatprep.subr.bf16.mxu0 %v1834
        %2610 = vmatpush1.bf16.msra.mxu0 %v1833
        %2611 = vmatprep.subr.bf16.mxu0 %v1842
        %2612 = vmatpush1.bf16.msra.mxu0 %v1841
        %2613 = vmatprep.subr.bf16.mxu0 %v1850
        %2614 = vmatpush1.bf16.msra.mxu0 %v1849
        %2615 = vmatprep.subr.bf16.mxu0 %v1858
        %2616 = vmatpush1.bf16.msra.mxu0 %v1857
        %2617 = vmatprep.subr.bf16.mxu0 %v1866
        %2618 = vmatpush1.bf16.msra.mxu0 %v1865
        %2619 = vmatprep.subr.bf16.mxu0 %v1874
        %2620 = vmatpush1.bf16.msra.mxu0 %v1873
        %2621 = vmatprep.subr.bf16.mxu0 %v1882
        %2622 = vmatpush1.bf16.msra.mxu0 %v1881
        %2623 = vmatprep.subr.bf16.mxu0 %v1890
        %2624 = vmatpush1.bf16.msra.mxu0 %v1889
        %2625 = vmatprep.subr.bf16.mxu0 %v1898
        %2626 = vmatpush1.bf16.msra.mxu0 %v1897
        %2627 = vmatprep.subr.bf16.mxu0 %v1906
        %2628 = vmatpush1.bf16.msra.mxu0 %v1905
        %2629 = vmatprep.subr.bf16.mxu0 %v1914
        %2630 = vmatpush1.bf16.msra.mxu0 %v1913
        %2631 = vmatprep.mubr.bf16.mxu0 %v2598
        %2632 = vmatmul.mubr.bf16.gmra.mrb[0].mxu0 %v2597
        %v2633 = vpop.f32.mrb[0].mxu0
        %v2634 = vadd.f32 0.0, %v2633
        %v2635 = vpop.f32.mrb[0].mxu0
        %v2636 = vadd.f32 0.0, %v2635
        %v2637 = vpop.f32.mrb[0].mxu0
        %v2638 = vpop.f32.mrb[0].mxu0
        %2639 = vdwg.mxu0
        %2640 = vmatprep.subr.bf16.mxu0 %v1796
        %2641 = vmatpush1.bf16.msra.mxu0 %v1795
        %2642 = vmatprep.subr.bf16.mxu0 %v1804
        %2643 = vmatpush1.bf16.msra.mxu0 %v1803
        %2644 = vmatprep.subr.bf16.mxu0 %v1812
        %2645 = vmatpush1.bf16.msra.mxu0 %v1811
        %2646 = vmatprep.subr.bf16.mxu0 %v1820
        %2647 = vmatpush1.bf16.msra.mxu0 %v1819
        %2648 = vmatprep.subr.bf16.mxu0 %v1828
        %2649 = vmatpush1.bf16.msra.mxu0 %v1827
        %2650 = vmatprep.subr.bf16.mxu0 %v1836
        %2651 = vmatpush1.bf16.msra.mxu0 %v1835
        %2652 = vmatprep.subr.bf16.mxu0 %v1844
        %2653 = vmatpush1.bf16.msra.mxu0 %v1843
        %2654 = vmatprep.subr.bf16.mxu0 %v1852
        %2655 = vmatpush1.bf16.msra.mxu0 %v1851
        %2656 = vmatprep.subr.bf16.mxu0 %v1860
        %2657 = vmatpush1.bf16.msra.mxu0 %v1859
        %2658 = vmatprep.subr.bf16.mxu0 %v1868
        %2659 = vmatpush1.bf16.msra.mxu0 %v1867
        %2660 = vmatprep.subr.bf16.mxu0 %v1876
        %2661 = vmatpush1.bf16.msra.mxu0 %v1875
        %2662 = vmatprep.subr.bf16.mxu0 %v1884
        %2663 = vmatpush1.bf16.msra.mxu0 %v1883
        %2664 = vmatprep.subr.bf16.mxu0 %v1892
        %2665 = vmatpush1.bf16.msra.mxu0 %v1891
        %2666 = vmatprep.subr.bf16.mxu0 %v1900
        %2667 = vmatpush1.bf16.msra.mxu0 %v1899
        %2668 = vmatprep.subr.bf16.mxu0 %v1908
        %2669 = vmatpush1.bf16.msra.mxu0 %v1907
        %2670 = vmatprep.subr.bf16.mxu0 %v1916
        %2671 = vmatpush1.bf16.msra.mxu0 %v1915
        %2672 = vmatprep.mubr.bf16.mxu0 %v2598
        %2673 = vmatmul.mubr.bf16.gmra.mrb[0].mxu0 %v2597
        %v2674 = vpop.f32.mrb[0].mxu0
        %v2675 = vadd.f32 0.0, %v2674
        %v2676 = vpop.f32.mrb[0].mxu0
        %v2677 = vadd.f32 0.0, %v2676
        %v2678 = vpop.f32.mrb[0].mxu0
        %v2679 = vpop.f32.mrb[0].mxu0
        %2680 = vdwg.mxu0
        %2681 = vmatprep.subr.bf16.mxu0 %v1798
        %2682 = vmatpush1.bf16.msra.mxu0 %v1797
        %2683 = vmatprep.subr.bf16.mxu0 %v1806
        %2684 = vmatpush1.bf16.msra.mxu0 %v1805
        %2685 = vmatprep.subr.bf16.mxu0 %v1814
        %2686 = vmatpush1.bf16.msra.mxu0 %v1813
        %2687 = vmatprep.subr.bf16.mxu0 %v1822
        %2688 = vmatpush1.bf16.msra.mxu0 %v1821
        %2689 = vmatprep.subr.bf16.mxu0 %v1830
        %2690 = vmatpush1.bf16.msra.mxu0 %v1829
        %2691 = vmatprep.subr.bf16.mxu0 %v1838
        %2692 = vmatpush1.bf16.msra.mxu0 %v1837
        %2693 = vmatprep.subr.bf16.mxu0 %v1846
        %2694 = vmatpush1.bf16.msra.mxu0 %v1845
        %2695 = vmatprep.subr.bf16.mxu0 %v1854
        %2696 = vmatpush1.bf16.msra.mxu0 %v1853
        %2697 = vmatprep.subr.bf16.mxu0 %v1862
        %2698 = vmatpush1.bf16.msra.mxu0 %v1861
        %2699 = vmatprep.subr.bf16.mxu0 %v1870
        %2700 = vmatpush1.bf16.msra.mxu0 %v1869
        %2701 = vmatprep.subr.bf16.mxu0 %v1878
        %2702 = vmatpush1.bf16.msra.mxu0 %v1877
        %2703 = vmatprep.subr.bf16.mxu0 %v1886
        %2704 = vmatpush1.bf16.msra.mxu0 %v1885
        %2705 = vmatprep.subr.bf16.mxu0 %v1894
        %2706 = vmatpush1.bf16.msra.mxu0 %v1893
        %2707 = vmatprep.subr.bf16.mxu0 %v1902
        %2708 = vmatpush1.bf16.msra.mxu0 %v1901
        %2709 = vmatprep.subr.bf16.mxu0 %v1910
        %2710 = vmatpush1.bf16.msra.mxu0 %v1909
        %2711 = vmatprep.subr.bf16.mxu0 %v1918
        %2712 = vmatpush1.bf16.msra.mxu0 %v1917
        %2713 = vmatprep.mubr.bf16.mxu0 %v2598
        %2714 = vmatmul.mubr.bf16.gmra.mrb[0].mxu0 %v2597
        %v2715 = vpop.f32.mrb[0].mxu0
        %v2716 = vadd.f32 0.0, %v2715
        %v2717 = vpop.f32.mrb[0].mxu0
        %v2718 = vadd.f32 0.0, %v2717
        %v2719 = vpop.f32.mrb[0].mxu0
        %v2720 = vpop.f32.mrb[0].mxu0
        %2721 = vdwg.mxu0
        %2722 = vmatprep.subr.bf16.mxu0 %v1800
        %2723 = vmatpush1.bf16.msra.mxu0 %v1799
        %2724 = vmatprep.subr.bf16.mxu0 %v1808
        %2725 = vmatpush1.bf16.msra.mxu0 %v1807
        %2726 = vmatprep.subr.bf16.mxu0 %v1816
        %2727 = vmatpush1.bf16.msra.mxu0 %v1815
        %2728 = vmatprep.subr.bf16.mxu0 %v1824
        %2729 = vmatpush1.bf16.msra.mxu0 %v1823
        %2730 = vmatprep.subr.bf16.mxu0 %v1832
        %2731 = vmatpush1.bf16.msra.mxu0 %v1831
        %2732 = vmatprep.subr.bf16.mxu0 %v1840
        %2733 = vmatpush1.bf16.msra.mxu0 %v1839
        %2734 = vmatprep.subr.bf16.mxu0 %v1848
        %2735 = vmatpush1.bf16.msra.mxu0 %v1847
        %2736 = vmatprep.subr.bf16.mxu0 %v1856
        %2737 = vmatpush1.bf16.msra.mxu0 %v1855
        %2738 = vmatprep.subr.bf16.mxu0 %v1864
        %2739 = vmatpush1.bf16.msra.mxu0 %v1863
        %2740 = vmatprep.subr.bf16.mxu0 %v1872
        %2741 = vmatpush1.bf16.msra.mxu0 %v1871
        %2742 = vmatprep.subr.bf16.mxu0 %v1880
        %2743 = vmatpush1.bf16.msra.mxu0 %v1879
        %2744 = vmatprep.subr.bf16.mxu0 %v1888
        %2745 = vmatpush1.bf16.msra.mxu0 %v1887
        %2746 = vmatprep.subr.bf16.mxu0 %v1896
        %2747 = vmatpush1.bf16.msra.mxu0 %v1895
        %2748 = vmatprep.subr.bf16.mxu0 %v1904
        %2749 = vmatpush1.bf16.msra.mxu0 %v1903
        %2750 = vmatprep.subr.bf16.mxu0 %v1912
        %2751 = vmatpush1.bf16.msra.mxu0 %v1911
        %2752 = vmatprep.subr.bf16.mxu0 %v1920
        %2753 = vmatpush1.bf16.msra.mxu0 %v1919
        %2754 = vmatprep.mubr.bf16.mxu0 %v2598
        %2755 = vmatmul.mubr.bf16.gmra.mrb[0].mxu0 %v2597
        %v2756 = vpop.f32.mrb[0].mxu0
        %v2757 = vadd.f32 0.0, %v2756
        %v2758 = vpop.f32.mrb[0].mxu0
        %v2759 = vadd.f32 0.0, %v2758
        %v2760 = vpop.f32.mrb[0].mxu0
        %v2761 = vpop.f32.mrb[0].mxu0
        %2762 = vdwg.mxu0
        %v2763 = vadd.f32 %v2716, %v981
        %v2764 = vadd.f32 %v2718, %v985
        %v2765 = vadd.f32 %v2757, %v989
        %v2766 = vadd.f32 %v2759, %v993
        %v2767 = vmul.f32 %v2763, 0.5
        %v2768 = vtanh.pop %v2767
        %v2769 = vmul.f32 %v2768, 0.5
        %v2770 = vadd.f32 %v2769, 0.5
        %v2771 = vmul.f32 %v2764, 0.5
        %v2772 = vtanh.pop %v2771
        %v2773 = vmul.f32 %v2772, 0.5
        %v2774 = vadd.f32 %v2773, 0.5
        %v2775 = vtanh.pop %v2765
        %v2776 = vmul.f32 %v2766, 0.5
        %v2777 = vtanh.pop %v2776
        %v2778 = vmul.f32 %v2777, 0.5
        %v2779 = vadd.f32 %v2778, 0.5
        %v2780 = vmul.f32 %v2774, %v2232
        %v2781 = vmul.f32 %v2770, %v2775
        %v2782 = vadd.f32 %v2780, %v2781
        %v2783 = vtanh.pop %v2782
        %v2784 = vmul.f32 %v2779, %v2783
        %s2785 = scalar_lea.vmem [#allocation2], 2
        %v2786 = vld [vmem:[%s2785] ss:$8 sm:$0xf]
        %s2787 = scalar_lea.vmem [#allocation2], 34
        %v2788 = vld [vmem:[%s2787] ss:$8 sm:$0xf]
        %s2789 = scalar_lea.vmem [#allocation2], 66
        %v2790 = vld [vmem:[%s2789] ss:$8 sm:$0xf]
        %s2791 = scalar_lea.vmem [#allocation2], 98
        %v2792 = vld [vmem:[%s2791] ss:$8 sm:$0xf]
        %s2793 = scalar_lea.vmem [#allocation2], 130
        %v2794 = vld [vmem:[%s2793] ss:$8 sm:$0xf]
        %s2795 = scalar_lea.vmem [#allocation2], 162
        %v2796 = vld [vmem:[%s2795] ss:$8 sm:$0xf]
        %s2797 = scalar_lea.vmem [#allocation2], 194
        %v2798 = vld [vmem:[%s2797] ss:$8 sm:$0xf]
        %s2799 = scalar_lea.vmem [#allocation2], 226
        %v2800 = vld [vmem:[%s2799] ss:$8 sm:$0xf]
        %v2805 = vcombine.low %v2634, %v2636
        %v2806 = vcombine.high %v2634, %v2636
        %v2807 = vcombine.low %v2675, %v2677
        %v2808 = vcombine.high %v2675, %v2677
        %v2810 = vunpack.c.l.s4 1966171168
        %v2811 = vunpack.c.0.s8 %v2810
        %v2812 = vlaneseq
        %v2813 = vshrl.u32 %v2812, 7
        %v2814 = vsub.s32 %v2811, %v2813
        %v2815 = vrot.slane %v2805, %v2814
        %v2817 = vunpack.c.l.s4 1966171168
        %v2818 = vunpack.c.0.s8 %v2817
        %v2819 = vlaneseq
        %v2820 = vshrl.u32 %v2819, 7
        %v2821 = vsub.s32 %v2818, %v2820
        %v2822 = vrot.slane %v2806, %v2821
        %v2824 = vunpack.c.l.s4 1966171168
        %v2825 = vunpack.c.0.s8 %v2824
        %v2826 = vlaneseq
        %v2827 = vshrl.u32 %v2826, 7
        %v2828 = vsub.s32 %v2825, %v2827
        %v2829 = vrot.slane %v2807, %v2828
        %v2831 = vunpack.c.l.s4 1966171168
        %v2832 = vunpack.c.0.s8 %v2831
        %v2833 = vlaneseq
        %v2834 = vshrl.u32 %v2833, 7
        %v2835 = vsub.s32 %v2832, %v2834
        %v2836 = vrot.slane %v2808, %v2835
        %v2837 = vcombine.low %v2815, %v2829
        %v2838 = vcombine.high %v2815, %v2829
        %v2839 = vcombine.low %v2822, %v2836
        %v2840 = vcombine.high %v2822, %v2836
        %v2842 = vunpack.c.l.s4 1966171168
        %v2843 = vunpack.c.0.s8 %v2842
        %v2844 = vlaneseq
        %v2845 = vshrl.u32 %v2844, 7
        %v2846 = vsub.s32 %v2843, %v2845
        %v2847 = vrot.slane %v2837, %v2846
        %v2849 = vunpack.c.l.s4 1966171168
        %v2850 = vunpack.c.0.s8 %v2849
        %v2851 = vlaneseq
        %v2852 = vshrl.u32 %v2851, 7
        %v2853 = vsub.s32 %v2850, %v2852
        %v2854 = vrot.slane %v2839, %v2853
        %v2856 = vunpack.c.l.s4 1966171168
        %v2857 = vunpack.c.0.s8 %v2856
        %v2858 = vlaneseq
        %v2859 = vshrl.u32 %v2858, 7
        %v2860 = vsub.s32 %v2857, %v2859
        %v2861 = vrot.slane %v2838, %v2860
        %v2863 = vunpack.c.l.s4 1966171168
        %v2864 = vunpack.c.0.s8 %v2863
        %v2865 = vlaneseq
        %v2866 = vshrl.u32 %v2865, 7
        %v2867 = vsub.s32 %v2864, %v2866
        %v2868 = vrot.slane %v2840, %v2867
        %v2869 = vcombine.high %v2847, %v2847
        %v2870 = vcombine.high %v2854, %v2854
        %v2871 = vcombine.high %v2861, %v2861
        %v2872 = vcombine.high %v2868, %v2868
        %v2881 = vadd.f32 %v2786, %v2847
        %v2882 = vadd.f32 %v2788, %v2861
        %v2883 = vadd.f32 %v2790, %v2869
        %v2884 = vadd.f32 %v2792, %v2871
        %v2885 = vadd.f32 %v2794, %v2854
        %v2886 = vadd.f32 %v2796, %v2868
        %v2887 = vadd.f32 %v2798, %v2870
        %v2888 = vadd.f32 %v2800, %v2872
        %v2889 = vmul.f32 %v2881, 0.5
        %v2890 = vmul.f32 %v2882, 0.5
        %v2891 = vmul.f32 %v2883, 0.5
        %v2892 = vmul.f32 %v2884, 0.5
        %v2893 = vmul.f32 %v2885, 0.5
        %v2894 = vmul.f32 %v2886, 0.5
        %v2895 = vmul.f32 %v2887, 0.5
        %v2896 = vmul.f32 %v2888, 0.5
        %v2897 = vtanh.pop %v2889
        %v2898 = vtanh.pop %v2890
        %v2899 = vtanh.pop %v2891
        %v2900 = vtanh.pop %v2892
        %v2901 = vtanh.pop %v2893
        %v2902 = vtanh.pop %v2894
        %v2903 = vtanh.pop %v2895
        %v2904 = vtanh.pop %v2896
        %v2905 = vmul.f32 %v2897, 0.5
        %v2906 = vmul.f32 %v2898, 0.5
        %v2907 = vmul.f32 %v2899, 0.5
        %v2908 = vmul.f32 %v2900, 0.5
        %v2909 = vmul.f32 %v2901, 0.5
        %v2910 = vmul.f32 %v2902, 0.5
        %v2911 = vmul.f32 %v2903, 0.5
        %v2912 = vmul.f32 %v2904, 0.5
        %v2913 = vadd.f32 %v2905, 0.5
        %v2914 = vadd.f32 %v2906, 0.5
        %v2915 = vadd.f32 %v2907, 0.5
        %v2916 = vadd.f32 %v2908, 0.5
        %v2917 = vadd.f32 %v2909, 0.5
        %v2918 = vadd.f32 %v2910, 0.5
        %v2919 = vadd.f32 %v2911, 0.5
        %v2920 = vadd.f32 %v2912, 0.5
        %v2929 = vrot.slane %v2881, 1
        %v2930 = vrot.slane %v2882, 1
        %v2931 = vrot.slane %v2883, 1
        %v2932 = vrot.slane %v2884, 1
        %v2933 = vrot.slane %v2885, 1
        %v2934 = vrot.slane %v2886, 1
        %v2935 = vrot.slane %v2887, 1
        %v2936 = vrot.slane %v2888, 1
        %v2945 = vmul.f32 %v2929, 0.5
        %v2946 = vmul.f32 %v2930, 0.5
        %v2947 = vmul.f32 %v2931, 0.5
        %v2948 = vmul.f32 %v2932, 0.5
        %v2949 = vmul.f32 %v2933, 0.5
        %v2950 = vmul.f32 %v2934, 0.5
        %v2951 = vmul.f32 %v2935, 0.5
        %v2952 = vmul.f32 %v2936, 0.5
        %v2953 = vtanh.pop %v2945
        %v2954 = vtanh.pop %v2946
        %v2955 = vtanh.pop %v2947
        %v2956 = vtanh.pop %v2948
        %v2957 = vtanh.pop %v2949
        %v2958 = vtanh.pop %v2950
        %v2959 = vtanh.pop %v2951
        %v2960 = vtanh.pop %v2952
        %v2961 = vmul.f32 %v2953, 0.5
        %v2962 = vmul.f32 %v2954, 0.5
        %v2963 = vmul.f32 %v2955, 0.5
        %v2964 = vmul.f32 %v2956, 0.5
        %v2965 = vmul.f32 %v2957, 0.5
        %v2966 = vmul.f32 %v2958, 0.5
        %v2967 = vmul.f32 %v2959, 0.5
        %v2968 = vmul.f32 %v2960, 0.5
        %v2969 = vadd.f32 %v2961, 0.5
        %v2970 = vadd.f32 %v2962, 0.5
        %v2971 = vadd.f32 %v2963, 0.5
        %v2972 = vadd.f32 %v2964, 0.5
        %v2973 = vadd.f32 %v2965, 0.5
        %v2974 = vadd.f32 %v2966, 0.5
        %v2975 = vadd.f32 %v2967, 0.5
        %v2976 = vadd.f32 %v2968, 0.5
        %v2977 = vrot.slane %v2881, 2
        %v2978 = vrot.slane %v2882, 2
        %v2979 = vrot.slane %v2883, 2
        %v2980 = vrot.slane %v2884, 2
        %v2981 = vrot.slane %v2885, 2
        %v2982 = vrot.slane %v2886, 2
        %v2983 = vrot.slane %v2887, 2
        %v2984 = vrot.slane %v2888, 2
        %v2993 = vtanh.pop %v2977
        %v2994 = vtanh.pop %v2978
        %v2995 = vtanh.pop %v2979
        %v2996 = vtanh.pop %v2980
        %v2997 = vtanh.pop %v2981
        %v2998 = vtanh.pop %v2982
        %v2999 = vtanh.pop %v2983
        %v3000 = vtanh.pop %v2984
        %v3001 = vrot.slane %v2881, 3
        %v3002 = vrot.slane %v2882, 3
        %v3003 = vrot.slane %v2883, 3
        %v3004 = vrot.slane %v2884, 3
        %v3005 = vrot.slane %v2885, 3
        %v3006 = vrot.slane %v2886, 3
        %v3007 = vrot.slane %v2887, 3
        %v3008 = vrot.slane %v2888, 3
        %v3017 = vmul.f32 %v3001, 0.5
        %v3018 = vmul.f32 %v3002, 0.5
        %v3019 = vmul.f32 %v3003, 0.5
        %v3020 = vmul.f32 %v3004, 0.5
        %v3021 = vmul.f32 %v3005, 0.5
        %v3022 = vmul.f32 %v3006, 0.5
        %v3023 = vmul.f32 %v3007, 0.5
        %v3024 = vmul.f32 %v3008, 0.5
        %v3025 = vtanh.pop %v3017
        %v3026 = vtanh.pop %v3018
        %v3027 = vtanh.pop %v3019
        %v3028 = vtanh.pop %v3020
        %v3029 = vtanh.pop %v3021
        %v3030 = vtanh.pop %v3022
        %v3031 = vtanh.pop %v3023
        %v3032 = vtanh.pop %v3024
        %v3033 = vmul.f32 %v3025, 0.5
        %v3034 = vmul.f32 %v3026, 0.5
        %v3035 = vmul.f32 %v3027, 0.5
        %v3036 = vmul.f32 %v3028, 0.5
        %v3037 = vmul.f32 %v3029, 0.5
        %v3038 = vmul.f32 %v3030, 0.5
        %v3039 = vmul.f32 %v3031, 0.5
        %v3040 = vmul.f32 %v3032, 0.5
        %v3041 = vadd.f32 %v3033, 0.5
        %v3042 = vadd.f32 %v3034, 0.5
        %v3043 = vadd.f32 %v3035, 0.5
        %v3044 = vadd.f32 %v3036, 0.5
        %v3045 = vadd.f32 %v3037, 0.5
        %v3046 = vadd.f32 %v3038, 0.5
        %v3047 = vadd.f32 %v3039, 0.5
        %v3048 = vadd.f32 %v3040, 0.5
        %v3049 = vmul.f32 %v2969, %v2515
        %v3050 = vmul.f32 %v2970, %v2516
        %v3051 = vmul.f32 %v2971, %v2517
        %v3052 = vmul.f32 %v2972, %v2518
        %v3053 = vmul.f32 %v2973, %v2519
        %v3054 = vmul.f32 %v2974, %v2520
        %v3055 = vmul.f32 %v2975, %v2521
        %v3056 = vmul.f32 %v2976, %v2522
        %v3057 = vmul.f32 %v2913, %v2993
        %v3058 = vmul.f32 %v2914, %v2994
        %v3059 = vmul.f32 %v2915, %v2995
        %v3060 = vmul.f32 %v2916, %v2996
        %v3061 = vmul.f32 %v2917, %v2997
        %v3062 = vmul.f32 %v2918, %v2998
        %v3063 = vmul.f32 %v2919, %v2999
        %v3064 = vmul.f32 %v2920, %v3000
        %v3065 = vadd.f32 %v3049, %v3057
        %v3066 = vadd.f32 %v3050, %v3058
        %v3067 = vadd.f32 %v3051, %v3059
        %v3068 = vadd.f32 %v3052, %v3060
        %v3069 = vadd.f32 %v3053, %v3061
        %v3070 = vadd.f32 %v3054, %v3062
        %v3071 = vadd.f32 %v3055, %v3063
        %v3072 = vadd.f32 %v3056, %v3064
        %v3073 = vtanh.pop %v3065
        %v3074 = vtanh.pop %v3066
        %v3075 = vtanh.pop %v3067
        %v3076 = vtanh.pop %v3068
        %v3077 = vtanh.pop %v3069
        %v3078 = vtanh.pop %v3070
        %v3079 = vtanh.pop %v3071
        %v3080 = vtanh.pop %v3072
        %v3081 = vmul.f32 %v3041, %v3073
        %v3082 = vmul.f32 %v3042, %v3074
        %v3083 = vmul.f32 %v3043, %v3075
        %v3084 = vmul.f32 %v3044, %v3076
        %v3085 = vmul.f32 %v3045, %v3077
        %v3086 = vmul.f32 %v3046, %v3078
        %v3087 = vmul.f32 %v3047, %v3079
        %v3088 = vmul.f32 %v3048, %v3080
        %v3097 = vcombine.low %v3081, %v3082
        %v3098 = vcombine.low %v3083, %v3084
        %v3099 = vcombine.low %v3085, %v3086
        %v3100 = vcombine.low %v3087, %v3088
        %v3102 = vunpack.c.l.s4 1966171168
        %v3103 = vunpack.c.0.s8 %v3102
        %v3104 = vlaneseq
        %v3105 = vshrl.u32 %v3104, 7
        %v3106 = vsub.s32 %v3103, %v3105
        %v3107 = vrot.slane %v3097, %v3106
        %v3109 = vunpack.c.l.s4 1966171168
        %v3110 = vunpack.c.0.s8 %v3109
        %v3111 = vlaneseq
        %v3112 = vshrl.u32 %v3111, 7
        %v3113 = vsub.s32 %v3110, %v3112
        %v3114 = vrot.slane %v3098, %v3113
        %v3116 = vunpack.c.l.s4 1966171168
        %v3117 = vunpack.c.0.s8 %v3116
        %v3118 = vlaneseq
        %v3119 = vshrl.u32 %v3118, 7
        %v3120 = vsub.s32 %v3117, %v3119
        %v3121 = vrot.slane %v3099, %v3120
        %v3123 = vunpack.c.l.s4 1966171168
        %v3124 = vunpack.c.0.s8 %v3123
        %v3125 = vlaneseq
        %v3126 = vshrl.u32 %v3125, 7
        %v3127 = vsub.s32 %v3124, %v3126
        %v3128 = vrot.slane %v3100, %v3127
        %v3129 = vcombine.low %v3107, %v3114
        %v3130 = vcombine.low %v3121, %v3128
        %v3132 = vunpack.c.l.s4 1966171168
        %v3133 = vunpack.c.0.s8 %v3132
        %v3134 = vlaneseq
        %v3135 = vshrl.u32 %v3134, 7
        %v3136 = vsub.s32 %v3133, %v3135
        %v3137 = vrot.slane %v3129, %v3136
        %v3139 = vunpack.c.l.s4 1966171168
        %v3140 = vunpack.c.0.s8 %v3139
        %v3141 = vlaneseq
        %v3142 = vshrl.u32 %v3141, 7
        %v3143 = vsub.s32 %v3140, %v3142
        %v3144 = vrot.slane %v3130, %v3143
        %v3145 = vcombine.low %v3137, %v3144
        %v3147 = vpack.c.bf16 %v3145, %v3145
        %v3148 = vpack.c.bf16 %v2784, %v2784
        %3149 = vmatprep.subr.bf16.mxu0 %v1794
        %3150 = vmatpush1.bf16.msra.mxu0 %v1793
        %3151 = vmatprep.subr.bf16.mxu0 %v1802
        %3152 = vmatpush1.bf16.msra.mxu0 %v1801
        %3153 = vmatprep.subr.bf16.mxu0 %v1810
        %3154 = vmatpush1.bf16.msra.mxu0 %v1809
        %3155 = vmatprep.subr.bf16.mxu0 %v1818
        %3156 = vmatpush1.bf16.msra.mxu0 %v1817
        %3157 = vmatprep.subr.bf16.mxu0 %v1826
        %3158 = vmatpush1.bf16.msra.mxu0 %v1825
        %3159 = vmatprep.subr.bf16.mxu0 %v1834
        %3160 = vmatpush1.bf16.msra.mxu0 %v1833
        %3161 = vmatprep.subr.bf16.mxu0 %v1842
        %3162 = vmatpush1.bf16.msra.mxu0 %v1841
        %3163 = vmatprep.subr.bf16.mxu0 %v1850
        %3164 = vmatpush1.bf16.msra.mxu0 %v1849
        %3165 = vmatprep.subr.bf16.mxu0 %v1858
        %3166 = vmatpush1.bf16.msra.mxu0 %v1857
        %3167 = vmatprep.subr.bf16.mxu0 %v1866
        %3168 = vmatpush1.bf16.msra.mxu0 %v1865
        %3169 = vmatprep.subr.bf16.mxu0 %v1874
        %3170 = vmatpush1.bf16.msra.mxu0 %v1873
        %3171 = vmatprep.subr.bf16.mxu0 %v1882
        %3172 = vmatpush1.bf16.msra.mxu0 %v1881
        %3173 = vmatprep.subr.bf16.mxu0 %v1890
        %3174 = vmatpush1.bf16.msra.mxu0 %v1889
        %3175 = vmatprep.subr.bf16.mxu0 %v1898
        %3176 = vmatpush1.bf16.msra.mxu0 %v1897
        %3177 = vmatprep.subr.bf16.mxu0 %v1906
        %3178 = vmatpush1.bf16.msra.mxu0 %v1905
        %3179 = vmatprep.subr.bf16.mxu0 %v1914
        %3180 = vmatpush1.bf16.msra.mxu0 %v1913
        %3181 = vmatprep.mubr.bf16.mxu0 %v3148
        %3182 = vmatmul.mubr.bf16.gmra.mrb[0].mxu0 %v3147
        %v3183 = vpop.f32.mrb[0].mxu0
        %v3184 = vadd.f32 0.0, %v3183
        %v3185 = vpop.f32.mrb[0].mxu0
        %v3186 = vadd.f32 0.0, %v3185
        %v3187 = vpop.f32.mrb[0].mxu0
        %v3188 = vpop.f32.mrb[0].mxu0
        %3189 = vdwg.mxu0
        %3190 = vmatprep.subr.bf16.mxu0 %v1796
        %3191 = vmatpush1.bf16.msra.mxu0 %v1795
        %3192 = vmatprep.subr.bf16.mxu0 %v1804
        %3193 = vmatpush1.bf16.msra.mxu0 %v1803
        %3194 = vmatprep.subr.bf16.mxu0 %v1812
        %3195 = vmatpush1.bf16.msra.mxu0 %v1811
        %3196 = vmatprep.subr.bf16.mxu0 %v1820
        %3197 = vmatpush1.bf16.msra.mxu0 %v1819
        %3198 = vmatprep.subr.bf16.mxu0 %v1828
        %3199 = vmatpush1.bf16.msra.mxu0 %v1827
        %3200 = vmatprep.subr.bf16.mxu0 %v1836
        %3201 = vmatpush1.bf16.msra.mxu0 %v1835
        %3202 = vmatprep.subr.bf16.mxu0 %v1844
        %3203 = vmatpush1.bf16.msra.mxu0 %v1843
        %3204 = vmatprep.subr.bf16.mxu0 %v1852
        %3205 = vmatpush1.bf16.msra.mxu0 %v1851
        %3206 = vmatprep.subr.bf16.mxu0 %v1860
        %3207 = vmatpush1.bf16.msra.mxu0 %v1859
        %3208 = vmatprep.subr.bf16.mxu0 %v1868
        %3209 = vmatpush1.bf16.msra.mxu0 %v1867
        %3210 = vmatprep.subr.bf16.mxu0 %v1876
        %3211 = vmatpush1.bf16.msra.mxu0 %v1875
        %3212 = vmatprep.subr.bf16.mxu0 %v1884
        %3213 = vmatpush1.bf16.msra.mxu0 %v1883
        %3214 = vmatprep.subr.bf16.mxu0 %v1892
        %3215 = vmatpush1.bf16.msra.mxu0 %v1891
        %3216 = vmatprep.subr.bf16.mxu0 %v1900
        %3217 = vmatpush1.bf16.msra.mxu0 %v1899
        %3218 = vmatprep.subr.bf16.mxu0 %v1908
        %3219 = vmatpush1.bf16.msra.mxu0 %v1907
        %3220 = vmatprep.subr.bf16.mxu0 %v1916
        %3221 = vmatpush1.bf16.msra.mxu0 %v1915
        %3222 = vmatprep.mubr.bf16.mxu0 %v3148
        %3223 = vmatmul.mubr.bf16.gmra.mrb[0].mxu0 %v3147
        %v3224 = vpop.f32.mrb[0].mxu0
        %v3225 = vadd.f32 0.0, %v3224
        %v3226 = vpop.f32.mrb[0].mxu0
        %v3227 = vadd.f32 0.0, %v3226
        %v3228 = vpop.f32.mrb[0].mxu0
        %v3229 = vpop.f32.mrb[0].mxu0
        %3230 = vdwg.mxu0
        %3231 = vmatprep.subr.bf16.mxu0 %v1798
        %3232 = vmatpush1.bf16.msra.mxu0 %v1797
        %3233 = vmatprep.subr.bf16.mxu0 %v1806
        %3234 = vmatpush1.bf16.msra.mxu0 %v1805
        %3235 = vmatprep.subr.bf16.mxu0 %v1814
        %3236 = vmatpush1.bf16.msra.mxu0 %v1813
        %3237 = vmatprep.subr.bf16.mxu0 %v1822
        %3238 = vmatpush1.bf16.msra.mxu0 %v1821
        %3239 = vmatprep.subr.bf16.mxu0 %v1830
        %3240 = vmatpush1.bf16.msra.mxu0 %v1829
        %3241 = vmatprep.subr.bf16.mxu0 %v1838
        %3242 = vmatpush1.bf16.msra.mxu0 %v1837
        %3243 = vmatprep.subr.bf16.mxu0 %v1846
        %3244 = vmatpush1.bf16.msra.mxu0 %v1845
        %3245 = vmatprep.subr.bf16.mxu0 %v1854
        %3246 = vmatpush1.bf16.msra.mxu0 %v1853
        %3247 = vmatprep.subr.bf16.mxu0 %v1862
        %3248 = vmatpush1.bf16.msra.mxu0 %v1861
        %3249 = vmatprep.subr.bf16.mxu0 %v1870
        %3250 = vmatpush1.bf16.msra.mxu0 %v1869
        %3251 = vmatprep.subr.bf16.mxu0 %v1878
        %3252 = vmatpush1.bf16.msra.mxu0 %v1877
        %3253 = vmatprep.subr.bf16.mxu0 %v1886
        %3254 = vmatpush1.bf16.msra.mxu0 %v1885
        %3255 = vmatprep.subr.bf16.mxu0 %v1894
        %3256 = vmatpush1.bf16.msra.mxu0 %v1893
        %3257 = vmatprep.subr.bf16.mxu0 %v1902
        %3258 = vmatpush1.bf16.msra.mxu0 %v1901
        %3259 = vmatprep.subr.bf16.mxu0 %v1910
        %3260 = vmatpush1.bf16.msra.mxu0 %v1909
        %3261 = vmatprep.subr.bf16.mxu0 %v1918
        %3262 = vmatpush1.bf16.msra.mxu0 %v1917
        %3263 = vmatprep.mubr.bf16.mxu0 %v3148
        %3264 = vmatmul.mubr.bf16.gmra.mrb[0].mxu0 %v3147
        %v3265 = vpop.f32.mrb[0].mxu0
        %v3266 = vadd.f32 0.0, %v3265
        %v3267 = vpop.f32.mrb[0].mxu0
        %v3268 = vadd.f32 0.0, %v3267
        %v3269 = vpop.f32.mrb[0].mxu0
        %v3270 = vpop.f32.mrb[0].mxu0
        %3271 = vdwg.mxu0
        %3272 = vmatprep.subr.bf16.mxu0 %v1800
        %3273 = vmatpush1.bf16.msra.mxu0 %v1799
        %3274 = vmatprep.subr.bf16.mxu0 %v1808
        %3275 = vmatpush1.bf16.msra.mxu0 %v1807
        %3276 = vmatprep.subr.bf16.mxu0 %v1816
        %3277 = vmatpush1.bf16.msra.mxu0 %v1815
        %3278 = vmatprep.subr.bf16.mxu0 %v1824
        %3279 = vmatpush1.bf16.msra.mxu0 %v1823
        %3280 = vmatprep.subr.bf16.mxu0 %v1832
        %3281 = vmatpush1.bf16.msra.mxu0 %v1831
        %3282 = vmatprep.subr.bf16.mxu0 %v1840
        %3283 = vmatpush1.bf16.msra.mxu0 %v1839
        %3284 = vmatprep.subr.bf16.mxu0 %v1848
        %3285 = vmatpush1.bf16.msra.mxu0 %v1847
        %3286 = vmatprep.subr.bf16.mxu0 %v1856
        %3287 = vmatpush1.bf16.msra.mxu0 %v1855
        %3288 = vmatprep.subr.bf16.mxu0 %v1864
        %3289 = vmatpush1.bf16.msra.mxu0 %v1863
        %3290 = vmatprep.subr.bf16.mxu0 %v1872
        %3291 = vmatpush1.bf16.msra.mxu0 %v1871
        %3292 = vmatprep.subr.bf16.mxu0 %v1880
        %3293 = vmatpush1.bf16.msra.mxu0 %v1879
        %3294 = vmatprep.subr.bf16.mxu0 %v1888
        %3295 = vmatpush1.bf16.msra.mxu0 %v1887
        %3296 = vmatprep.subr.bf16.mxu0 %v1896
        %3297 = vmatpush1.bf16.msra.mxu0 %v1895
        %3298 = vmatprep.subr.bf16.mxu0 %v1904
        %3299 = vmatpush1.bf16.msra.mxu0 %v1903
        %3300 = vmatprep.subr.bf16.mxu0 %v1912
        %3301 = vmatpush1.bf16.msra.mxu0 %v1911
        %3302 = vmatprep.subr.bf16.mxu0 %v1920
        %3303 = vmatpush1.bf16.msra.mxu0 %v1919
        %3304 = vmatprep.mubr.bf16.mxu0 %v3148
        %3305 = vmatmul.mubr.bf16.gmra.mrb[0].mxu0 %v3147
        %v3306 = vpop.f32.mrb[0].mxu0
        %v3307 = vadd.f32 0.0, %v3306
        %v3308 = vpop.f32.mrb[0].mxu0
        %v3309 = vadd.f32 0.0, %v3308
        %v3310 = vpop.f32.mrb[0].mxu0
        %v3311 = vpop.f32.mrb[0].mxu0
        %3312 = vdwg.mxu0
        %v3313 = vadd.f32 %v3266, %v981
        %v3314 = vadd.f32 %v3268, %v985
        %v3315 = vadd.f32 %v3307, %v989
        %v3316 = vadd.f32 %v3309, %v993
        %v3317 = vmul.f32 %v3313, 0.5
        %v3318 = vtanh.pop %v3317
        %v3319 = vmul.f32 %v3318, 0.5
        %v3320 = vadd.f32 %v3319, 0.5
        %v3321 = vmul.f32 %v3314, 0.5
        %v3322 = vtanh.pop %v3321
        %v3323 = vmul.f32 %v3322, 0.5
        %v3324 = vadd.f32 %v3323, 0.5
        %v3325 = vtanh.pop %v3315
        %v3326 = vmul.f32 %v3316, 0.5
        %v3327 = vtanh.pop %v3326
        %v3328 = vmul.f32 %v3327, 0.5
        %v3329 = vadd.f32 %v3328, 0.5
        %v3330 = vmul.f32 %v3324, %v2782
        %v3331 = vmul.f32 %v3320, %v3325
        %v3332 = vadd.f32 %v3330, %v3331
        %v3333 = vtanh.pop %v3332
        %v3334 = vmul.f32 %v3329, %v3333
        %s3335 = scalar_lea.vmem [#allocation2], 3
        %v3336 = vld [vmem:[%s3335] ss:$8 sm:$0xf]
        %s3337 = scalar_lea.vmem [#allocation2], 35
        %v3338 = vld [vmem:[%s3337] ss:$8 sm:$0xf]
        %s3339 = scalar_lea.vmem [#allocation2], 67
        %v3340 = vld [vmem:[%s3339] ss:$8 sm:$0xf]
        %s3341 = scalar_lea.vmem [#allocation2], 99
        %v3342 = vld [vmem:[%s3341] ss:$8 sm:$0xf]
        %s3343 = scalar_lea.vmem [#allocation2], 131
        %v3344 = vld [vmem:[%s3343] ss:$8 sm:$0xf]
        %s3345 = scalar_lea.vmem [#allocation2], 163
        %v3346 = vld [vmem:[%s3345] ss:$8 sm:$0xf]
        %s3347 = scalar_lea.vmem [#allocation2], 195
        %v3348 = vld [vmem:[%s3347] ss:$8 sm:$0xf]
        %s3349 = scalar_lea.vmem [#allocation2], 227
        %v3350 = vld [vmem:[%s3349] ss:$8 sm:$0xf]
        %v3355 = vcombine.low %v3184, %v3186
        %v3356 = vcombine.high %v3184, %v3186
        %v3357 = vcombine.low %v3225, %v3227
        %v3358 = vcombine.high %v3225, %v3227
        %v3360 = vunpack.c.l.s4 1966171168
        %v3361 = vunpack.c.0.s8 %v3360
        %v3362 = vlaneseq
        %v3363 = vshrl.u32 %v3362, 7
        %v3364 = vsub.s32 %v3361, %v3363
        %v3365 = vrot.slane %v3355, %v3364
        %v3367 = vunpack.c.l.s4 1966171168
        %v3368 = vunpack.c.0.s8 %v3367
        %v3369 = vlaneseq
        %v3370 = vshrl.u32 %v3369, 7
        %v3371 = vsub.s32 %v3368, %v3370
        %v3372 = vrot.slane %v3356, %v3371
        %v3374 = vunpack.c.l.s4 1966171168
        %v3375 = vunpack.c.0.s8 %v3374
        %v3376 = vlaneseq
        %v3377 = vshrl.u32 %v3376, 7
        %v3378 = vsub.s32 %v3375, %v3377
        %v3379 = vrot.slane %v3357, %v3378
        %v3381 = vunpack.c.l.s4 1966171168
        %v3382 = vunpack.c.0.s8 %v3381
        %v3383 = vlaneseq
        %v3384 = vshrl.u32 %v3383, 7
        %v3385 = vsub.s32 %v3382, %v3384
        %v3386 = vrot.slane %v3358, %v3385
        %v3387 = vcombine.low %v3365, %v3379
        %v3388 = vcombine.high %v3365, %v3379
        %v3389 = vcombine.low %v3372, %v3386
        %v3390 = vcombine.high %v3372, %v3386
        %v3392 = vunpack.c.l.s4 1966171168
        %v3393 = vunpack.c.0.s8 %v3392
        %v3394 = vlaneseq
        %v3395 = vshrl.u32 %v3394, 7
        %v3396 = vsub.s32 %v3393, %v3395
        %v3397 = vrot.slane %v3387, %v3396
        %v3399 = vunpack.c.l.s4 1966171168
        %v3400 = vunpack.c.0.s8 %v3399
        %v3401 = vlaneseq
        %v3402 = vshrl.u32 %v3401, 7
        %v3403 = vsub.s32 %v3400, %v3402
        %v3404 = vrot.slane %v3389, %v3403
        %v3406 = vunpack.c.l.s4 1966171168
        %v3407 = vunpack.c.0.s8 %v3406
        %v3408 = vlaneseq
        %v3409 = vshrl.u32 %v3408, 7
        %v3410 = vsub.s32 %v3407, %v3409
        %v3411 = vrot.slane %v3388, %v3410
        %v3413 = vunpack.c.l.s4 1966171168
        %v3414 = vunpack.c.0.s8 %v3413
        %v3415 = vlaneseq
        %v3416 = vshrl.u32 %v3415, 7
        %v3417 = vsub.s32 %v3414, %v3416
        %v3418 = vrot.slane %v3390, %v3417
        %v3419 = vcombine.high %v3397, %v3397
        %v3420 = vcombine.high %v3404, %v3404
        %v3421 = vcombine.high %v3411, %v3411
        %v3422 = vcombine.high %v3418, %v3418
        %v3431 = vadd.f32 %v3336, %v3397
        %v3432 = vadd.f32 %v3338, %v3411
        %v3433 = vadd.f32 %v3340, %v3419
        %v3434 = vadd.f32 %v3342, %v3421
        %v3435 = vadd.f32 %v3344, %v3404
        %v3436 = vadd.f32 %v3346, %v3418
        %v3437 = vadd.f32 %v3348, %v3420
        %v3438 = vadd.f32 %v3350, %v3422
        %v3439 = vmul.f32 %v3431, 0.5
        %v3440 = vmul.f32 %v3432, 0.5
        %v3441 = vmul.f32 %v3433, 0.5
        %v3442 = vmul.f32 %v3434, 0.5
        %v3443 = vmul.f32 %v3435, 0.5
        %v3444 = vmul.f32 %v3436, 0.5
        %v3445 = vmul.f32 %v3437, 0.5
        %v3446 = vmul.f32 %v3438, 0.5
        %v3447 = vtanh.pop %v3439
        %v3448 = vtanh.pop %v3440
        %v3449 = vtanh.pop %v3441
        %v3450 = vtanh.pop %v3442
        %v3451 = vtanh.pop %v3443
        %v3452 = vtanh.pop %v3444
        %v3453 = vtanh.pop %v3445
        %v3454 = vtanh.pop %v3446
        %v3455 = vmul.f32 %v3447, 0.5
        %v3456 = vmul.f32 %v3448, 0.5
        %v3457 = vmul.f32 %v3449, 0.5
        %v3458 = vmul.f32 %v3450, 0.5
        %v3459 = vmul.f32 %v3451, 0.5
        %v3460 = vmul.f32 %v3452, 0.5
        %v3461 = vmul.f32 %v3453, 0.5
        %v3462 = vmul.f32 %v3454, 0.5
        %v3463 = vadd.f32 %v3455, 0.5
        %v3464 = vadd.f32 %v3456, 0.5
        %v3465 = vadd.f32 %v3457, 0.5
        %v3466 = vadd.f32 %v3458, 0.5
        %v3467 = vadd.f32 %v3459, 0.5
        %v3468 = vadd.f32 %v3460, 0.5
        %v3469 = vadd.f32 %v3461, 0.5
        %v3470 = vadd.f32 %v3462, 0.5
        %v3479 = vrot.slane %v3431, 1
        %v3480 = vrot.slane %v3432, 1
        %v3481 = vrot.slane %v3433, 1
        %v3482 = vrot.slane %v3434, 1
        %v3483 = vrot.slane %v3435, 1
        %v3484 = vrot.slane %v3436, 1
        %v3485 = vrot.slane %v3437, 1
        %v3486 = vrot.slane %v3438, 1
        %v3495 = vmul.f32 %v3479, 0.5
        %v3496 = vmul.f32 %v3480, 0.5
        %v3497 = vmul.f32 %v3481, 0.5
        %v3498 = vmul.f32 %v3482, 0.5
        %v3499 = vmul.f32 %v3483, 0.5
        %v3500 = vmul.f32 %v3484, 0.5
        %v3501 = vmul.f32 %v3485, 0.5
        %v3502 = vmul.f32 %v3486, 0.5
        %v3503 = vtanh.pop %v3495
        %v3504 = vtanh.pop %v3496
        %v3505 = vtanh.pop %v3497
        %v3506 = vtanh.pop %v3498
        %v3507 = vtanh.pop %v3499
        %v3508 = vtanh.pop %v3500
        %v3509 = vtanh.pop %v3501
        %v3510 = vtanh.pop %v3502
        %v3511 = vmul.f32 %v3503, 0.5
        %v3512 = vmul.f32 %v3504, 0.5
        %v3513 = vmul.f32 %v3505, 0.5
        %v3514 = vmul.f32 %v3506, 0.5
        %v3515 = vmul.f32 %v3507, 0.5
        %v3516 = vmul.f32 %v3508, 0.5
        %v3517 = vmul.f32 %v3509, 0.5
        %v3518 = vmul.f32 %v3510, 0.5
        %v3519 = vadd.f32 %v3511, 0.5
        %v3520 = vadd.f32 %v3512, 0.5
        %v3521 = vadd.f32 %v3513, 0.5
        %v3522 = vadd.f32 %v3514, 0.5
        %v3523 = vadd.f32 %v3515, 0.5
        %v3524 = vadd.f32 %v3516, 0.5
        %v3525 = vadd.f32 %v3517, 0.5
        %v3526 = vadd.f32 %v3518, 0.5
        %v3527 = vrot.slane %v3431, 2
        %v3528 = vrot.slane %v3432, 2
        %v3529 = vrot.slane %v3433, 2
        %v3530 = vrot.slane %v3434, 2
        %v3531 = vrot.slane %v3435, 2
        %v3532 = vrot.slane %v3436, 2
        %v3533 = vrot.slane %v3437, 2
        %v3534 = vrot.slane %v3438, 2
        %v3543 = vtanh.pop %v3527
        %v3544 = vtanh.pop %v3528
        %v3545 = vtanh.pop %v3529
        %v3546 = vtanh.pop %v3530
        %v3547 = vtanh.pop %v3531
        %v3548 = vtanh.pop %v3532
        %v3549 = vtanh.pop %v3533
        %v3550 = vtanh.pop %v3534
        %v3551 = vrot.slane %v3431, 3
        %v3552 = vrot.slane %v3432, 3
        %v3553 = vrot.slane %v3433, 3
        %v3554 = vrot.slane %v3434, 3
        %v3555 = vrot.slane %v3435, 3
        %v3556 = vrot.slane %v3436, 3
        %v3557 = vrot.slane %v3437, 3
        %v3558 = vrot.slane %v3438, 3
        %v3567 = vmul.f32 %v3551, 0.5
        %v3568 = vmul.f32 %v3552, 0.5
        %v3569 = vmul.f32 %v3553, 0.5
        %v3570 = vmul.f32 %v3554, 0.5
        %v3571 = vmul.f32 %v3555, 0.5
        %v3572 = vmul.f32 %v3556, 0.5
        %v3573 = vmul.f32 %v3557, 0.5
        %v3574 = vmul.f32 %v3558, 0.5
        %v3575 = vtanh.pop %v3567
        %v3576 = vtanh.pop %v3568
        %v3577 = vtanh.pop %v3569
        %v3578 = vtanh.pop %v3570
        %v3579 = vtanh.pop %v3571
        %v3580 = vtanh.pop %v3572
        %v3581 = vtanh.pop %v3573
        %v3582 = vtanh.pop %v3574
        %v3583 = vmul.f32 %v3575, 0.5
        %v3584 = vmul.f32 %v3576, 0.5
        %v3585 = vmul.f32 %v3577, 0.5
        %v3586 = vmul.f32 %v3578, 0.5
        %v3587 = vmul.f32 %v3579, 0.5
        %v3588 = vmul.f32 %v3580, 0.5
        %v3589 = vmul.f32 %v3581, 0.5
        %v3590 = vmul.f32 %v3582, 0.5
        %v3591 = vadd.f32 %v3583, 0.5
        %v3592 = vadd.f32 %v3584, 0.5
        %v3593 = vadd.f32 %v3585, 0.5
        %v3594 = vadd.f32 %v3586, 0.5
        %v3595 = vadd.f32 %v3587, 0.5
        %v3596 = vadd.f32 %v3588, 0.5
        %v3597 = vadd.f32 %v3589, 0.5
        %v3598 = vadd.f32 %v3590, 0.5
        %v3599 = vmul.f32 %v3519, %v3065
        %v3600 = vmul.f32 %v3520, %v3066
        %v3601 = vmul.f32 %v3521, %v3067
        %v3602 = vmul.f32 %v3522, %v3068
        %v3603 = vmul.f32 %v3523, %v3069
        %v3604 = vmul.f32 %v3524, %v3070
        %v3605 = vmul.f32 %v3525, %v3071
        %v3606 = vmul.f32 %v3526, %v3072
        %v3607 = vmul.f32 %v3463, %v3543
        %v3608 = vmul.f32 %v3464, %v3544
        %v3609 = vmul.f32 %v3465, %v3545
        %v3610 = vmul.f32 %v3466, %v3546
        %v3611 = vmul.f32 %v3467, %v3547
        %v3612 = vmul.f32 %v3468, %v3548
        %v3613 = vmul.f32 %v3469, %v3549
        %v3614 = vmul.f32 %v3470, %v3550
        %v3615 = vadd.f32 %v3599, %v3607
        %v3616 = vadd.f32 %v3600, %v3608
        %v3617 = vadd.f32 %v3601, %v3609
        %v3618 = vadd.f32 %v3602, %v3610
        %v3619 = vadd.f32 %v3603, %v3611
        %v3620 = vadd.f32 %v3604, %v3612
        %v3621 = vadd.f32 %v3605, %v3613
        %v3622 = vadd.f32 %v3606, %v3614
        %v3623 = vtanh.pop %v3615
        %v3624 = vtanh.pop %v3616
        %v3625 = vtanh.pop %v3617
        %v3626 = vtanh.pop %v3618
        %v3627 = vtanh.pop %v3619
        %v3628 = vtanh.pop %v3620
        %v3629 = vtanh.pop %v3621
        %v3630 = vtanh.pop %v3622
        %v3631 = vmul.f32 %v3591, %v3623
        %v3632 = vmul.f32 %v3592, %v3624
        %v3633 = vmul.f32 %v3593, %v3625
        %v3634 = vmul.f32 %v3594, %v3626
        %v3635 = vmul.f32 %v3595, %v3627
        %v3636 = vmul.f32 %v3596, %v3628
        %v3637 = vmul.f32 %v3597, %v3629
        %v3638 = vmul.f32 %v3598, %v3630
        %v3647 = vcombine.low %v3631, %v3632
        %v3648 = vcombine.low %v3633, %v3634
        %v3649 = vcombine.low %v3635, %v3636
        %v3650 = vcombine.low %v3637, %v3638
        %v3652 = vunpack.c.l.s4 1966171168
        %v3653 = vunpack.c.0.s8 %v3652
        %v3654 = vlaneseq
        %v3655 = vshrl.u32 %v3654, 7
        %v3656 = vsub.s32 %v3653, %v3655
        %v3657 = vrot.slane %v3647, %v3656
        %v3659 = vunpack.c.l.s4 1966171168
        %v3660 = vunpack.c.0.s8 %v3659
        %v3661 = vlaneseq
        %v3662 = vshrl.u32 %v3661, 7
        %v3663 = vsub.s32 %v3660, %v3662
        %v3664 = vrot.slane %v3648, %v3663
        %v3666 = vunpack.c.l.s4 1966171168
        %v3667 = vunpack.c.0.s8 %v3666
        %v3668 = vlaneseq
        %v3669 = vshrl.u32 %v3668, 7
        %v3670 = vsub.s32 %v3667, %v3669
        %v3671 = vrot.slane %v3649, %v3670
        %v3673 = vunpack.c.l.s4 1966171168
        %v3674 = vunpack.c.0.s8 %v3673
        %v3675 = vlaneseq
        %v3676 = vshrl.u32 %v3675, 7
        %v3677 = vsub.s32 %v3674, %v3676
        %v3678 = vrot.slane %v3650, %v3677
        %v3679 = vcombine.low %v3657, %v3664
        %v3680 = vcombine.low %v3671, %v3678
        %v3682 = vunpack.c.l.s4 1966171168
        %v3683 = vunpack.c.0.s8 %v3682
        %v3684 = vlaneseq
        %v3685 = vshrl.u32 %v3684, 7
        %v3686 = vsub.s32 %v3683, %v3685
        %v3687 = vrot.slane %v3679, %v3686
        %v3689 = vunpack.c.l.s4 1966171168
        %v3690 = vunpack.c.0.s8 %v3689
        %v3691 = vlaneseq
        %v3692 = vshrl.u32 %v3691, 7
        %v3693 = vsub.s32 %v3690, %v3692
        %v3694 = vrot.slane %v3680, %v3693
        %v3695 = vcombine.low %v3687, %v3694
        %v3697 = vpack.c.bf16 %v3695, %v3695
        %v3698 = vpack.c.bf16 %v3334, %v3334
        %3699 = vmatprep.subr.bf16.mxu0 %v1794
        %3700 = vmatpush1.bf16.msra.mxu0 %v1793
        %3701 = vmatprep.subr.bf16.mxu0 %v1802
        %3702 = vmatpush1.bf16.msra.mxu0 %v1801
        %3703 = vmatprep.subr.bf16.mxu0 %v1810
        %3704 = vmatpush1.bf16.msra.mxu0 %v1809
        %3705 = vmatprep.subr.bf16.mxu0 %v1818
        %3706 = vmatpush1.bf16.msra.mxu0 %v1817
        %3707 = vmatprep.subr.bf16.mxu0 %v1826
        %3708 = vmatpush1.bf16.msra.mxu0 %v1825
        %3709 = vmatprep.subr.bf16.mxu0 %v1834
        %3710 = vmatpush1.bf16.msra.mxu0 %v1833
        %3711 = vmatprep.subr.bf16.mxu0 %v1842
        %3712 = vmatpush1.bf16.msra.mxu0 %v1841
        %3713 = vmatprep.subr.bf16.mxu0 %v1850
        %3714 = vmatpush1.bf16.msra.mxu0 %v1849
        %3715 = vmatprep.subr.bf16.mxu0 %v1858
        %3716 = vmatpush1.bf16.msra.mxu0 %v1857
        %3717 = vmatprep.subr.bf16.mxu0 %v1866
        %3718 = vmatpush1.bf16.msra.mxu0 %v1865
        %3719 = vmatprep.subr.bf16.mxu0 %v1874
        %3720 = vmatpush1.bf16.msra.mxu0 %v1873
        %3721 = vmatprep.subr.bf16.mxu0 %v1882
        %3722 = vmatpush1.bf16.msra.mxu0 %v1881
        %3723 = vmatprep.subr.bf16.mxu0 %v1890
        %3724 = vmatpush1.bf16.msra.mxu0 %v1889
        %3725 = vmatprep.subr.bf16.mxu0 %v1898
        %3726 = vmatpush1.bf16.msra.mxu0 %v1897
        %3727 = vmatprep.subr.bf16.mxu0 %v1906
        %3728 = vmatpush1.bf16.msra.mxu0 %v1905
        %3729 = vmatprep.subr.bf16.mxu0 %v1914
        %3730 = vmatpush1.bf16.msra.mxu0 %v1913
        %3731 = vmatprep.mubr.bf16.mxu0 %v3698
        %3732 = vmatmul.mubr.bf16.gmra.mrb[0].mxu0 %v3697
        %v3733 = vpop.f32.mrb[0].mxu0
        %v3734 = vadd.f32 0.0, %v3733
        %v3735 = vpop.f32.mrb[0].mxu0
        %v3736 = vadd.f32 0.0, %v3735
        %v3737 = vpop.f32.mrb[0].mxu0
        %v3738 = vpop.f32.mrb[0].mxu0
        %3739 = vdwg.mxu0
        %3740 = vmatprep.subr.bf16.mxu0 %v1796
        %3741 = vmatpush1.bf16.msra.mxu0 %v1795
        %3742 = vmatprep.subr.bf16.mxu0 %v1804
        %3743 = vmatpush1.bf16.msra.mxu0 %v1803
        %3744 = vmatprep.subr.bf16.mxu0 %v1812
        %3745 = vmatpush1.bf16.msra.mxu0 %v1811
        %3746 = vmatprep.subr.bf16.mxu0 %v1820
        %3747 = vmatpush1.bf16.msra.mxu0 %v1819
        %3748 = vmatprep.subr.bf16.mxu0 %v1828
        %3749 = vmatpush1.bf16.msra.mxu0 %v1827
        %3750 = vmatprep.subr.bf16.mxu0 %v1836
        %3751 = vmatpush1.bf16.msra.mxu0 %v1835
        %3752 = vmatprep.subr.bf16.mxu0 %v1844
        %3753 = vmatpush1.bf16.msra.mxu0 %v1843
        %3754 = vmatprep.subr.bf16.mxu0 %v1852
        %3755 = vmatpush1.bf16.msra.mxu0 %v1851
        %3756 = vmatprep.subr.bf16.mxu0 %v1860
        %3757 = vmatpush1.bf16.msra.mxu0 %v1859
        %3758 = vmatprep.subr.bf16.mxu0 %v1868
        %3759 = vmatpush1.bf16.msra.mxu0 %v1867
        %3760 = vmatprep.subr.bf16.mxu0 %v1876
        %3761 = vmatpush1.bf16.msra.mxu0 %v1875
        %3762 = vmatprep.subr.bf16.mxu0 %v1884
        %3763 = vmatpush1.bf16.msra.mxu0 %v1883
        %3764 = vmatprep.subr.bf16.mxu0 %v1892
        %3765 = vmatpush1.bf16.msra.mxu0 %v1891
        %3766 = vmatprep.subr.bf16.mxu0 %v1900
        %3767 = vmatpush1.bf16.msra.mxu0 %v1899
        %3768 = vmatprep.subr.bf16.mxu0 %v1908
        %3769 = vmatpush1.bf16.msra.mxu0 %v1907
        %3770 = vmatprep.subr.bf16.mxu0 %v1916
        %3771 = vmatpush1.bf16.msra.mxu0 %v1915
        %3772 = vmatprep.mubr.bf16.mxu0 %v3698
        %3773 = vmatmul.mubr.bf16.gmra.mrb[0].mxu0 %v3697
        %v3774 = vpop.f32.mrb[0].mxu0
        %v3775 = vadd.f32 0.0, %v3774
        %v3776 = vpop.f32.mrb[0].mxu0
        %v3777 = vadd.f32 0.0, %v3776
        %v3778 = vpop.f32.mrb[0].mxu0
        %v3779 = vpop.f32.mrb[0].mxu0
        %3780 = vdwg.mxu0
        %3781 = vmatprep.subr.bf16.mxu0 %v1798
        %3782 = vmatpush1.bf16.msra.mxu0 %v1797
        %3783 = vmatprep.subr.bf16.mxu0 %v1806
        %3784 = vmatpush1.bf16.msra.mxu0 %v1805
        %3785 = vmatprep.subr.bf16.mxu0 %v1814
        %3786 = vmatpush1.bf16.msra.mxu0 %v1813
        %3787 = vmatprep.subr.bf16.mxu0 %v1822
        %3788 = vmatpush1.bf16.msra.mxu0 %v1821
        %3789 = vmatprep.subr.bf16.mxu0 %v1830
        %3790 = vmatpush1.bf16.msra.mxu0 %v1829
        %3791 = vmatprep.subr.bf16.mxu0 %v1838
        %3792 = vmatpush1.bf16.msra.mxu0 %v1837
        %3793 = vmatprep.subr.bf16.mxu0 %v1846
        %3794 = vmatpush1.bf16.msra.mxu0 %v1845
        %3795 = vmatprep.subr.bf16.mxu0 %v1854
        %3796 = vmatpush1.bf16.msra.mxu0 %v1853
        %3797 = vmatprep.subr.bf16.mxu0 %v1862
        %3798 = vmatpush1.bf16.msra.mxu0 %v1861
        %3799 = vmatprep.subr.bf16.mxu0 %v1870
        %3800 = vmatpush1.bf16.msra.mxu0 %v1869
        %3801 = vmatprep.subr.bf16.mxu0 %v1878
        %3802 = vmatpush1.bf16.msra.mxu0 %v1877
        %3803 = vmatprep.subr.bf16.mxu0 %v1886
        %3804 = vmatpush1.bf16.msra.mxu0 %v1885
        %3805 = vmatprep.subr.bf16.mxu0 %v1894
        %3806 = vmatpush1.bf16.msra.mxu0 %v1893
        %3807 = vmatprep.subr.bf16.mxu0 %v1902
        %3808 = vmatpush1.bf16.msra.mxu0 %v1901
        %3809 = vmatprep.subr.bf16.mxu0 %v1910
        %3810 = vmatpush1.bf16.msra.mxu0 %v1909
        %3811 = vmatprep.subr.bf16.mxu0 %v1918
        %3812 = vmatpush1.bf16.msra.mxu0 %v1917
        %3813 = vmatprep.mubr.bf16.mxu0 %v3698
        %3814 = vmatmul.mubr.bf16.gmra.mrb[0].mxu0 %v3697
        %v3815 = vpop.f32.mrb[0].mxu0
        %v3816 = vadd.f32 0.0, %v3815
        %v3817 = vpop.f32.mrb[0].mxu0
        %v3818 = vadd.f32 0.0, %v3817
        %v3819 = vpop.f32.mrb[0].mxu0
        %v3820 = vpop.f32.mrb[0].mxu0
        %3821 = vdwg.mxu0
        %3822 = vmatprep.subr.bf16.mxu0 %v1800
        %3823 = vmatpush1.bf16.msra.mxu0 %v1799
        %3824 = vmatprep.subr.bf16.mxu0 %v1808
        %3825 = vmatpush1.bf16.msra.mxu0 %v1807
        %3826 = vmatprep.subr.bf16.mxu0 %v1816
        %3827 = vmatpush1.bf16.msra.mxu0 %v1815
        %3828 = vmatprep.subr.bf16.mxu0 %v1824
        %3829 = vmatpush1.bf16.msra.mxu0 %v1823
        %3830 = vmatprep.subr.bf16.mxu0 %v1832
        %3831 = vmatpush1.bf16.msra.mxu0 %v1831
        %3832 = vmatprep.subr.bf16.mxu0 %v1840
        %3833 = vmatpush1.bf16.msra.mxu0 %v1839
        %3834 = vmatprep.subr.bf16.mxu0 %v1848
        %3835 = vmatpush1.bf16.msra.mxu0 %v1847
        %3836 = vmatprep.subr.bf16.mxu0 %v1856
        %3837 = vmatpush1.bf16.msra.mxu0 %v1855
        %3838 = vmatprep.subr.bf16.mxu0 %v1864
        %3839 = vmatpush1.bf16.msra.mxu0 %v1863
        %3840 = vmatprep.subr.bf16.mxu0 %v1872
        %3841 = vmatpush1.bf16.msra.mxu0 %v1871
        %3842 = vmatprep.subr.bf16.mxu0 %v1880
        %3843 = vmatpush1.bf16.msra.mxu0 %v1879
        %3844 = vmatprep.subr.bf16.mxu0 %v1888
        %3845 = vmatpush1.bf16.msra.mxu0 %v1887
        %3846 = vmatprep.subr.bf16.mxu0 %v1896
        %3847 = vmatpush1.bf16.msra.mxu0 %v1895
        %3848 = vmatprep.subr.bf16.mxu0 %v1904
        %3849 = vmatpush1.bf16.msra.mxu0 %v1903
        %3850 = vmatprep.subr.bf16.mxu0 %v1912
        %3851 = vmatpush1.bf16.msra.mxu0 %v1911
        %3852 = vmatprep.subr.bf16.mxu0 %v1920
        %3853 = vmatpush1.bf16.msra.mxu0 %v1919
        %3854 = vmatprep.mubr.bf16.mxu0 %v3698
        %3855 = vmatmul.mubr.bf16.gmra.mrb[0].mxu0 %v3697
        %v3856 = vpop.f32.mrb[0].mxu0
        %v3857 = vadd.f32 0.0, %v3856
        %v3858 = vpop.f32.mrb[0].mxu0
        %v3859 = vadd.f32 0.0, %v3858
        %v3860 = vpop.f32.mrb[0].mxu0
        %v3861 = vpop.f32.mrb[0].mxu0
        %3862 = vdwg.mxu0
        %v3863 = vadd.f32 %v3816, %v981
        %v3864 = vadd.f32 %v3818, %v985
        %v3865 = vadd.f32 %v3857, %v989
        %v3866 = vadd.f32 %v3859, %v993
        %v3867 = vmul.f32 %v3863, 0.5
        %v3868 = vtanh.pop %v3867
        %v3869 = vmul.f32 %v3868, 0.5
        %v3870 = vadd.f32 %v3869, 0.5
        %v3871 = vmul.f32 %v3864, 0.5
        %v3872 = vtanh.pop %v3871
        %v3873 = vmul.f32 %v3872, 0.5
        %v3874 = vadd.f32 %v3873, 0.5
        %v3875 = vtanh.pop %v3865
        %v3876 = vmul.f32 %v3866, 0.5
        %v3877 = vtanh.pop %v3876
        %v3878 = vmul.f32 %v3877, 0.5
        %v3879 = vadd.f32 %v3878, 0.5
        %v3880 = vmul.f32 %v3874, %v3332
        %v3881 = vmul.f32 %v3870, %v3875
        %v3882 = vadd.f32 %v3880, %v3881
        %v3883 = vtanh.pop %v3882
        %v3884 = vmul.f32 %v3879, %v3883
        %s3885 = scalar_lea.vmem [#allocation2], 4
        %v3886 = vld [vmem:[%s3885] ss:$8 sm:$0xf]
        %s3887 = scalar_lea.vmem [#allocation2], 36
        %v3888 = vld [vmem:[%s3887] ss:$8 sm:$0xf]
        %s3889 = scalar_lea.vmem [#allocation2], 68
        %v3890 = vld [vmem:[%s3889] ss:$8 sm:$0xf]
        %s3891 = scalar_lea.vmem [#allocation2], 100
        %v3892 = vld [vmem:[%s3891] ss:$8 sm:$0xf]
        %s3893 = scalar_lea.vmem [#allocation2], 132
        %v3894 = vld [vmem:[%s3893] ss:$8 sm:$0xf]
        %s3895 = scalar_lea.vmem [#allocation2], 164
        %v3896 = vld [vmem:[%s3895] ss:$8 sm:$0xf]
        %s3897 = scalar_lea.vmem [#allocation2], 196
        %v3898 = vld [vmem:[%s3897] ss:$8 sm:$0xf]
        %s3899 = scalar_lea.vmem [#allocation2], 228
        %v3900 = vld [vmem:[%s3899] ss:$8 sm:$0xf]
        %v3905 = vcombine.low %v3734, %v3736
        %v3906 = vcombine.high %v3734, %v3736
        %v3907 = vcombine.low %v3775, %v3777
        %v3908 = vcombine.high %v3775, %v3777
        %v3910 = vunpack.c.l.s4 1966171168
        %v3911 = vunpack.c.0.s8 %v3910
        %v3912 = vlaneseq
        %v3913 = vshrl.u32 %v3912, 7
        %v3914 = vsub.s32 %v3911, %v3913
        %v3915 = vrot.slane %v3905, %v3914
        %v3917 = vunpack.c.l.s4 1966171168
        %v3918 = vunpack.c.0.s8 %v3917
        %v3919 = vlaneseq
        %v3920 = vshrl.u32 %v3919, 7
        %v3921 = vsub.s32 %v3918, %v3920
        %v3922 = vrot.slane %v3906, %v3921
        %v3924 = vunpack.c.l.s4 1966171168
        %v3925 = vunpack.c.0.s8 %v3924
        %v3926 = vlaneseq
        %v3927 = vshrl.u32 %v3926, 7
        %v3928 = vsub.s32 %v3925, %v3927
        %v3929 = vrot.slane %v3907, %v3928
        %v3931 = vunpack.c.l.s4 1966171168
        %v3932 = vunpack.c.0.s8 %v3931
        %v3933 = vlaneseq
        %v3934 = vshrl.u32 %v3933, 7
        %v3935 = vsub.s32 %v3932, %v3934
        %v3936 = vrot.slane %v3908, %v3935
        %v3937 = vcombine.low %v3915, %v3929
        %v3938 = vcombine.high %v3915, %v3929
        %v3939 = vcombine.low %v3922, %v3936
        %v3940 = vcombine.high %v3922, %v3936
        %v3942 = vunpack.c.l.s4 1966171168
        %v3943 = vunpack.c.0.s8 %v3942
        %v3944 = vlaneseq
        %v3945 = vshrl.u32 %v3944, 7
        %v3946 = vsub.s32 %v3943, %v3945
        %v3947 = vrot.slane %v3937, %v3946
        %v3949 = vunpack.c.l.s4 1966171168
        %v3950 = vunpack.c.0.s8 %v3949
        %v3951 = vlaneseq
        %v3952 = vshrl.u32 %v3951, 7
        %v3953 = vsub.s32 %v3950, %v3952
        %v3954 = vrot.slane %v3939, %v3953
        %v3956 = vunpack.c.l.s4 1966171168
        %v3957 = vunpack.c.0.s8 %v3956
        %v3958 = vlaneseq
        %v3959 = vshrl.u32 %v3958, 7
        %v3960 = vsub.s32 %v3957, %v3959
        %v3961 = vrot.slane %v3938, %v3960
        %v3963 = vunpack.c.l.s4 1966171168
        %v3964 = vunpack.c.0.s8 %v3963
        %v3965 = vlaneseq
        %v3966 = vshrl.u32 %v3965, 7
        %v3967 = vsub.s32 %v3964, %v3966
        %v3968 = vrot.slane %v3940, %v3967
        %v3969 = vcombine.high %v3947, %v3947
        %v3970 = vcombine.high %v3954, %v3954
        %v3971 = vcombine.high %v3961, %v3961
        %v3972 = vcombine.high %v3968, %v3968
        %v3981 = vadd.f32 %v3886, %v3947
        %v3982 = vadd.f32 %v3888, %v3961
        %v3983 = vadd.f32 %v3890, %v3969
        %v3984 = vadd.f32 %v3892, %v3971
        %v3985 = vadd.f32 %v3894, %v3954
        %v3986 = vadd.f32 %v3896, %v3968
        %v3987 = vadd.f32 %v3898, %v3970
        %v3988 = vadd.f32 %v3900, %v3972
        %v3989 = vmul.f32 %v3981, 0.5
        %v3990 = vmul.f32 %v3982, 0.5
        %v3991 = vmul.f32 %v3983, 0.5
        %v3992 = vmul.f32 %v3984, 0.5
        %v3993 = vmul.f32 %v3985, 0.5
        %v3994 = vmul.f32 %v3986, 0.5
        %v3995 = vmul.f32 %v3987, 0.5
        %v3996 = vmul.f32 %v3988, 0.5
        %v3997 = vtanh.pop %v3989
        %v3998 = vtanh.pop %v3990
        %v3999 = vtanh.pop %v3991
        %v4000 = vtanh.pop %v3992
        %v4001 = vtanh.pop %v3993
        %v4002 = vtanh.pop %v3994
        %v4003 = vtanh.pop %v3995
        %v4004 = vtanh.pop %v3996
        %v4005 = vmul.f32 %v3997, 0.5
        %v4006 = vmul.f32 %v3998, 0.5
        %v4007 = vmul.f32 %v3999, 0.5
        %v4008 = vmul.f32 %v4000, 0.5
        %v4009 = vmul.f32 %v4001, 0.5
        %v4010 = vmul.f32 %v4002, 0.5
        %v4011 = vmul.f32 %v4003, 0.5
        %v4012 = vmul.f32 %v4004, 0.5
        %v4013 = vadd.f32 %v4005, 0.5
        %v4014 = vadd.f32 %v4006, 0.5
        %v4015 = vadd.f32 %v4007, 0.5
        %v4016 = vadd.f32 %v4008, 0.5
        %v4017 = vadd.f32 %v4009, 0.5
        %v4018 = vadd.f32 %v4010, 0.5
        %v4019 = vadd.f32 %v4011, 0.5
        %v4020 = vadd.f32 %v4012, 0.5
        %v4029 = vrot.slane %v3981, 1
        %v4030 = vrot.slane %v3982, 1
        %v4031 = vrot.slane %v3983, 1
        %v4032 = vrot.slane %v3984, 1
        %v4033 = vrot.slane %v3985, 1
        %v4034 = vrot.slane %v3986, 1
        %v4035 = vrot.slane %v3987, 1
        %v4036 = vrot.slane %v3988, 1
        %v4045 = vmul.f32 %v4029, 0.5
        %v4046 = vmul.f32 %v4030, 0.5
        %v4047 = vmul.f32 %v4031, 0.5
        %v4048 = vmul.f32 %v4032, 0.5
        %v4049 = vmul.f32 %v4033, 0.5
        %v4050 = vmul.f32 %v4034, 0.5
        %v4051 = vmul.f32 %v4035, 0.5
        %v4052 = vmul.f32 %v4036, 0.5
        %v4053 = vtanh.pop %v4045
        %v4054 = vtanh.pop %v4046
        %v4055 = vtanh.pop %v4047
        %v4056 = vtanh.pop %v4048
        %v4057 = vtanh.pop %v4049
        %v4058 = vtanh.pop %v4050
        %v4059 = vtanh.pop %v4051
        %v4060 = vtanh.pop %v4052
        %v4061 = vmul.f32 %v4053, 0.5
        %v4062 = vmul.f32 %v4054, 0.5
        %v4063 = vmul.f32 %v4055, 0.5
        %v4064 = vmul.f32 %v4056, 0.5
        %v4065 = vmul.f32 %v4057, 0.5
        %v4066 = vmul.f32 %v4058, 0.5
        %v4067 = vmul.f32 %v4059, 0.5
        %v4068 = vmul.f32 %v4060, 0.5
        %v4069 = vadd.f32 %v4061, 0.5
        %v4070 = vadd.f32 %v4062, 0.5
        %v4071 = vadd.f32 %v4063, 0.5
        %v4072 = vadd.f32 %v4064, 0.5
        %v4073 = vadd.f32 %v4065, 0.5
        %v4074 = vadd.f32 %v4066, 0.5
        %v4075 = vadd.f32 %v4067, 0.5
        %v4076 = vadd.f32 %v4068, 0.5
        %v4077 = vrot.slane %v3981, 2
        %v4078 = vrot.slane %v3982, 2
        %v4079 = vrot.slane %v3983, 2
        %v4080 = vrot.slane %v3984, 2
        %v4081 = vrot.slane %v3985, 2
        %v4082 = vrot.slane %v3986, 2
        %v4083 = vrot.slane %v3987, 2
        %v4084 = vrot.slane %v3988, 2
        %v4093 = vtanh.pop %v4077
        %v4094 = vtanh.pop %v4078
        %v4095 = vtanh.pop %v4079
        %v4096 = vtanh.pop %v4080
        %v4097 = vtanh.pop %v4081
        %v4098 = vtanh.pop %v4082
        %v4099 = vtanh.pop %v4083
        %v4100 = vtanh.pop %v4084
        %v4101 = vrot.slane %v3981, 3
        %v4102 = vrot.slane %v3982, 3
        %v4103 = vrot.slane %v3983, 3
        %v4104 = vrot.slane %v3984, 3
        %v4105 = vrot.slane %v3985, 3
        %v4106 = vrot.slane %v3986, 3
        %v4107 = vrot.slane %v3987, 3
        %v4108 = vrot.slane %v3988, 3
        %v4117 = vmul.f32 %v4101, 0.5
        %v4118 = vmul.f32 %v4102, 0.5
        %v4119 = vmul.f32 %v4103, 0.5
        %v4120 = vmul.f32 %v4104, 0.5
        %v4121 = vmul.f32 %v4105, 0.5
        %v4122 = vmul.f32 %v4106, 0.5
        %v4123 = vmul.f32 %v4107, 0.5
        %v4124 = vmul.f32 %v4108, 0.5
        %v4125 = vtanh.pop %v4117
        %v4126 = vtanh.pop %v4118
        %v4127 = vtanh.pop %v4119
        %v4128 = vtanh.pop %v4120
        %v4129 = vtanh.pop %v4121
        %v4130 = vtanh.pop %v4122
        %v4131 = vtanh.pop %v4123
        %v4132 = vtanh.pop %v4124
        %v4133 = vmul.f32 %v4125, 0.5
        %v4134 = vmul.f32 %v4126, 0.5
        %v4135 = vmul.f32 %v4127, 0.5
        %v4136 = vmul.f32 %v4128, 0.5
        %v4137 = vmul.f32 %v4129, 0.5
        %v4138 = vmul.f32 %v4130, 0.5
        %v4139 = vmul.f32 %v4131, 0.5
        %v4140 = vmul.f32 %v4132, 0.5
        %v4141 = vadd.f32 %v4133, 0.5
        %v4142 = vadd.f32 %v4134, 0.5
        %v4143 = vadd.f32 %v4135, 0.5
        %v4144 = vadd.f32 %v4136, 0.5
        %v4145 = vadd.f32 %v4137, 0.5
        %v4146 = vadd.f32 %v4138, 0.5
        %v4147 = vadd.f32 %v4139, 0.5
        %v4148 = vadd.f32 %v4140, 0.5
        %v4149 = vmul.f32 %v4069, %v3615
        %v4150 = vmul.f32 %v4070, %v3616
        %v4151 = vmul.f32 %v4071, %v3617
        %v4152 = vmul.f32 %v4072, %v3618
        %v4153 = vmul.f32 %v4073, %v3619
        %v4154 = vmul.f32 %v4074, %v3620
        %v4155 = vmul.f32 %v4075, %v3621
        %v4156 = vmul.f32 %v4076, %v3622
        %v4157 = vmul.f32 %v4013, %v4093
        %v4158 = vmul.f32 %v4014, %v4094
        %v4159 = vmul.f32 %v4015, %v4095
        %v4160 = vmul.f32 %v4016, %v4096
        %v4161 = vmul.f32 %v4017, %v4097
        %v4162 = vmul.f32 %v4018, %v4098
        %v4163 = vmul.f32 %v4019, %v4099
        %v4164 = vmul.f32 %v4020, %v4100
        %v4165 = vadd.f32 %v4149, %v4157
        %v4166 = vadd.f32 %v4150, %v4158
        %v4167 = vadd.f32 %v4151, %v4159
        %v4168 = vadd.f32 %v4152, %v4160
        %v4169 = vadd.f32 %v4153, %v4161
        %v4170 = vadd.f32 %v4154, %v4162
        %v4171 = vadd.f32 %v4155, %v4163
        %v4172 = vadd.f32 %v4156, %v4164
        %v4173 = vtanh.pop %v4165
        %v4174 = vtanh.pop %v4166
        %v4175 = vtanh.pop %v4167
        %v4176 = vtanh.pop %v4168
        %v4177 = vtanh.pop %v4169
        %v4178 = vtanh.pop %v4170
        %v4179 = vtanh.pop %v4171
        %v4180 = vtanh.pop %v4172
        %v4181 = vmul.f32 %v4141, %v4173
        %v4182 = vmul.f32 %v4142, %v4174
        %v4183 = vmul.f32 %v4143, %v4175
        %v4184 = vmul.f32 %v4144, %v4176
        %v4185 = vmul.f32 %v4145, %v4177
        %v4186 = vmul.f32 %v4146, %v4178
        %v4187 = vmul.f32 %v4147, %v4179
        %v4188 = vmul.f32 %v4148, %v4180
        %v4197 = vcombine.low %v4181, %v4182
        %v4198 = vcombine.low %v4183, %v4184
        %v4199 = vcombine.low %v4185, %v4186
        %v4200 = vcombine.low %v4187, %v4188
        %v4202 = vunpack.c.l.s4 1966171168
        %v4203 = vunpack.c.0.s8 %v4202
        %v4204 = vlaneseq
        %v4205 = vshrl.u32 %v4204, 7
        %v4206 = vsub.s32 %v4203, %v4205
        %v4207 = vrot.slane %v4197, %v4206
        %v4209 = vunpack.c.l.s4 1966171168
        %v4210 = vunpack.c.0.s8 %v4209
        %v4211 = vlaneseq
        %v4212 = vshrl.u32 %v4211, 7
        %v4213 = vsub.s32 %v4210, %v4212
        %v4214 = vrot.slane %v4198, %v4213
        %v4216 = vunpack.c.l.s4 1966171168
        %v4217 = vunpack.c.0.s8 %v4216
        %v4218 = vlaneseq
        %v4219 = vshrl.u32 %v4218, 7
        %v4220 = vsub.s32 %v4217, %v4219
        %v4221 = vrot.slane %v4199, %v4220
        %v4223 = vunpack.c.l.s4 1966171168
        %v4224 = vunpack.c.0.s8 %v4223
        %v4225 = vlaneseq
        %v4226 = vshrl.u32 %v4225, 7
        %v4227 = vsub.s32 %v4224, %v4226
        %v4228 = vrot.slane %v4200, %v4227
        %v4229 = vcombine.low %v4207, %v4214
        %v4230 = vcombine.low %v4221, %v4228
        %v4232 = vunpack.c.l.s4 1966171168
        %v4233 = vunpack.c.0.s8 %v4232
        %v4234 = vlaneseq
        %v4235 = vshrl.u32 %v4234, 7
        %v4236 = vsub.s32 %v4233, %v4235
        %v4237 = vrot.slane %v4229, %v4236
        %v4239 = vunpack.c.l.s4 1966171168
        %v4240 = vunpack.c.0.s8 %v4239
        %v4241 = vlaneseq
        %v4242 = vshrl.u32 %v4241, 7
        %v4243 = vsub.s32 %v4240, %v4242
        %v4244 = vrot.slane %v4230, %v4243
        %v4245 = vcombine.low %v4237, %v4244
        %v4247 = vpack.c.bf16 %v4245, %v4245
        %v4248 = vpack.c.bf16 %v3884, %v3884
        %4249 = vmatprep.subr.bf16.mxu0 %v1794
        %4250 = vmatpush1.bf16.msra.mxu0 %v1793
        %4251 = vmatprep.subr.bf16.mxu0 %v1802
        %4252 = vmatpush1.bf16.msra.mxu0 %v1801
        %4253 = vmatprep.subr.bf16.mxu0 %v1810
        %4254 = vmatpush1.bf16.msra.mxu0 %v1809
        %4255 = vmatprep.subr.bf16.mxu0 %v1818
        %4256 = vmatpush1.bf16.msra.mxu0 %v1817
        %4257 = vmatprep.subr.bf16.mxu0 %v1826
        %4258 = vmatpush1.bf16.msra.mxu0 %v1825
        %4259 = vmatprep.subr.bf16.mxu0 %v1834
        %4260 = vmatpush1.bf16.msra.mxu0 %v1833
        %4261 = vmatprep.subr.bf16.mxu0 %v1842
        %4262 = vmatpush1.bf16.msra.mxu0 %v1841
        %4263 = vmatprep.subr.bf16.mxu0 %v1850
        %4264 = vmatpush1.bf16.msra.mxu0 %v1849
        %4265 = vmatprep.subr.bf16.mxu0 %v1858
        %4266 = vmatpush1.bf16.msra.mxu0 %v1857
        %4267 = vmatprep.subr.bf16.mxu0 %v1866
        %4268 = vmatpush1.bf16.msra.mxu0 %v1865
        %4269 = vmatprep.subr.bf16.mxu0 %v1874
        %4270 = vmatpush1.bf16.msra.mxu0 %v1873
        %4271 = vmatprep.subr.bf16.mxu0 %v1882
        %4272 = vmatpush1.bf16.msra.mxu0 %v1881
        %4273 = vmatprep.subr.bf16.mxu0 %v1890
        %4274 = vmatpush1.bf16.msra.mxu0 %v1889
        %4275 = vmatprep.subr.bf16.mxu0 %v1898
        %4276 = vmatpush1.bf16.msra.mxu0 %v1897
        %4277 = vmatprep.subr.bf16.mxu0 %v1906
        %4278 = vmatpush1.bf16.msra.mxu0 %v1905
        %4279 = vmatprep.subr.bf16.mxu0 %v1914
        %4280 = vmatpush1.bf16.msra.mxu0 %v1913
        %4281 = vmatprep.mubr.bf16.mxu0 %v4248
        %4282 = vmatmul.mubr.bf16.gmra.mrb[0].mxu0 %v4247
        %v4283 = vpop.f32.mrb[0].mxu0
        %v4284 = vadd.f32 0.0, %v4283
        %v4285 = vpop.f32.mrb[0].mxu0
        %v4286 = vadd.f32 0.0, %v4285
        %v4287 = vpop.f32.mrb[0].mxu0
        %v4288 = vpop.f32.mrb[0].mxu0
        %4289 = vdwg.mxu0
        %4290 = vmatprep.subr.bf16.mxu0 %v1796
        %4291 = vmatpush1.bf16.msra.mxu0 %v1795
        %4292 = vmatprep.subr.bf16.mxu0 %v1804
        %4293 = vmatpush1.bf16.msra.mxu0 %v1803
        %4294 = vmatprep.subr.bf16.mxu0 %v1812
        %4295 = vmatpush1.bf16.msra.mxu0 %v1811
        %4296 = vmatprep.subr.bf16.mxu0 %v1820
        %4297 = vmatpush1.bf16.msra.mxu0 %v1819
        %4298 = vmatprep.subr.bf16.mxu0 %v1828
        %4299 = vmatpush1.bf16.msra.mxu0 %v1827
        %4300 = vmatprep.subr.bf16.mxu0 %v1836
        %4301 = vmatpush1.bf16.msra.mxu0 %v1835
        %4302 = vmatprep.subr.bf16.mxu0 %v1844
        %4303 = vmatpush1.bf16.msra.mxu0 %v1843
        %4304 = vmatprep.subr.bf16.mxu0 %v1852
        %4305 = vmatpush1.bf16.msra.mxu0 %v1851
        %4306 = vmatprep.subr.bf16.mxu0 %v1860
        %4307 = vmatpush1.bf16.msra.mxu0 %v1859
        %4308 = vmatprep.subr.bf16.mxu0 %v1868
        %4309 = vmatpush1.bf16.msra.mxu0 %v1867
        %4310 = vmatprep.subr.bf16.mxu0 %v1876
        %4311 = vmatpush1.bf16.msra.mxu0 %v1875
        %4312 = vmatprep.subr.bf16.mxu0 %v1884
        %4313 = vmatpush1.bf16.msra.mxu0 %v1883
        %4314 = vmatprep.subr.bf16.mxu0 %v1892
        %4315 = vmatpush1.bf16.msra.mxu0 %v1891
        %4316 = vmatprep.subr.bf16.mxu0 %v1900
        %4317 = vmatpush1.bf16.msra.mxu0 %v1899
        %4318 = vmatprep.subr.bf16.mxu0 %v1908
        %4319 = vmatpush1.bf16.msra.mxu0 %v1907
        %4320 = vmatprep.subr.bf16.mxu0 %v1916
        %4321 = vmatpush1.bf16.msra.mxu0 %v1915
        %4322 = vmatprep.mubr.bf16.mxu0 %v4248
        %4323 = vmatmul.mubr.bf16.gmra.mrb[0].mxu0 %v4247
        %v4324 = vpop.f32.mrb[0].mxu0
        %v4325 = vadd.f32 0.0, %v4324
        %v4326 = vpop.f32.mrb[0].mxu0
        %v4327 = vadd.f32 0.0, %v4326
        %v4328 = vpop.f32.mrb[0].mxu0
        %v4329 = vpop.f32.mrb[0].mxu0
        %4330 = vdwg.mxu0
        %4331 = vmatprep.subr.bf16.mxu0 %v1798
        %4332 = vmatpush1.bf16.msra.mxu0 %v1797
        %4333 = vmatprep.subr.bf16.mxu0 %v1806
        %4334 = vmatpush1.bf16.msra.mxu0 %v1805
        %4335 = vmatprep.subr.bf16.mxu0 %v1814
        %4336 = vmatpush1.bf16.msra.mxu0 %v1813
        %4337 = vmatprep.subr.bf16.mxu0 %v1822
        %4338 = vmatpush1.bf16.msra.mxu0 %v1821
        %4339 = vmatprep.subr.bf16.mxu0 %v1830
        %4340 = vmatpush1.bf16.msra.mxu0 %v1829
        %4341 = vmatprep.subr.bf16.mxu0 %v1838
        %4342 = vmatpush1.bf16.msra.mxu0 %v1837
        %4343 = vmatprep.subr.bf16.mxu0 %v1846
        %4344 = vmatpush1.bf16.msra.mxu0 %v1845
        %4345 = vmatprep.subr.bf16.mxu0 %v1854
        %4346 = vmatpush1.bf16.msra.mxu0 %v1853
        %4347 = vmatprep.subr.bf16.mxu0 %v1862
        %4348 = vmatpush1.bf16.msra.mxu0 %v1861
        %4349 = vmatprep.subr.bf16.mxu0 %v1870
        %4350 = vmatpush1.bf16.msra.mxu0 %v1869
        %4351 = vmatprep.subr.bf16.mxu0 %v1878
        %4352 = vmatpush1.bf16.msra.mxu0 %v1877
        %4353 = vmatprep.subr.bf16.mxu0 %v1886
        %4354 = vmatpush1.bf16.msra.mxu0 %v1885
        %4355 = vmatprep.subr.bf16.mxu0 %v1894
        %4356 = vmatpush1.bf16.msra.mxu0 %v1893
        %4357 = vmatprep.subr.bf16.mxu0 %v1902
        %4358 = vmatpush1.bf16.msra.mxu0 %v1901
        %4359 = vmatprep.subr.bf16.mxu0 %v1910
        %4360 = vmatpush1.bf16.msra.mxu0 %v1909
        %4361 = vmatprep.subr.bf16.mxu0 %v1918
        %4362 = vmatpush1.bf16.msra.mxu0 %v1917
        %4363 = vmatprep.mubr.bf16.mxu0 %v4248
        %4364 = vmatmul.mubr.bf16.gmra.mrb[0].mxu0 %v4247
        %v4365 = vpop.f32.mrb[0].mxu0
        %v4366 = vadd.f32 0.0, %v4365
        %v4367 = vpop.f32.mrb[0].mxu0
        %v4368 = vadd.f32 0.0, %v4367
        %v4369 = vpop.f32.mrb[0].mxu0
        %v4370 = vpop.f32.mrb[0].mxu0
        %4371 = vdwg.mxu0
        %4372 = vmatprep.subr.bf16.mxu0 %v1800
        %4373 = vmatpush1.bf16.msra.mxu0 %v1799
        %4374 = vmatprep.subr.bf16.mxu0 %v1808
        %4375 = vmatpush1.bf16.msra.mxu0 %v1807
        %4376 = vmatprep.subr.bf16.mxu0 %v1816
        %4377 = vmatpush1.bf16.msra.mxu0 %v1815
        %4378 = vmatprep.subr.bf16.mxu0 %v1824
        %4379 = vmatpush1.bf16.msra.mxu0 %v1823
        %4380 = vmatprep.subr.bf16.mxu0 %v1832
        %4381 = vmatpush1.bf16.msra.mxu0 %v1831
        %4382 = vmatprep.subr.bf16.mxu0 %v1840
        %4383 = vmatpush1.bf16.msra.mxu0 %v1839
        %4384 = vmatprep.subr.bf16.mxu0 %v1848
        %4385 = vmatpush1.bf16.msra.mxu0 %v1847
        %4386 = vmatprep.subr.bf16.mxu0 %v1856
        %4387 = vmatpush1.bf16.msra.mxu0 %v1855
        %4388 = vmatprep.subr.bf16.mxu0 %v1864
        %4389 = vmatpush1.bf16.msra.mxu0 %v1863
        %4390 = vmatprep.subr.bf16.mxu0 %v1872
        %4391 = vmatpush1.bf16.msra.mxu0 %v1871
        %4392 = vmatprep.subr.bf16.mxu0 %v1880
        %4393 = vmatpush1.bf16.msra.mxu0 %v1879
        %4394 = vmatprep.subr.bf16.mxu0 %v1888
        %4395 = vmatpush1.bf16.msra.mxu0 %v1887
        %4396 = vmatprep.subr.bf16.mxu0 %v1896
        %4397 = vmatpush1.bf16.msra.mxu0 %v1895
        %4398 = vmatprep.subr.bf16.mxu0 %v1904
        %4399 = vmatpush1.bf16.msra.mxu0 %v1903
        %4400 = vmatprep.subr.bf16.mxu0 %v1912
        %4401 = vmatpush1.bf16.msra.mxu0 %v1911
        %4402 = vmatprep.subr.bf16.mxu0 %v1920
        %4403 = vmatpush1.bf16.msra.mxu0 %v1919
        %4404 = vmatprep.mubr.bf16.mxu0 %v4248
        %4405 = vmatmul.mubr.bf16.gmra.mrb[0].mxu0 %v4247
        %v4406 = vpop.f32.mrb[0].mxu0
        %v4407 = vadd.f32 0.0, %v4406
        %v4408 = vpop.f32.mrb[0].mxu0
        %v4409 = vadd.f32 0.0, %v4408
        %v4410 = vpop.f32.mrb[0].mxu0
        %v4411 = vpop.f32.mrb[0].mxu0
        %4412 = vdwg.mxu0
        %v4413 = vadd.f32 %v4366, %v981
        %v4414 = vadd.f32 %v4368, %v985
        %v4415 = vadd.f32 %v4407, %v989
        %v4416 = vadd.f32 %v4409, %v993
        %v4417 = vmul.f32 %v4413, 0.5
        %v4418 = vtanh.pop %v4417
        %v4419 = vmul.f32 %v4418, 0.5
        %v4420 = vadd.f32 %v4419, 0.5
        %v4421 = vmul.f32 %v4414, 0.5
        %v4422 = vtanh.pop %v4421
        %v4423 = vmul.f32 %v4422, 0.5
        %v4424 = vadd.f32 %v4423, 0.5
        %v4425 = vtanh.pop %v4415
        %v4426 = vmul.f32 %v4416, 0.5
        %v4427 = vtanh.pop %v4426
        %v4428 = vmul.f32 %v4427, 0.5
        %v4429 = vadd.f32 %v4428, 0.5
        %v4430 = vmul.f32 %v4424, %v3882
        %v4431 = vmul.f32 %v4420, %v4425
        %v4432 = vadd.f32 %v4430, %v4431
        %v4433 = vtanh.pop %v4432
        %v4434 = vmul.f32 %v4429, %v4433
        %s4435 = scalar_lea.vmem [#allocation2], 5
        %v4436 = vld [vmem:[%s4435] ss:$8 sm:$0xf]
        %s4437 = scalar_lea.vmem [#allocation2], 37
        %v4438 = vld [vmem:[%s4437] ss:$8 sm:$0xf]
        %s4439 = scalar_lea.vmem [#allocation2], 69
        %v4440 = vld [vmem:[%s4439] ss:$8 sm:$0xf]
        %s4441 = scalar_lea.vmem [#allocation2], 101
        %v4442 = vld [vmem:[%s4441] ss:$8 sm:$0xf]
        %s4443 = scalar_lea.vmem [#allocation2], 133
        %v4444 = vld [vmem:[%s4443] ss:$8 sm:$0xf]
        %s4445 = scalar_lea.vmem [#allocation2], 165
        %v4446 = vld [vmem:[%s4445] ss:$8 sm:$0xf]
        %s4447 = scalar_lea.vmem [#allocation2], 197
        %v4448 = vld [vmem:[%s4447] ss:$8 sm:$0xf]
        %s4449 = scalar_lea.vmem [#allocation2], 229
        %v4450 = vld [vmem:[%s4449] ss:$8 sm:$0xf]
        %v4455 = vcombine.low %v4284, %v4286
        %v4456 = vcombine.high %v4284, %v4286
        %v4457 = vcombine.low %v4325, %v4327
        %v4458 = vcombine.high %v4325, %v4327
        %v4460 = vunpack.c.l.s4 1966171168
        %v4461 = vunpack.c.0.s8 %v4460
        %v4462 = vlaneseq
        %v4463 = vshrl.u32 %v4462, 7
        %v4464 = vsub.s32 %v4461, %v4463
        %v4465 = vrot.slane %v4455, %v4464
        %v4467 = vunpack.c.l.s4 1966171168
        %v4468 = vunpack.c.0.s8 %v4467
        %v4469 = vlaneseq
        %v4470 = vshrl.u32 %v4469, 7
        %v4471 = vsub.s32 %v4468, %v4470
        %v4472 = vrot.slane %v4456, %v4471
        %v4474 = vunpack.c.l.s4 1966171168
        %v4475 = vunpack.c.0.s8 %v4474
        %v4476 = vlaneseq
        %v4477 = vshrl.u32 %v4476, 7
        %v4478 = vsub.s32 %v4475, %v4477
        %v4479 = vrot.slane %v4457, %v4478
        %v4481 = vunpack.c.l.s4 1966171168
        %v4482 = vunpack.c.0.s8 %v4481
        %v4483 = vlaneseq
        %v4484 = vshrl.u32 %v4483, 7
        %v4485 = vsub.s32 %v4482, %v4484
        %v4486 = vrot.slane %v4458, %v4485
        %v4487 = vcombine.low %v4465, %v4479
        %v4488 = vcombine.high %v4465, %v4479
        %v4489 = vcombine.low %v4472, %v4486
        %v4490 = vcombine.high %v4472, %v4486
        %v4492 = vunpack.c.l.s4 1966171168
        %v4493 = vunpack.c.0.s8 %v4492
        %v4494 = vlaneseq
        %v4495 = vshrl.u32 %v4494, 7
        %v4496 = vsub.s32 %v4493, %v4495
        %v4497 = vrot.slane %v4487, %v4496
        %v4499 = vunpack.c.l.s4 1966171168
        %v4500 = vunpack.c.0.s8 %v4499
        %v4501 = vlaneseq
        %v4502 = vshrl.u32 %v4501, 7
        %v4503 = vsub.s32 %v4500, %v4502
        %v4504 = vrot.slane %v4489, %v4503
        %v4506 = vunpack.c.l.s4 1966171168
        %v4507 = vunpack.c.0.s8 %v4506
        %v4508 = vlaneseq
        %v4509 = vshrl.u32 %v4508, 7
        %v4510 = vsub.s32 %v4507, %v4509
        %v4511 = vrot.slane %v4488, %v4510
        %v4513 = vunpack.c.l.s4 1966171168
        %v4514 = vunpack.c.0.s8 %v4513
        %v4515 = vlaneseq
        %v4516 = vshrl.u32 %v4515, 7
        %v4517 = vsub.s32 %v4514, %v4516
        %v4518 = vrot.slane %v4490, %v4517
        %v4519 = vcombine.high %v4497, %v4497
        %v4520 = vcombine.high %v4504, %v4504
        %v4521 = vcombine.high %v4511, %v4511
        %v4522 = vcombine.high %v4518, %v4518
        %v4531 = vadd.f32 %v4436, %v4497
        %v4532 = vadd.f32 %v4438, %v4511
        %v4533 = vadd.f32 %v4440, %v4519
        %v4534 = vadd.f32 %v4442, %v4521
        %v4535 = vadd.f32 %v4444, %v4504
        %v4536 = vadd.f32 %v4446, %v4518
        %v4537 = vadd.f32 %v4448, %v4520
        %v4538 = vadd.f32 %v4450, %v4522
        %v4539 = vmul.f32 %v4531, 0.5
        %v4540 = vmul.f32 %v4532, 0.5
        %v4541 = vmul.f32 %v4533, 0.5
        %v4542 = vmul.f32 %v4534, 0.5
        %v4543 = vmul.f32 %v4535, 0.5
        %v4544 = vmul.f32 %v4536, 0.5
        %v4545 = vmul.f32 %v4537, 0.5
        %v4546 = vmul.f32 %v4538, 0.5
        %v4547 = vtanh.pop %v4539
        %v4548 = vtanh.pop %v4540
        %v4549 = vtanh.pop %v4541
        %v4550 = vtanh.pop %v4542
        %v4551 = vtanh.pop %v4543
        %v4552 = vtanh.pop %v4544
        %v4553 = vtanh.pop %v4545
        %v4554 = vtanh.pop %v4546
        %v4555 = vmul.f32 %v4547, 0.5
        %v4556 = vmul.f32 %v4548, 0.5
        %v4557 = vmul.f32 %v4549, 0.5
        %v4558 = vmul.f32 %v4550, 0.5
        %v4559 = vmul.f32 %v4551, 0.5
        %v4560 = vmul.f32 %v4552, 0.5
        %v4561 = vmul.f32 %v4553, 0.5
        %v4562 = vmul.f32 %v4554, 0.5
        %v4563 = vadd.f32 %v4555, 0.5
        %v4564 = vadd.f32 %v4556, 0.5
        %v4565 = vadd.f32 %v4557, 0.5
        %v4566 = vadd.f32 %v4558, 0.5
        %v4567 = vadd.f32 %v4559, 0.5
        %v4568 = vadd.f32 %v4560, 0.5
        %v4569 = vadd.f32 %v4561, 0.5
        %v4570 = vadd.f32 %v4562, 0.5
        %v4579 = vrot.slane %v4531, 1
        %v4580 = vrot.slane %v4532, 1
        %v4581 = vrot.slane %v4533, 1
        %v4582 = vrot.slane %v4534, 1
        %v4583 = vrot.slane %v4535, 1
        %v4584 = vrot.slane %v4536, 1
        %v4585 = vrot.slane %v4537, 1
        %v4586 = vrot.slane %v4538, 1
        %v4595 = vmul.f32 %v4579, 0.5
        %v4596 = vmul.f32 %v4580, 0.5
        %v4597 = vmul.f32 %v4581, 0.5
        %v4598 = vmul.f32 %v4582, 0.5
        %v4599 = vmul.f32 %v4583, 0.5
        %v4600 = vmul.f32 %v4584, 0.5
        %v4601 = vmul.f32 %v4585, 0.5
        %v4602 = vmul.f32 %v4586, 0.5
        %v4603 = vtanh.pop %v4595
        %v4604 = vtanh.pop %v4596
        %v4605 = vtanh.pop %v4597
        %v4606 = vtanh.pop %v4598
        %v4607 = vtanh.pop %v4599
        %v4608 = vtanh.pop %v4600
        %v4609 = vtanh.pop %v4601
        %v4610 = vtanh.pop %v4602
        %v4611 = vmul.f32 %v4603, 0.5
        %v4612 = vmul.f32 %v4604, 0.5
        %v4613 = vmul.f32 %v4605, 0.5
        %v4614 = vmul.f32 %v4606, 0.5
        %v4615 = vmul.f32 %v4607, 0.5
        %v4616 = vmul.f32 %v4608, 0.5
        %v4617 = vmul.f32 %v4609, 0.5
        %v4618 = vmul.f32 %v4610, 0.5
        %v4619 = vadd.f32 %v4611, 0.5
        %v4620 = vadd.f32 %v4612, 0.5
        %v4621 = vadd.f32 %v4613, 0.5
        %v4622 = vadd.f32 %v4614, 0.5
        %v4623 = vadd.f32 %v4615, 0.5
        %v4624 = vadd.f32 %v4616, 0.5
        %v4625 = vadd.f32 %v4617, 0.5
        %v4626 = vadd.f32 %v4618, 0.5
        %v4627 = vrot.slane %v4531, 2
        %v4628 = vrot.slane %v4532, 2
        %v4629 = vrot.slane %v4533, 2
        %v4630 = vrot.slane %v4534, 2
        %v4631 = vrot.slane %v4535, 2
        %v4632 = vrot.slane %v4536, 2
        %v4633 = vrot.slane %v4537, 2
        %v4634 = vrot.slane %v4538, 2
        %v4643 = vtanh.pop %v4627
        %v4644 = vtanh.pop %v4628
        %v4645 = vtanh.pop %v4629
        %v4646 = vtanh.pop %v4630
        %v4647 = vtanh.pop %v4631
        %v4648 = vtanh.pop %v4632
        %v4649 = vtanh.pop %v4633
        %v4650 = vtanh.pop %v4634
        %v4651 = vrot.slane %v4531, 3
        %v4652 = vrot.slane %v4532, 3
        %v4653 = vrot.slane %v4533, 3
        %v4654 = vrot.slane %v4534, 3
        %v4655 = vrot.slane %v4535, 3
        %v4656 = vrot.slane %v4536, 3
        %v4657 = vrot.slane %v4537, 3
        %v4658 = vrot.slane %v4538, 3
        %v4667 = vmul.f32 %v4651, 0.5
        %v4668 = vmul.f32 %v4652, 0.5
        %v4669 = vmul.f32 %v4653, 0.5
        %v4670 = vmul.f32 %v4654, 0.5
        %v4671 = vmul.f32 %v4655, 0.5
        %v4672 = vmul.f32 %v4656, 0.5
        %v4673 = vmul.f32 %v4657, 0.5
        %v4674 = vmul.f32 %v4658, 0.5
        %v4675 = vtanh.pop %v4667
        %v4676 = vtanh.pop %v4668
        %v4677 = vtanh.pop %v4669
        %v4678 = vtanh.pop %v4670
        %v4679 = vtanh.pop %v4671
        %v4680 = vtanh.pop %v4672
        %v4681 = vtanh.pop %v4673
        %v4682 = vtanh.pop %v4674
        %v4683 = vmul.f32 %v4675, 0.5
        %v4684 = vmul.f32 %v4676, 0.5
        %v4685 = vmul.f32 %v4677, 0.5
        %v4686 = vmul.f32 %v4678, 0.5
        %v4687 = vmul.f32 %v4679, 0.5
        %v4688 = vmul.f32 %v4680, 0.5
        %v4689 = vmul.f32 %v4681, 0.5
        %v4690 = vmul.f32 %v4682, 0.5
        %v4691 = vadd.f32 %v4683, 0.5
        %v4692 = vadd.f32 %v4684, 0.5
        %v4693 = vadd.f32 %v4685, 0.5
        %v4694 = vadd.f32 %v4686, 0.5
        %v4695 = vadd.f32 %v4687, 0.5
        %v4696 = vadd.f32 %v4688, 0.5
        %v4697 = vadd.f32 %v4689, 0.5
        %v4698 = vadd.f32 %v4690, 0.5
        %v4699 = vmul.f32 %v4619, %v4165
        %v4700 = vmul.f32 %v4620, %v4166
        %v4701 = vmul.f32 %v4621, %v4167
        %v4702 = vmul.f32 %v4622, %v4168
        %v4703 = vmul.f32 %v4623, %v4169
        %v4704 = vmul.f32 %v4624, %v4170
        %v4705 = vmul.f32 %v4625, %v4171
        %v4706 = vmul.f32 %v4626, %v4172
        %v4707 = vmul.f32 %v4563, %v4643
        %v4708 = vmul.f32 %v4564, %v4644
        %v4709 = vmul.f32 %v4565, %v4645
        %v4710 = vmul.f32 %v4566, %v4646
        %v4711 = vmul.f32 %v4567, %v4647
        %v4712 = vmul.f32 %v4568, %v4648
        %v4713 = vmul.f32 %v4569, %v4649
        %v4714 = vmul.f32 %v4570, %v4650
        %v4715 = vadd.f32 %v4699, %v4707
        %v4716 = vadd.f32 %v4700, %v4708
        %v4717 = vadd.f32 %v4701, %v4709
        %v4718 = vadd.f32 %v4702, %v4710
        %v4719 = vadd.f32 %v4703, %v4711
        %v4720 = vadd.f32 %v4704, %v4712
        %v4721 = vadd.f32 %v4705, %v4713
        %v4722 = vadd.f32 %v4706, %v4714
        %v4723 = vtanh.pop %v4715
        %v4724 = vtanh.pop %v4716
        %v4725 = vtanh.pop %v4717
        %v4726 = vtanh.pop %v4718
        %v4727 = vtanh.pop %v4719
        %v4728 = vtanh.pop %v4720
        %v4729 = vtanh.pop %v4721
        %v4730 = vtanh.pop %v4722
        %v4731 = vmul.f32 %v4691, %v4723
        %v4732 = vmul.f32 %v4692, %v4724
        %v4733 = vmul.f32 %v4693, %v4725
        %v4734 = vmul.f32 %v4694, %v4726
        %v4735 = vmul.f32 %v4695, %v4727
        %v4736 = vmul.f32 %v4696, %v4728
        %v4737 = vmul.f32 %v4697, %v4729
        %v4738 = vmul.f32 %v4698, %v4730
        %v4747 = vcombine.low %v4731, %v4732
        %v4748 = vcombine.low %v4733, %v4734
        %v4749 = vcombine.low %v4735, %v4736
        %v4750 = vcombine.low %v4737, %v4738
        %v4752 = vunpack.c.l.s4 1966171168
        %v4753 = vunpack.c.0.s8 %v4752
        %v4754 = vlaneseq
        %v4755 = vshrl.u32 %v4754, 7
        %v4756 = vsub.s32 %v4753, %v4755
        %v4757 = vrot.slane %v4747, %v4756
        %v4759 = vunpack.c.l.s4 1966171168
        %v4760 = vunpack.c.0.s8 %v4759
        %v4761 = vlaneseq
        %v4762 = vshrl.u32 %v4761, 7
        %v4763 = vsub.s32 %v4760, %v4762
        %v4764 = vrot.slane %v4748, %v4763
        %v4766 = vunpack.c.l.s4 1966171168
        %v4767 = vunpack.c.0.s8 %v4766
        %v4768 = vlaneseq
        %v4769 = vshrl.u32 %v4768, 7
        %v4770 = vsub.s32 %v4767, %v4769
        %v4771 = vrot.slane %v4749, %v4770
        %v4773 = vunpack.c.l.s4 1966171168
        %v4774 = vunpack.c.0.s8 %v4773
        %v4775 = vlaneseq
        %v4776 = vshrl.u32 %v4775, 7
        %v4777 = vsub.s32 %v4774, %v4776
        %v4778 = vrot.slane %v4750, %v4777
        %v4779 = vcombine.low %v4757, %v4764
        %v4780 = vcombine.low %v4771, %v4778
        %v4782 = vunpack.c.l.s4 1966171168
        %v4783 = vunpack.c.0.s8 %v4782
        %v4784 = vlaneseq
        %v4785 = vshrl.u32 %v4784, 7
        %v4786 = vsub.s32 %v4783, %v4785
        %v4787 = vrot.slane %v4779, %v4786
        %v4789 = vunpack.c.l.s4 1966171168
        %v4790 = vunpack.c.0.s8 %v4789
        %v4791 = vlaneseq
        %v4792 = vshrl.u32 %v4791, 7
        %v4793 = vsub.s32 %v4790, %v4792
        %v4794 = vrot.slane %v4780, %v4793
        %v4795 = vcombine.low %v4787, %v4794
        %v4797 = vpack.c.bf16 %v4795, %v4795
        %v4798 = vpack.c.bf16 %v4434, %v4434
        %4799 = vmatprep.subr.bf16.mxu0 %v1794
        %4800 = vmatpush1.bf16.msra.mxu0 %v1793
        %4801 = vmatprep.subr.bf16.mxu0 %v1802
        %4802 = vmatpush1.bf16.msra.mxu0 %v1801
        %4803 = vmatprep.subr.bf16.mxu0 %v1810
        %4804 = vmatpush1.bf16.msra.mxu0 %v1809
        %4805 = vmatprep.subr.bf16.mxu0 %v1818
        %4806 = vmatpush1.bf16.msra.mxu0 %v1817
        %4807 = vmatprep.subr.bf16.mxu0 %v1826
        %4808 = vmatpush1.bf16.msra.mxu0 %v1825
        %4809 = vmatprep.subr.bf16.mxu0 %v1834
        %4810 = vmatpush1.bf16.msra.mxu0 %v1833
        %4811 = vmatprep.subr.bf16.mxu0 %v1842
        %4812 = vmatpush1.bf16.msra.mxu0 %v1841
        %4813 = vmatprep.subr.bf16.mxu0 %v1850
        %4814 = vmatpush1.bf16.msra.mxu0 %v1849
        %4815 = vmatprep.subr.bf16.mxu0 %v1858
        %4816 = vmatpush1.bf16.msra.mxu0 %v1857
        %4817 = vmatprep.subr.bf16.mxu0 %v1866
        %4818 = vmatpush1.bf16.msra.mxu0 %v1865
        %4819 = vmatprep.subr.bf16.mxu0 %v1874
        %4820 = vmatpush1.bf16.msra.mxu0 %v1873
        %4821 = vmatprep.subr.bf16.mxu0 %v1882
        %4822 = vmatpush1.bf16.msra.mxu0 %v1881
        %4823 = vmatprep.subr.bf16.mxu0 %v1890
        %4824 = vmatpush1.bf16.msra.mxu0 %v1889
        %4825 = vmatprep.subr.bf16.mxu0 %v1898
        %4826 = vmatpush1.bf16.msra.mxu0 %v1897
        %4827 = vmatprep.subr.bf16.mxu0 %v1906
        %4828 = vmatpush1.bf16.msra.mxu0 %v1905
        %4829 = vmatprep.subr.bf16.mxu0 %v1914
        %4830 = vmatpush1.bf16.msra.mxu0 %v1913
        %4831 = vmatprep.mubr.bf16.mxu0 %v4798
        %4832 = vmatmul.mubr.bf16.gmra.mrb[0].mxu0 %v4797
        %v4833 = vpop.f32.mrb[0].mxu0
        %v4834 = vadd.f32 0.0, %v4833
        %v4835 = vpop.f32.mrb[0].mxu0
        %v4836 = vadd.f32 0.0, %v4835
        %v4837 = vpop.f32.mrb[0].mxu0
        %v4838 = vpop.f32.mrb[0].mxu0
        %4839 = vdwg.mxu0
        %4840 = vmatprep.subr.bf16.mxu0 %v1796
        %4841 = vmatpush1.bf16.msra.mxu0 %v1795
        %4842 = vmatprep.subr.bf16.mxu0 %v1804
        %4843 = vmatpush1.bf16.msra.mxu0 %v1803
        %4844 = vmatprep.subr.bf16.mxu0 %v1812
        %4845 = vmatpush1.bf16.msra.mxu0 %v1811
        %4846 = vmatprep.subr.bf16.mxu0 %v1820
        %4847 = vmatpush1.bf16.msra.mxu0 %v1819
        %4848 = vmatprep.subr.bf16.mxu0 %v1828
        %4849 = vmatpush1.bf16.msra.mxu0 %v1827
        %4850 = vmatprep.subr.bf16.mxu0 %v1836
        %4851 = vmatpush1.bf16.msra.mxu0 %v1835
        %4852 = vmatprep.subr.bf16.mxu0 %v1844
        %4853 = vmatpush1.bf16.msra.mxu0 %v1843
        %4854 = vmatprep.subr.bf16.mxu0 %v1852
        %4855 = vmatpush1.bf16.msra.mxu0 %v1851
        %4856 = vmatprep.subr.bf16.mxu0 %v1860
        %4857 = vmatpush1.bf16.msra.mxu0 %v1859
        %4858 = vmatprep.subr.bf16.mxu0 %v1868
        %4859 = vmatpush1.bf16.msra.mxu0 %v1867
        %4860 = vmatprep.subr.bf16.mxu0 %v1876
        %4861 = vmatpush1.bf16.msra.mxu0 %v1875
        %4862 = vmatprep.subr.bf16.mxu0 %v1884
        %4863 = vmatpush1.bf16.msra.mxu0 %v1883
        %4864 = vmatprep.subr.bf16.mxu0 %v1892
        %4865 = vmatpush1.bf16.msra.mxu0 %v1891
        %4866 = vmatprep.subr.bf16.mxu0 %v1900
        %4867 = vmatpush1.bf16.msra.mxu0 %v1899
        %4868 = vmatprep.subr.bf16.mxu0 %v1908
        %4869 = vmatpush1.bf16.msra.mxu0 %v1907
        %4870 = vmatprep.subr.bf16.mxu0 %v1916
        %4871 = vmatpush1.bf16.msra.mxu0 %v1915
        %4872 = vmatprep.mubr.bf16.mxu0 %v4798
        %4873 = vmatmul.mubr.bf16.gmra.mrb[0].mxu0 %v4797
        %v4874 = vpop.f32.mrb[0].mxu0
        %v4875 = vadd.f32 0.0, %v4874
        %v4876 = vpop.f32.mrb[0].mxu0
        %v4877 = vadd.f32 0.0, %v4876
        %v4878 = vpop.f32.mrb[0].mxu0
        %v4879 = vpop.f32.mrb[0].mxu0
        %4880 = vdwg.mxu0
        %4881 = vmatprep.subr.bf16.mxu0 %v1798
        %4882 = vmatpush1.bf16.msra.mxu0 %v1797
        %4883 = vmatprep.subr.bf16.mxu0 %v1806
        %4884 = vmatpush1.bf16.msra.mxu0 %v1805
        %4885 = vmatprep.subr.bf16.mxu0 %v1814
        %4886 = vmatpush1.bf16.msra.mxu0 %v1813
        %4887 = vmatprep.subr.bf16.mxu0 %v1822
        %4888 = vmatpush1.bf16.msra.mxu0 %v1821
        %4889 = vmatprep.subr.bf16.mxu0 %v1830
        %4890 = vmatpush1.bf16.msra.mxu0 %v1829
        %4891 = vmatprep.subr.bf16.mxu0 %v1838
        %4892 = vmatpush1.bf16.msra.mxu0 %v1837
        %4893 = vmatprep.subr.bf16.mxu0 %v1846
        %4894 = vmatpush1.bf16.msra.mxu0 %v1845
        %4895 = vmatprep.subr.bf16.mxu0 %v1854
        %4896 = vmatpush1.bf16.msra.mxu0 %v1853
        %4897 = vmatprep.subr.bf16.mxu0 %v1862
        %4898 = vmatpush1.bf16.msra.mxu0 %v1861
        %4899 = vmatprep.subr.bf16.mxu0 %v1870
        %4900 = vmatpush1.bf16.msra.mxu0 %v1869
        %4901 = vmatprep.subr.bf16.mxu0 %v1878
        %4902 = vmatpush1.bf16.msra.mxu0 %v1877
        %4903 = vmatprep.subr.bf16.mxu0 %v1886
        %4904 = vmatpush1.bf16.msra.mxu0 %v1885
        %4905 = vmatprep.subr.bf16.mxu0 %v1894
        %4906 = vmatpush1.bf16.msra.mxu0 %v1893
        %4907 = vmatprep.subr.bf16.mxu0 %v1902
        %4908 = vmatpush1.bf16.msra.mxu0 %v1901
        %4909 = vmatprep.subr.bf16.mxu0 %v1910
        %4910 = vmatpush1.bf16.msra.mxu0 %v1909
        %4911 = vmatprep.subr.bf16.mxu0 %v1918
        %4912 = vmatpush1.bf16.msra.mxu0 %v1917
        %4913 = vmatprep.mubr.bf16.mxu0 %v4798
        %4914 = vmatmul.mubr.bf16.gmra.mrb[0].mxu0 %v4797
        %v4915 = vpop.f32.mrb[0].mxu0
        %v4916 = vadd.f32 0.0, %v4915
        %v4917 = vpop.f32.mrb[0].mxu0
        %v4918 = vadd.f32 0.0, %v4917
        %v4919 = vpop.f32.mrb[0].mxu0
        %v4920 = vpop.f32.mrb[0].mxu0
        %4921 = vdwg.mxu0
        %4922 = vmatprep.subr.bf16.mxu0 %v1800
        %4923 = vmatpush1.bf16.msra.mxu0 %v1799
        %4924 = vmatprep.subr.bf16.mxu0 %v1808
        %4925 = vmatpush1.bf16.msra.mxu0 %v1807
        %4926 = vmatprep.subr.bf16.mxu0 %v1816
        %4927 = vmatpush1.bf16.msra.mxu0 %v1815
        %4928 = vmatprep.subr.bf16.mxu0 %v1824
        %4929 = vmatpush1.bf16.msra.mxu0 %v1823
        %4930 = vmatprep.subr.bf16.mxu0 %v1832
        %4931 = vmatpush1.bf16.msra.mxu0 %v1831
        %4932 = vmatprep.subr.bf16.mxu0 %v1840
        %4933 = vmatpush1.bf16.msra.mxu0 %v1839
        %4934 = vmatprep.subr.bf16.mxu0 %v1848
        %4935 = vmatpush1.bf16.msra.mxu0 %v1847
        %4936 = vmatprep.subr.bf16.mxu0 %v1856
        %4937 = vmatpush1.bf16.msra.mxu0 %v1855
        %4938 = vmatprep.subr.bf16.mxu0 %v1864
        %4939 = vmatpush1.bf16.msra.mxu0 %v1863
        %4940 = vmatprep.subr.bf16.mxu0 %v1872
        %4941 = vmatpush1.bf16.msra.mxu0 %v1871
        %4942 = vmatprep.subr.bf16.mxu0 %v1880
        %4943 = vmatpush1.bf16.msra.mxu0 %v1879
        %4944 = vmatprep.subr.bf16.mxu0 %v1888
        %4945 = vmatpush1.bf16.msra.mxu0 %v1887
        %4946 = vmatprep.subr.bf16.mxu0 %v1896
        %4947 = vmatpush1.bf16.msra.mxu0 %v1895
        %4948 = vmatprep.subr.bf16.mxu0 %v1904
        %4949 = vmatpush1.bf16.msra.mxu0 %v1903
        %4950 = vmatprep.subr.bf16.mxu0 %v1912
        %4951 = vmatpush1.bf16.msra.mxu0 %v1911
        %4952 = vmatprep.subr.bf16.mxu0 %v1920
        %4953 = vmatpush1.bf16.msra.mxu0 %v1919
        %4954 = vmatprep.mubr.bf16.mxu0 %v4798
        %4955 = vmatmul.mubr.bf16.gmra.mrb[0].mxu0 %v4797
        %v4956 = vpop.f32.mrb[0].mxu0
        %v4957 = vadd.f32 0.0, %v4956
        %v4958 = vpop.f32.mrb[0].mxu0
        %v4959 = vadd.f32 0.0, %v4958
        %v4960 = vpop.f32.mrb[0].mxu0
        %v4961 = vpop.f32.mrb[0].mxu0
        %4962 = vdwg.mxu0
        %v4963 = vadd.f32 %v4916, %v981
        %v4964 = vadd.f32 %v4918, %v985
        %v4965 = vadd.f32 %v4957, %v989
        %v4966 = vadd.f32 %v4959, %v993
        %v4967 = vmul.f32 %v4963, 0.5
        %v4968 = vtanh.pop %v4967
        %v4969 = vmul.f32 %v4968, 0.5
        %v4970 = vadd.f32 %v4969, 0.5
        %v4971 = vmul.f32 %v4964, 0.5
        %v4972 = vtanh.pop %v4971
        %v4973 = vmul.f32 %v4972, 0.5
        %v4974 = vadd.f32 %v4973, 0.5
        %v4975 = vtanh.pop %v4965
        %v4976 = vmul.f32 %v4966, 0.5
        %v4977 = vtanh.pop %v4976
        %v4978 = vmul.f32 %v4977, 0.5
        %v4979 = vadd.f32 %v4978, 0.5
        %v4980 = vmul.f32 %v4974, %v4432
        %v4981 = vmul.f32 %v4970, %v4975
        %v4982 = vadd.f32 %v4980, %v4981
        %v4983 = vtanh.pop %v4982
        %v4984 = vmul.f32 %v4979, %v4983
        %s4985 = scalar_lea.vmem [#allocation2], 6
        %v4986 = vld [vmem:[%s4985] ss:$8 sm:$0xf]
        %s4987 = scalar_lea.vmem [#allocation2], 38
        %v4988 = vld [vmem:[%s4987] ss:$8 sm:$0xf]
        %s4989 = scalar_lea.vmem [#allocation2], 70
        %v4990 = vld [vmem:[%s4989] ss:$8 sm:$0xf]
        %s4991 = scalar_lea.vmem [#allocation2], 102
        %v4992 = vld [vmem:[%s4991] ss:$8 sm:$0xf]
        %s4993 = scalar_lea.vmem [#allocation2], 134
        %v4994 = vld [vmem:[%s4993] ss:$8 sm:$0xf]
        %s4995 = scalar_lea.vmem [#allocation2], 166
        %v4996 = vld [vmem:[%s4995] ss:$8 sm:$0xf]
        %s4997 = scalar_lea.vmem [#allocation2], 198
        %v4998 = vld [vmem:[%s4997] ss:$8 sm:$0xf]
        %s4999 = scalar_lea.vmem [#allocation2], 230
        %v5000 = vld [vmem:[%s4999] ss:$8 sm:$0xf]
        %v5005 = vcombine.low %v4834, %v4836
        %v5006 = vcombine.high %v4834, %v4836
        %v5007 = vcombine.low %v4875, %v4877
        %v5008 = vcombine.high %v4875, %v4877
        %v5010 = vunpack.c.l.s4 1966171168
        %v5011 = vunpack.c.0.s8 %v5010
        %v5012 = vlaneseq
        %v5013 = vshrl.u32 %v5012, 7
        %v5014 = vsub.s32 %v5011, %v5013
        %v5015 = vrot.slane %v5005, %v5014
        %v5017 = vunpack.c.l.s4 1966171168
        %v5018 = vunpack.c.0.s8 %v5017
        %v5019 = vlaneseq
        %v5020 = vshrl.u32 %v5019, 7
        %v5021 = vsub.s32 %v5018, %v5020
        %v5022 = vrot.slane %v5006, %v5021
        %v5024 = vunpack.c.l.s4 1966171168
        %v5025 = vunpack.c.0.s8 %v5024
        %v5026 = vlaneseq
        %v5027 = vshrl.u32 %v5026, 7
        %v5028 = vsub.s32 %v5025, %v5027
        %v5029 = vrot.slane %v5007, %v5028
        %v5031 = vunpack.c.l.s4 1966171168
        %v5032 = vunpack.c.0.s8 %v5031
        %v5033 = vlaneseq
        %v5034 = vshrl.u32 %v5033, 7
        %v5035 = vsub.s32 %v5032, %v5034
        %v5036 = vrot.slane %v5008, %v5035
        %v5037 = vcombine.low %v5015, %v5029
        %v5038 = vcombine.high %v5015, %v5029
        %v5039 = vcombine.low %v5022, %v5036
        %v5040 = vcombine.high %v5022, %v5036
        %v5042 = vunpack.c.l.s4 1966171168
        %v5043 = vunpack.c.0.s8 %v5042
        %v5044 = vlaneseq
        %v5045 = vshrl.u32 %v5044, 7
        %v5046 = vsub.s32 %v5043, %v5045
        %v5047 = vrot.slane %v5037, %v5046
        %v5049 = vunpack.c.l.s4 1966171168
        %v5050 = vunpack.c.0.s8 %v5049
        %v5051 = vlaneseq
        %v5052 = vshrl.u32 %v5051, 7
        %v5053 = vsub.s32 %v5050, %v5052
        %v5054 = vrot.slane %v5039, %v5053
        %v5056 = vunpack.c.l.s4 1966171168
        %v5057 = vunpack.c.0.s8 %v5056
        %v5058 = vlaneseq
        %v5059 = vshrl.u32 %v5058, 7
        %v5060 = vsub.s32 %v5057, %v5059
        %v5061 = vrot.slane %v5038, %v5060
        %v5063 = vunpack.c.l.s4 1966171168
        %v5064 = vunpack.c.0.s8 %v5063
        %v5065 = vlaneseq
        %v5066 = vshrl.u32 %v5065, 7
        %v5067 = vsub.s32 %v5064, %v5066
        %v5068 = vrot.slane %v5040, %v5067
        %v5069 = vcombine.high %v5047, %v5047
        %v5070 = vcombine.high %v5054, %v5054
        %v5071 = vcombine.high %v5061, %v5061
        %v5072 = vcombine.high %v5068, %v5068
        %v5081 = vadd.f32 %v4986, %v5047
        %v5082 = vadd.f32 %v4988, %v5061
        %v5083 = vadd.f32 %v4990, %v5069
        %v5084 = vadd.f32 %v4992, %v5071
        %v5085 = vadd.f32 %v4994, %v5054
        %v5086 = vadd.f32 %v4996, %v5068
        %v5087 = vadd.f32 %v4998, %v5070
        %v5088 = vadd.f32 %v5000, %v5072
        %v5089 = vmul.f32 %v5081, 0.5
        %v5090 = vmul.f32 %v5082, 0.5
        %v5091 = vmul.f32 %v5083, 0.5
        %v5092 = vmul.f32 %v5084, 0.5
        %v5093 = vmul.f32 %v5085, 0.5
        %v5094 = vmul.f32 %v5086, 0.5
        %v5095 = vmul.f32 %v5087, 0.5
        %v5096 = vmul.f32 %v5088, 0.5
        %v5097 = vtanh.pop %v5089
        %v5098 = vtanh.pop %v5090
        %v5099 = vtanh.pop %v5091
        %v5100 = vtanh.pop %v5092
        %v5101 = vtanh.pop %v5093
        %v5102 = vtanh.pop %v5094
        %v5103 = vtanh.pop %v5095
        %v5104 = vtanh.pop %v5096
        %v5105 = vmul.f32 %v5097, 0.5
        %v5106 = vmul.f32 %v5098, 0.5
        %v5107 = vmul.f32 %v5099, 0.5
        %v5108 = vmul.f32 %v5100, 0.5
        %v5109 = vmul.f32 %v5101, 0.5
        %v5110 = vmul.f32 %v5102, 0.5
        %v5111 = vmul.f32 %v5103, 0.5
        %v5112 = vmul.f32 %v5104, 0.5
        %v5113 = vadd.f32 %v5105, 0.5
        %v5114 = vadd.f32 %v5106, 0.5
        %v5115 = vadd.f32 %v5107, 0.5
        %v5116 = vadd.f32 %v5108, 0.5
        %v5117 = vadd.f32 %v5109, 0.5
        %v5118 = vadd.f32 %v5110, 0.5
        %v5119 = vadd.f32 %v5111, 0.5
        %v5120 = vadd.f32 %v5112, 0.5
        %v5129 = vrot.slane %v5081, 1
        %v5130 = vrot.slane %v5082, 1
        %v5131 = vrot.slane %v5083, 1
        %v5132 = vrot.slane %v5084, 1
        %v5133 = vrot.slane %v5085, 1
        %v5134 = vrot.slane %v5086, 1
        %v5135 = vrot.slane %v5087, 1
        %v5136 = vrot.slane %v5088, 1
        %v5145 = vmul.f32 %v5129, 0.5
        %v5146 = vmul.f32 %v5130, 0.5
        %v5147 = vmul.f32 %v5131, 0.5
        %v5148 = vmul.f32 %v5132, 0.5
        %v5149 = vmul.f32 %v5133, 0.5
        %v5150 = vmul.f32 %v5134, 0.5
        %v5151 = vmul.f32 %v5135, 0.5
        %v5152 = vmul.f32 %v5136, 0.5
        %v5153 = vtanh.pop %v5145
        %v5154 = vtanh.pop %v5146
        %v5155 = vtanh.pop %v5147
        %v5156 = vtanh.pop %v5148
        %v5157 = vtanh.pop %v5149
        %v5158 = vtanh.pop %v5150
        %v5159 = vtanh.pop %v5151
        %v5160 = vtanh.pop %v5152
        %v5161 = vmul.f32 %v5153, 0.5
        %v5162 = vmul.f32 %v5154, 0.5
        %v5163 = vmul.f32 %v5155, 0.5
        %v5164 = vmul.f32 %v5156, 0.5
        %v5165 = vmul.f32 %v5157, 0.5
        %v5166 = vmul.f32 %v5158, 0.5
        %v5167 = vmul.f32 %v5159, 0.5
        %v5168 = vmul.f32 %v5160, 0.5
        %v5169 = vadd.f32 %v5161, 0.5
        %v5170 = vadd.f32 %v5162, 0.5
        %v5171 = vadd.f32 %v5163, 0.5
        %v5172 = vadd.f32 %v5164, 0.5
        %v5173 = vadd.f32 %v5165, 0.5
        %v5174 = vadd.f32 %v5166, 0.5
        %v5175 = vadd.f32 %v5167, 0.5
        %v5176 = vadd.f32 %v5168, 0.5
        %v5177 = vrot.slane %v5081, 2
        %v5178 = vrot.slane %v5082, 2
        %v5179 = vrot.slane %v5083, 2
        %v5180 = vrot.slane %v5084, 2
        %v5181 = vrot.slane %v5085, 2
        %v5182 = vrot.slane %v5086, 2
        %v5183 = vrot.slane %v5087, 2
        %v5184 = vrot.slane %v5088, 2
        %v5193 = vtanh.pop %v5177
        %v5194 = vtanh.pop %v5178
        %v5195 = vtanh.pop %v5179
        %v5196 = vtanh.pop %v5180
        %v5197 = vtanh.pop %v5181
        %v5198 = vtanh.pop %v5182
        %v5199 = vtanh.pop %v5183
        %v5200 = vtanh.pop %v5184
        %v5201 = vrot.slane %v5081, 3
        %v5202 = vrot.slane %v5082, 3
        %v5203 = vrot.slane %v5083, 3
        %v5204 = vrot.slane %v5084, 3
        %v5205 = vrot.slane %v5085, 3
        %v5206 = vrot.slane %v5086, 3
        %v5207 = vrot.slane %v5087, 3
        %v5208 = vrot.slane %v5088, 3
        %v5217 = vmul.f32 %v5201, 0.5
        %v5218 = vmul.f32 %v5202, 0.5
        %v5219 = vmul.f32 %v5203, 0.5
        %v5220 = vmul.f32 %v5204, 0.5
        %v5221 = vmul.f32 %v5205, 0.5
        %v5222 = vmul.f32 %v5206, 0.5
        %v5223 = vmul.f32 %v5207, 0.5
        %v5224 = vmul.f32 %v5208, 0.5
        %v5225 = vtanh.pop %v5217
        %v5226 = vtanh.pop %v5218
        %v5227 = vtanh.pop %v5219
        %v5228 = vtanh.pop %v5220
        %v5229 = vtanh.pop %v5221
        %v5230 = vtanh.pop %v5222
        %v5231 = vtanh.pop %v5223
        %v5232 = vtanh.pop %v5224
        %v5233 = vmul.f32 %v5225, 0.5
        %v5234 = vmul.f32 %v5226, 0.5
        %v5235 = vmul.f32 %v5227, 0.5
        %v5236 = vmul.f32 %v5228, 0.5
        %v5237 = vmul.f32 %v5229, 0.5
        %v5238 = vmul.f32 %v5230, 0.5
        %v5239 = vmul.f32 %v5231, 0.5
        %v5240 = vmul.f32 %v5232, 0.5
        %v5241 = vadd.f32 %v5233, 0.5
        %v5242 = vadd.f32 %v5234, 0.5
        %v5243 = vadd.f32 %v5235, 0.5
        %v5244 = vadd.f32 %v5236, 0.5
        %v5245 = vadd.f32 %v5237, 0.5
        %v5246 = vadd.f32 %v5238, 0.5
        %v5247 = vadd.f32 %v5239, 0.5
        %v5248 = vadd.f32 %v5240, 0.5
        %v5249 = vmul.f32 %v5169, %v4715
        %v5250 = vmul.f32 %v5170, %v4716
        %v5251 = vmul.f32 %v5171, %v4717
        %v5252 = vmul.f32 %v5172, %v4718
        %v5253 = vmul.f32 %v5173, %v4719
        %v5254 = vmul.f32 %v5174, %v4720
        %v5255 = vmul.f32 %v5175, %v4721
        %v5256 = vmul.f32 %v5176, %v4722
        %v5257 = vmul.f32 %v5113, %v5193
        %v5258 = vmul.f32 %v5114, %v5194
        %v5259 = vmul.f32 %v5115, %v5195
        %v5260 = vmul.f32 %v5116, %v5196
        %v5261 = vmul.f32 %v5117, %v5197
        %v5262 = vmul.f32 %v5118, %v5198
        %v5263 = vmul.f32 %v5119, %v5199
        %v5264 = vmul.f32 %v5120, %v5200
        %v5265 = vadd.f32 %v5249, %v5257
        %v5266 = vadd.f32 %v5250, %v5258
        %v5267 = vadd.f32 %v5251, %v5259
        %v5268 = vadd.f32 %v5252, %v5260
        %v5269 = vadd.f32 %v5253, %v5261
        %v5270 = vadd.f32 %v5254, %v5262
        %v5271 = vadd.f32 %v5255, %v5263
        %v5272 = vadd.f32 %v5256, %v5264
        %v5273 = vtanh.pop %v5265
        %v5274 = vtanh.pop %v5266
        %v5275 = vtanh.pop %v5267
        %v5276 = vtanh.pop %v5268
        %v5277 = vtanh.pop %v5269
        %v5278 = vtanh.pop %v5270
        %v5279 = vtanh.pop %v5271
        %v5280 = vtanh.pop %v5272
        %v5281 = vmul.f32 %v5241, %v5273
        %v5282 = vmul.f32 %v5242, %v5274
        %v5283 = vmul.f32 %v5243, %v5275
        %v5284 = vmul.f32 %v5244, %v5276
        %v5285 = vmul.f32 %v5245, %v5277
        %v5286 = vmul.f32 %v5246, %v5278
        %v5287 = vmul.f32 %v5247, %v5279
        %v5288 = vmul.f32 %v5248, %v5280
        %v5297 = vcombine.low %v5281, %v5282
        %v5298 = vcombine.low %v5283, %v5284
        %v5299 = vcombine.low %v5285, %v5286
        %v5300 = vcombine.low %v5287, %v5288
        %v5302 = vunpack.c.l.s4 1966171168
        %v5303 = vunpack.c.0.s8 %v5302
        %v5304 = vlaneseq
        %v5305 = vshrl.u32 %v5304, 7
        %v5306 = vsub.s32 %v5303, %v5305
        %v5307 = vrot.slane %v5297, %v5306
        %v5309 = vunpack.c.l.s4 1966171168
        %v5310 = vunpack.c.0.s8 %v5309
        %v5311 = vlaneseq
        %v5312 = vshrl.u32 %v5311, 7
        %v5313 = vsub.s32 %v5310, %v5312
        %v5314 = vrot.slane %v5298, %v5313
        %v5316 = vunpack.c.l.s4 1966171168
        %v5317 = vunpack.c.0.s8 %v5316
        %v5318 = vlaneseq
        %v5319 = vshrl.u32 %v5318, 7
        %v5320 = vsub.s32 %v5317, %v5319
        %v5321 = vrot.slane %v5299, %v5320
        %v5323 = vunpack.c.l.s4 1966171168
        %v5324 = vunpack.c.0.s8 %v5323
        %v5325 = vlaneseq
        %v5326 = vshrl.u32 %v5325, 7
        %v5327 = vsub.s32 %v5324, %v5326
        %v5328 = vrot.slane %v5300, %v5327
        %v5329 = vcombine.low %v5307, %v5314
        %v5330 = vcombine.low %v5321, %v5328
        %v5332 = vunpack.c.l.s4 1966171168
        %v5333 = vunpack.c.0.s8 %v5332
        %v5334 = vlaneseq
        %v5335 = vshrl.u32 %v5334, 7
        %v5336 = vsub.s32 %v5333, %v5335
        %v5337 = vrot.slane %v5329, %v5336
        %v5339 = vunpack.c.l.s4 1966171168
        %v5340 = vunpack.c.0.s8 %v5339
        %v5341 = vlaneseq
        %v5342 = vshrl.u32 %v5341, 7
        %v5343 = vsub.s32 %v5340, %v5342
        %v5344 = vrot.slane %v5330, %v5343
        %v5345 = vcombine.low %v5337, %v5344
        %v5347 = vpack.c.bf16 %v5345, %v5345
        %v5348 = vpack.c.bf16 %v4984, %v4984
        %5349 = vmatprep.subr.bf16.mxu0 %v1794
        %5350 = vmatpush1.bf16.msra.mxu0 %v1793
        %5351 = vmatprep.subr.bf16.mxu0 %v1802
        %5352 = vmatpush1.bf16.msra.mxu0 %v1801
        %5353 = vmatprep.subr.bf16.mxu0 %v1810
        %5354 = vmatpush1.bf16.msra.mxu0 %v1809
        %5355 = vmatprep.subr.bf16.mxu0 %v1818
        %5356 = vmatpush1.bf16.msra.mxu0 %v1817
        %5357 = vmatprep.subr.bf16.mxu0 %v1826
        %5358 = vmatpush1.bf16.msra.mxu0 %v1825
        %5359 = vmatprep.subr.bf16.mxu0 %v1834
        %5360 = vmatpush1.bf16.msra.mxu0 %v1833
        %5361 = vmatprep.subr.bf16.mxu0 %v1842
        %5362 = vmatpush1.bf16.msra.mxu0 %v1841
        %5363 = vmatprep.subr.bf16.mxu0 %v1850
        %5364 = vmatpush1.bf16.msra.mxu0 %v1849
        %5365 = vmatprep.subr.bf16.mxu0 %v1858
        %5366 = vmatpush1.bf16.msra.mxu0 %v1857
        %5367 = vmatprep.subr.bf16.mxu0 %v1866
        %5368 = vmatpush1.bf16.msra.mxu0 %v1865
        %5369 = vmatprep.subr.bf16.mxu0 %v1874
        %5370 = vmatpush1.bf16.msra.mxu0 %v1873
        %5371 = vmatprep.subr.bf16.mxu0 %v1882
        %5372 = vmatpush1.bf16.msra.mxu0 %v1881
        %5373 = vmatprep.subr.bf16.mxu0 %v1890
        %5374 = vmatpush1.bf16.msra.mxu0 %v1889
        %5375 = vmatprep.subr.bf16.mxu0 %v1898
        %5376 = vmatpush1.bf16.msra.mxu0 %v1897
        %5377 = vmatprep.subr.bf16.mxu0 %v1906
        %5378 = vmatpush1.bf16.msra.mxu0 %v1905
        %5379 = vmatprep.subr.bf16.mxu0 %v1914
        %5380 = vmatpush1.bf16.msra.mxu0 %v1913
        %5381 = vmatprep.mubr.bf16.mxu0 %v5348
        %5382 = vmatmul.mubr.bf16.gmra.mrb[0].mxu0 %v5347
        %v5383 = vpop.f32.mrb[0].mxu0
        %v5384 = vadd.f32 0.0, %v5383
        %v5385 = vpop.f32.mrb[0].mxu0
        %v5386 = vadd.f32 0.0, %v5385
        %v5387 = vpop.f32.mrb[0].mxu0
        %v5388 = vpop.f32.mrb[0].mxu0
        %5389 = vdwg.mxu0
        %5390 = vmatprep.subr.bf16.mxu0 %v1796
        %5391 = vmatpush1.bf16.msra.mxu0 %v1795
        %5392 = vmatprep.subr.bf16.mxu0 %v1804
        %5393 = vmatpush1.bf16.msra.mxu0 %v1803
        %5394 = vmatprep.subr.bf16.mxu0 %v1812
        %5395 = vmatpush1.bf16.msra.mxu0 %v1811
        %5396 = vmatprep.subr.bf16.mxu0 %v1820
        %5397 = vmatpush1.bf16.msra.mxu0 %v1819
        %5398 = vmatprep.subr.bf16.mxu0 %v1828
        %5399 = vmatpush1.bf16.msra.mxu0 %v1827
        %5400 = vmatprep.subr.bf16.mxu0 %v1836
        %5401 = vmatpush1.bf16.msra.mxu0 %v1835
        %5402 = vmatprep.subr.bf16.mxu0 %v1844
        %5403 = vmatpush1.bf16.msra.mxu0 %v1843
        %5404 = vmatprep.subr.bf16.mxu0 %v1852
        %5405 = vmatpush1.bf16.msra.mxu0 %v1851
        %5406 = vmatprep.subr.bf16.mxu0 %v1860
        %5407 = vmatpush1.bf16.msra.mxu0 %v1859
        %5408 = vmatprep.subr.bf16.mxu0 %v1868
        %5409 = vmatpush1.bf16.msra.mxu0 %v1867
        %5410 = vmatprep.subr.bf16.mxu0 %v1876
        %5411 = vmatpush1.bf16.msra.mxu0 %v1875
        %5412 = vmatprep.subr.bf16.mxu0 %v1884
        %5413 = vmatpush1.bf16.msra.mxu0 %v1883
        %5414 = vmatprep.subr.bf16.mxu0 %v1892
        %5415 = vmatpush1.bf16.msra.mxu0 %v1891
        %5416 = vmatprep.subr.bf16.mxu0 %v1900
        %5417 = vmatpush1.bf16.msra.mxu0 %v1899
        %5418 = vmatprep.subr.bf16.mxu0 %v1908
        %5419 = vmatpush1.bf16.msra.mxu0 %v1907
        %5420 = vmatprep.subr.bf16.mxu0 %v1916
        %5421 = vmatpush1.bf16.msra.mxu0 %v1915
        %5422 = vmatprep.mubr.bf16.mxu0 %v5348
        %5423 = vmatmul.mubr.bf16.gmra.mrb[0].mxu0 %v5347
        %v5424 = vpop.f32.mrb[0].mxu0
        %v5425 = vadd.f32 0.0, %v5424
        %v5426 = vpop.f32.mrb[0].mxu0
        %v5427 = vadd.f32 0.0, %v5426
        %v5428 = vpop.f32.mrb[0].mxu0
        %v5429 = vpop.f32.mrb[0].mxu0
        %5430 = vdwg.mxu0
        %5431 = vmatprep.subr.bf16.mxu0 %v1798
        %5432 = vmatpush1.bf16.msra.mxu0 %v1797
        %5433 = vmatprep.subr.bf16.mxu0 %v1806
        %5434 = vmatpush1.bf16.msra.mxu0 %v1805
        %5435 = vmatprep.subr.bf16.mxu0 %v1814
        %5436 = vmatpush1.bf16.msra.mxu0 %v1813
        %5437 = vmatprep.subr.bf16.mxu0 %v1822
        %5438 = vmatpush1.bf16.msra.mxu0 %v1821
        %5439 = vmatprep.subr.bf16.mxu0 %v1830
        %5440 = vmatpush1.bf16.msra.mxu0 %v1829
        %5441 = vmatprep.subr.bf16.mxu0 %v1838
        %5442 = vmatpush1.bf16.msra.mxu0 %v1837
        %5443 = vmatprep.subr.bf16.mxu0 %v1846
        %5444 = vmatpush1.bf16.msra.mxu0 %v1845
        %5445 = vmatprep.subr.bf16.mxu0 %v1854
        %5446 = vmatpush1.bf16.msra.mxu0 %v1853
        %5447 = vmatprep.subr.bf16.mxu0 %v1862
        %5448 = vmatpush1.bf16.msra.mxu0 %v1861
        %5449 = vmatprep.subr.bf16.mxu0 %v1870
        %5450 = vmatpush1.bf16.msra.mxu0 %v1869
        %5451 = vmatprep.subr.bf16.mxu0 %v1878
        %5452 = vmatpush1.bf16.msra.mxu0 %v1877
        %5453 = vmatprep.subr.bf16.mxu0 %v1886
        %5454 = vmatpush1.bf16.msra.mxu0 %v1885
        %5455 = vmatprep.subr.bf16.mxu0 %v1894
        %5456 = vmatpush1.bf16.msra.mxu0 %v1893
        %5457 = vmatprep.subr.bf16.mxu0 %v1902
        %5458 = vmatpush1.bf16.msra.mxu0 %v1901
        %5459 = vmatprep.subr.bf16.mxu0 %v1910
        %5460 = vmatpush1.bf16.msra.mxu0 %v1909
        %5461 = vmatprep.subr.bf16.mxu0 %v1918
        %5462 = vmatpush1.bf16.msra.mxu0 %v1917
        %5463 = vmatprep.mubr.bf16.mxu0 %v5348
        %5464 = vmatmul.mubr.bf16.gmra.mrb[0].mxu0 %v5347
        %v5465 = vpop.f32.mrb[0].mxu0
        %v5466 = vadd.f32 0.0, %v5465
        %v5467 = vpop.f32.mrb[0].mxu0
        %v5468 = vadd.f32 0.0, %v5467
        %v5469 = vpop.f32.mrb[0].mxu0
        %v5470 = vpop.f32.mrb[0].mxu0
        %5471 = vdwg.mxu0
        %5472 = vmatprep.subr.bf16.mxu0 %v1800
        %5473 = vmatpush1.bf16.msra.mxu0 %v1799
        %5474 = vmatprep.subr.bf16.mxu0 %v1808
        %5475 = vmatpush1.bf16.msra.mxu0 %v1807
        %5476 = vmatprep.subr.bf16.mxu0 %v1816
        %5477 = vmatpush1.bf16.msra.mxu0 %v1815
        %5478 = vmatprep.subr.bf16.mxu0 %v1824
        %5479 = vmatpush1.bf16.msra.mxu0 %v1823
        %5480 = vmatprep.subr.bf16.mxu0 %v1832
        %5481 = vmatpush1.bf16.msra.mxu0 %v1831
        %5482 = vmatprep.subr.bf16.mxu0 %v1840
        %5483 = vmatpush1.bf16.msra.mxu0 %v1839
        %5484 = vmatprep.subr.bf16.mxu0 %v1848
        %5485 = vmatpush1.bf16.msra.mxu0 %v1847
        %5486 = vmatprep.subr.bf16.mxu0 %v1856
        %5487 = vmatpush1.bf16.msra.mxu0 %v1855
        %5488 = vmatprep.subr.bf16.mxu0 %v1864
        %5489 = vmatpush1.bf16.msra.mxu0 %v1863
        %5490 = vmatprep.subr.bf16.mxu0 %v1872
        %5491 = vmatpush1.bf16.msra.mxu0 %v1871
        %5492 = vmatprep.subr.bf16.mxu0 %v1880
        %5493 = vmatpush1.bf16.msra.mxu0 %v1879
        %5494 = vmatprep.subr.bf16.mxu0 %v1888
        %5495 = vmatpush1.bf16.msra.mxu0 %v1887
        %5496 = vmatprep.subr.bf16.mxu0 %v1896
        %5497 = vmatpush1.bf16.msra.mxu0 %v1895
        %5498 = vmatprep.subr.bf16.mxu0 %v1904
        %5499 = vmatpush1.bf16.msra.mxu0 %v1903
        %5500 = vmatprep.subr.bf16.mxu0 %v1912
        %5501 = vmatpush1.bf16.msra.mxu0 %v1911
        %5502 = vmatprep.subr.bf16.mxu0 %v1920
        %5503 = vmatpush1.bf16.msra.mxu0 %v1919
        %5504 = vmatprep.mubr.bf16.mxu0 %v5348
        %5505 = vmatmul.mubr.bf16.gmra.mrb[0].mxu0 %v5347
        %v5506 = vpop.f32.mrb[0].mxu0
        %v5507 = vadd.f32 0.0, %v5506
        %v5508 = vpop.f32.mrb[0].mxu0
        %v5509 = vadd.f32 0.0, %v5508
        %v5510 = vpop.f32.mrb[0].mxu0
        %v5511 = vpop.f32.mrb[0].mxu0
        %5512 = vdwg.mxu0
        %v5513 = vadd.f32 %v5466, %v981
        %v5514 = vadd.f32 %v5468, %v985
        %v5515 = vadd.f32 %v5507, %v989
        %v5516 = vadd.f32 %v5509, %v993
        %v5517 = vmul.f32 %v5513, 0.5
        %v5518 = vtanh.pop %v5517
        %v5519 = vmul.f32 %v5518, 0.5
        %v5520 = vadd.f32 %v5519, 0.5
        %v5521 = vmul.f32 %v5514, 0.5
        %v5522 = vtanh.pop %v5521
        %v5523 = vmul.f32 %v5522, 0.5
        %v5524 = vadd.f32 %v5523, 0.5
        %v5525 = vtanh.pop %v5515
        %v5526 = vmul.f32 %v5516, 0.5
        %v5527 = vtanh.pop %v5526
        %v5528 = vmul.f32 %v5527, 0.5
        %v5529 = vadd.f32 %v5528, 0.5
        %v5530 = vmul.f32 %v5524, %v4982
        %v5531 = vmul.f32 %v5520, %v5525
        %v5532 = vadd.f32 %v5530, %v5531
        %v5533 = vtanh.pop %v5532
        %v5534 = vmul.f32 %v5529, %v5533
        %s5535 = scalar_lea.vmem [#allocation2], 7
        %v5536 = vld [vmem:[%s5535] ss:$8 sm:$0xf]
        %s5537 = scalar_lea.vmem [#allocation2], 39
        %v5538 = vld [vmem:[%s5537] ss:$8 sm:$0xf]
        %s5539 = scalar_lea.vmem [#allocation2], 71
        %v5540 = vld [vmem:[%s5539] ss:$8 sm:$0xf]
        %s5541 = scalar_lea.vmem [#allocation2], 103
        %v5542 = vld [vmem:[%s5541] ss:$8 sm:$0xf]
        %s5543 = scalar_lea.vmem [#allocation2], 135
        %v5544 = vld [vmem:[%s5543] ss:$8 sm:$0xf]
        %s5545 = scalar_lea.vmem [#allocation2], 167
        %v5546 = vld [vmem:[%s5545] ss:$8 sm:$0xf]
        %s5547 = scalar_lea.vmem [#allocation2], 199
        %v5548 = vld [vmem:[%s5547] ss:$8 sm:$0xf]
        %s5549 = scalar_lea.vmem [#allocation2], 231
        %v5550 = vld [vmem:[%s5549] ss:$8 sm:$0xf]
        %v5555 = vcombine.low %v5384, %v5386
        %v5556 = vcombine.high %v5384, %v5386
        %v5557 = vcombine.low %v5425, %v5427
        %v5558 = vcombine.high %v5425, %v5427
        %v5560 = vunpack.c.l.s4 1966171168
        %v5561 = vunpack.c.0.s8 %v5560
        %v5562 = vlaneseq
        %v5563 = vshrl.u32 %v5562, 7
        %v5564 = vsub.s32 %v5561, %v5563
        %v5565 = vrot.slane %v5555, %v5564
        %v5567 = vunpack.c.l.s4 1966171168
        %v5568 = vunpack.c.0.s8 %v5567
        %v5569 = vlaneseq
        %v5570 = vshrl.u32 %v5569, 7
        %v5571 = vsub.s32 %v5568, %v5570
        %v5572 = vrot.slane %v5556, %v5571
        %v5574 = vunpack.c.l.s4 1966171168
        %v5575 = vunpack.c.0.s8 %v5574
        %v5576 = vlaneseq
        %v5577 = vshrl.u32 %v5576, 7
        %v5578 = vsub.s32 %v5575, %v5577
        %v5579 = vrot.slane %v5557, %v5578
        %v5581 = vunpack.c.l.s4 1966171168
        %v5582 = vunpack.c.0.s8 %v5581
        %v5583 = vlaneseq
        %v5584 = vshrl.u32 %v5583, 7
        %v5585 = vsub.s32 %v5582, %v5584
        %v5586 = vrot.slane %v5558, %v5585
        %v5587 = vcombine.low %v5565, %v5579
        %v5588 = vcombine.high %v5565, %v5579
        %v5589 = vcombine.low %v5572, %v5586
        %v5590 = vcombine.high %v5572, %v5586
        %v5592 = vunpack.c.l.s4 1966171168
        %v5593 = vunpack.c.0.s8 %v5592
        %v5594 = vlaneseq
        %v5595 = vshrl.u32 %v5594, 7
        %v5596 = vsub.s32 %v5593, %v5595
        %v5597 = vrot.slane %v5587, %v5596
        %v5599 = vunpack.c.l.s4 1966171168
        %v5600 = vunpack.c.0.s8 %v5599
        %v5601 = vlaneseq
        %v5602 = vshrl.u32 %v5601, 7
        %v5603 = vsub.s32 %v5600, %v5602
        %v5604 = vrot.slane %v5589, %v5603
        %v5606 = vunpack.c.l.s4 1966171168
        %v5607 = vunpack.c.0.s8 %v5606
        %v5608 = vlaneseq
        %v5609 = vshrl.u32 %v5608, 7
        %v5610 = vsub.s32 %v5607, %v5609
        %v5611 = vrot.slane %v5588, %v5610
        %v5613 = vunpack.c.l.s4 1966171168
        %v5614 = vunpack.c.0.s8 %v5613
        %v5615 = vlaneseq
        %v5616 = vshrl.u32 %v5615, 7
        %v5617 = vsub.s32 %v5614, %v5616
        %v5618 = vrot.slane %v5590, %v5617
        %v5619 = vcombine.high %v5597, %v5597
        %v5620 = vcombine.high %v5604, %v5604
        %v5621 = vcombine.high %v5611, %v5611
        %v5622 = vcombine.high %v5618, %v5618
        %v5631 = vadd.f32 %v5536, %v5597
        %v5632 = vadd.f32 %v5538, %v5611
        %v5633 = vadd.f32 %v5540, %v5619
        %v5634 = vadd.f32 %v5542, %v5621
        %v5635 = vadd.f32 %v5544, %v5604
        %v5636 = vadd.f32 %v5546, %v5618
        %v5637 = vadd.f32 %v5548, %v5620
        %v5638 = vadd.f32 %v5550, %v5622
        %v5639 = vmul.f32 %v5631, 0.5
        %v5640 = vmul.f32 %v5632, 0.5
        %v5641 = vmul.f32 %v5633, 0.5
        %v5642 = vmul.f32 %v5634, 0.5
        %v5643 = vmul.f32 %v5635, 0.5
        %v5644 = vmul.f32 %v5636, 0.5
        %v5645 = vmul.f32 %v5637, 0.5
        %v5646 = vmul.f32 %v5638, 0.5
        %v5647 = vtanh.pop %v5639
        %v5648 = vtanh.pop %v5640
        %v5649 = vtanh.pop %v5641
        %v5650 = vtanh.pop %v5642
        %v5651 = vtanh.pop %v5643
        %v5652 = vtanh.pop %v5644
        %v5653 = vtanh.pop %v5645
        %v5654 = vtanh.pop %v5646
        %v5655 = vmul.f32 %v5647, 0.5
        %v5656 = vmul.f32 %v5648, 0.5
        %v5657 = vmul.f32 %v5649, 0.5
        %v5658 = vmul.f32 %v5650, 0.5
        %v5659 = vmul.f32 %v5651, 0.5
        %v5660 = vmul.f32 %v5652, 0.5
        %v5661 = vmul.f32 %v5653, 0.5
        %v5662 = vmul.f32 %v5654, 0.5
        %v5663 = vadd.f32 %v5655, 0.5
        %v5664 = vadd.f32 %v5656, 0.5
        %v5665 = vadd.f32 %v5657, 0.5
        %v5666 = vadd.f32 %v5658, 0.5
        %v5667 = vadd.f32 %v5659, 0.5
        %v5668 = vadd.f32 %v5660, 0.5
        %v5669 = vadd.f32 %v5661, 0.5
        %v5670 = vadd.f32 %v5662, 0.5
        %v5679 = vrot.slane %v5631, 1
        %v5680 = vrot.slane %v5632, 1
        %v5681 = vrot.slane %v5633, 1
        %v5682 = vrot.slane %v5634, 1
        %v5683 = vrot.slane %v5635, 1
        %v5684 = vrot.slane %v5636, 1
        %v5685 = vrot.slane %v5637, 1
        %v5686 = vrot.slane %v5638, 1
        %v5695 = vmul.f32 %v5679, 0.5
        %v5696 = vmul.f32 %v5680, 0.5
        %v5697 = vmul.f32 %v5681, 0.5
        %v5698 = vmul.f32 %v5682, 0.5
        %v5699 = vmul.f32 %v5683, 0.5
        %v5700 = vmul.f32 %v5684, 0.5
        %v5701 = vmul.f32 %v5685, 0.5
        %v5702 = vmul.f32 %v5686, 0.5
        %v5703 = vtanh.pop %v5695
        %v5704 = vtanh.pop %v5696
        %v5705 = vtanh.pop %v5697
        %v5706 = vtanh.pop %v5698
        %v5707 = vtanh.pop %v5699
        %v5708 = vtanh.pop %v5700
        %v5709 = vtanh.pop %v5701
        %v5710 = vtanh.pop %v5702
        %v5711 = vmul.f32 %v5703, 0.5
        %v5712 = vmul.f32 %v5704, 0.5
        %v5713 = vmul.f32 %v5705, 0.5
        %v5714 = vmul.f32 %v5706, 0.5
        %v5715 = vmul.f32 %v5707, 0.5
        %v5716 = vmul.f32 %v5708, 0.5
        %v5717 = vmul.f32 %v5709, 0.5
        %v5718 = vmul.f32 %v5710, 0.5
        %v5719 = vadd.f32 %v5711, 0.5
        %v5720 = vadd.f32 %v5712, 0.5
        %v5721 = vadd.f32 %v5713, 0.5
        %v5722 = vadd.f32 %v5714, 0.5
        %v5723 = vadd.f32 %v5715, 0.5
        %v5724 = vadd.f32 %v5716, 0.5
        %v5725 = vadd.f32 %v5717, 0.5
        %v5726 = vadd.f32 %v5718, 0.5
        %v5727 = vrot.slane %v5631, 2
        %v5728 = vrot.slane %v5632, 2
        %v5729 = vrot.slane %v5633, 2
        %v5730 = vrot.slane %v5634, 2
        %v5731 = vrot.slane %v5635, 2
        %v5732 = vrot.slane %v5636, 2
        %v5733 = vrot.slane %v5637, 2
        %v5734 = vrot.slane %v5638, 2
        %v5743 = vtanh.pop %v5727
        %v5744 = vtanh.pop %v5728
        %v5745 = vtanh.pop %v5729
        %v5746 = vtanh.pop %v5730
        %v5747 = vtanh.pop %v5731
        %v5748 = vtanh.pop %v5732
        %v5749 = vtanh.pop %v5733
        %v5750 = vtanh.pop %v5734
        %v5751 = vrot.slane %v5631, 3
        %v5752 = vrot.slane %v5632, 3
        %v5753 = vrot.slane %v5633, 3
        %v5754 = vrot.slane %v5634, 3
        %v5755 = vrot.slane %v5635, 3
        %v5756 = vrot.slane %v5636, 3
        %v5757 = vrot.slane %v5637, 3
        %v5758 = vrot.slane %v5638, 3
        %v5767 = vmul.f32 %v5751, 0.5
        %v5768 = vmul.f32 %v5752, 0.5
        %v5769 = vmul.f32 %v5753, 0.5
        %v5770 = vmul.f32 %v5754, 0.5
        %v5771 = vmul.f32 %v5755, 0.5
        %v5772 = vmul.f32 %v5756, 0.5
        %v5773 = vmul.f32 %v5757, 0.5
        %v5774 = vmul.f32 %v5758, 0.5
        %v5775 = vtanh.pop %v5767
        %v5776 = vtanh.pop %v5768
        %v5777 = vtanh.pop %v5769
        %v5778 = vtanh.pop %v5770
        %v5779 = vtanh.pop %v5771
        %v5780 = vtanh.pop %v5772
        %v5781 = vtanh.pop %v5773
        %v5782 = vtanh.pop %v5774
        %v5783 = vmul.f32 %v5775, 0.5
        %v5784 = vmul.f32 %v5776, 0.5
        %v5785 = vmul.f32 %v5777, 0.5
        %v5786 = vmul.f32 %v5778, 0.5
        %v5787 = vmul.f32 %v5779, 0.5
        %v5788 = vmul.f32 %v5780, 0.5
        %v5789 = vmul.f32 %v5781, 0.5
        %v5790 = vmul.f32 %v5782, 0.5
        %v5791 = vadd.f32 %v5783, 0.5
        %v5792 = vadd.f32 %v5784, 0.5
        %v5793 = vadd.f32 %v5785, 0.5
        %v5794 = vadd.f32 %v5786, 0.5
        %v5795 = vadd.f32 %v5787, 0.5
        %v5796 = vadd.f32 %v5788, 0.5
        %v5797 = vadd.f32 %v5789, 0.5
        %v5798 = vadd.f32 %v5790, 0.5
        %v5799 = vmul.f32 %v5719, %v5265
        %v5800 = vmul.f32 %v5720, %v5266
        %v5801 = vmul.f32 %v5721, %v5267
        %v5802 = vmul.f32 %v5722, %v5268
        %v5803 = vmul.f32 %v5723, %v5269
        %v5804 = vmul.f32 %v5724, %v5270
        %v5805 = vmul.f32 %v5725, %v5271
        %v5806 = vmul.f32 %v5726, %v5272
        %v5807 = vmul.f32 %v5663, %v5743
        %v5808 = vmul.f32 %v5664, %v5744
        %v5809 = vmul.f32 %v5665, %v5745
        %v5810 = vmul.f32 %v5666, %v5746
        %v5811 = vmul.f32 %v5667, %v5747
        %v5812 = vmul.f32 %v5668, %v5748
        %v5813 = vmul.f32 %v5669, %v5749
        %v5814 = vmul.f32 %v5670, %v5750
        %v5815 = vadd.f32 %v5799, %v5807
        %v5816 = vadd.f32 %v5800, %v5808
        %v5817 = vadd.f32 %v5801, %v5809
        %v5818 = vadd.f32 %v5802, %v5810
        %v5819 = vadd.f32 %v5803, %v5811
        %v5820 = vadd.f32 %v5804, %v5812
        %v5821 = vadd.f32 %v5805, %v5813
        %v5822 = vadd.f32 %v5806, %v5814
        %v5823 = vtanh.pop %v5815
        %v5824 = vtanh.pop %v5816
        %v5825 = vtanh.pop %v5817
        %v5826 = vtanh.pop %v5818
        %v5827 = vtanh.pop %v5819
        %v5828 = vtanh.pop %v5820
        %v5829 = vtanh.pop %v5821
        %v5830 = vtanh.pop %v5822
        %v5831 = vmul.f32 %v5791, %v5823
        %v5832 = vmul.f32 %v5792, %v5824
        %v5833 = vmul.f32 %v5793, %v5825
        %v5834 = vmul.f32 %v5794, %v5826
        %v5835 = vmul.f32 %v5795, %v5827
        %v5836 = vmul.f32 %v5796, %v5828
        %v5837 = vmul.f32 %v5797, %v5829
        %v5838 = vmul.f32 %v5798, %v5830
        %v5847 = vcombine.low %v5831, %v5832
        %v5848 = vcombine.low %v5833, %v5834
        %v5849 = vcombine.low %v5835, %v5836
        %v5850 = vcombine.low %v5837, %v5838
        %v5852 = vunpack.c.l.s4 1966171168
        %v5853 = vunpack.c.0.s8 %v5852
        %v5854 = vlaneseq
        %v5855 = vshrl.u32 %v5854, 7
        %v5856 = vsub.s32 %v5853, %v5855
        %v5857 = vrot.slane %v5847, %v5856
        %v5859 = vunpack.c.l.s4 1966171168
        %v5860 = vunpack.c.0.s8 %v5859
        %v5861 = vlaneseq
        %v5862 = vshrl.u32 %v5861, 7
        %v5863 = vsub.s32 %v5860, %v5862
        %v5864 = vrot.slane %v5848, %v5863
        %v5866 = vunpack.c.l.s4 1966171168
        %v5867 = vunpack.c.0.s8 %v5866
        %v5868 = vlaneseq
        %v5869 = vshrl.u32 %v5868, 7
        %v5870 = vsub.s32 %v5867, %v5869
        %v5871 = vrot.slane %v5849, %v5870
        %v5873 = vunpack.c.l.s4 1966171168
        %v5874 = vunpack.c.0.s8 %v5873
        %v5875 = vlaneseq
        %v5876 = vshrl.u32 %v5875, 7
        %v5877 = vsub.s32 %v5874, %v5876
        %v5878 = vrot.slane %v5850, %v5877
        %v5879 = vcombine.low %v5857, %v5864
        %v5880 = vcombine.low %v5871, %v5878
        %v5882 = vunpack.c.l.s4 1966171168
        %v5883 = vunpack.c.0.s8 %v5882
        %v5884 = vlaneseq
        %v5885 = vshrl.u32 %v5884, 7
        %v5886 = vsub.s32 %v5883, %v5885
        %v5887 = vrot.slane %v5879, %v5886
        %v5889 = vunpack.c.l.s4 1966171168
        %v5890 = vunpack.c.0.s8 %v5889
        %v5891 = vlaneseq
        %v5892 = vshrl.u32 %v5891, 7
        %v5893 = vsub.s32 %v5890, %v5892
        %v5894 = vrot.slane %v5880, %v5893
        %v5895 = vcombine.low %v5887, %v5894
        %v5897 = vpack.c.bf16 %v5895, %v5895
        %v5898 = vpack.c.bf16 %v5534, %v5534
        %5899 = vmatprep.subr.bf16.mxu0 %v1798
        %5900 = vmatpush1.bf16.msra.mxu0 %v1797
        %5901 = vmatprep.subr.bf16.mxu0 %v1806
        %5902 = vmatpush1.bf16.msra.mxu0 %v1805
        %5903 = vmatprep.subr.bf16.mxu0 %v1814
        %5904 = vmatpush1.bf16.msra.mxu0 %v1813
        %5905 = vmatprep.subr.bf16.mxu0 %v1822
        %5906 = vmatpush1.bf16.msra.mxu0 %v1821
        %5907 = vmatprep.subr.bf16.mxu0 %v1830
        %5908 = vmatpush1.bf16.msra.mxu0 %v1829
        %5909 = vmatprep.subr.bf16.mxu0 %v1838
        %5910 = vmatpush1.bf16.msra.mxu0 %v1837
        %5911 = vmatprep.subr.bf16.mxu0 %v1846
        %5912 = vmatpush1.bf16.msra.mxu0 %v1845
        %5913 = vmatprep.subr.bf16.mxu0 %v1854
        %5914 = vmatpush1.bf16.msra.mxu0 %v1853
        %5915 = vmatprep.subr.bf16.mxu0 %v1862
        %5916 = vmatpush1.bf16.msra.mxu0 %v1861
        %5917 = vmatprep.subr.bf16.mxu0 %v1870
        %5918 = vmatpush1.bf16.msra.mxu0 %v1869
        %5919 = vmatprep.subr.bf16.mxu0 %v1878
        %5920 = vmatpush1.bf16.msra.mxu0 %v1877
        %5921 = vmatprep.subr.bf16.mxu0 %v1886
        %5922 = vmatpush1.bf16.msra.mxu0 %v1885
        %5923 = vmatprep.subr.bf16.mxu0 %v1894
        %5924 = vmatpush1.bf16.msra.mxu0 %v1893
        %5925 = vmatprep.subr.bf16.mxu0 %v1902
        %5926 = vmatpush1.bf16.msra.mxu0 %v1901
        %5927 = vmatprep.subr.bf16.mxu0 %v1910
        %5928 = vmatpush1.bf16.msra.mxu0 %v1909
        %5929 = vmatprep.subr.bf16.mxu0 %v1918
        %5930 = vmatpush1.bf16.msra.mxu0 %v1917
        %5931 = vmatprep.mubr.bf16.mxu0 %v5898
        %5932 = vmatmul.mubr.bf16.gmra.mrb[0].mxu0 %v5897
        %v5933 = vpop.f32.mrb[0].mxu0
        %v5934 = vadd.f32 0.0, %v5933
        %v5935 = vpop.f32.mrb[0].mxu0
        %v5936 = vadd.f32 0.0, %v5935
        %v5937 = vpop.f32.mrb[0].mxu0
        %v5938 = vpop.f32.mrb[0].mxu0
        %5939 = vdwg.mxu0
        %5940 = vmatprep.subr.bf16.mxu0 %v1800
        %5941 = vmatpush1.bf16.msra.mxu0 %v1799
        %5942 = vmatprep.subr.bf16.mxu0 %v1808
        %5943 = vmatpush1.bf16.msra.mxu0 %v1807
        %5944 = vmatprep.subr.bf16.mxu0 %v1816
        %5945 = vmatpush1.bf16.msra.mxu0 %v1815
        %5946 = vmatprep.subr.bf16.mxu0 %v1824
        %5947 = vmatpush1.bf16.msra.mxu0 %v1823
        %5948 = vmatprep.subr.bf16.mxu0 %v1832
        %5949 = vmatpush1.bf16.msra.mxu0 %v1831
        %5950 = vmatprep.subr.bf16.mxu0 %v1840
        %5951 = vmatpush1.bf16.msra.mxu0 %v1839
        %5952 = vmatprep.subr.bf16.mxu0 %v1848
        %5953 = vmatpush1.bf16.msra.mxu0 %v1847
        %5954 = vmatprep.subr.bf16.mxu0 %v1856
        %5955 = vmatpush1.bf16.msra.mxu0 %v1855
        %5956 = vmatprep.subr.bf16.mxu0 %v1864
        %5957 = vmatpush1.bf16.msra.mxu0 %v1863
        %5958 = vmatprep.subr.bf16.mxu0 %v1872
        %5959 = vmatpush1.bf16.msra.mxu0 %v1871
        %5960 = vmatprep.subr.bf16.mxu0 %v1880
        %5961 = vmatpush1.bf16.msra.mxu0 %v1879
        %5962 = vmatprep.subr.bf16.mxu0 %v1888
        %5963 = vmatpush1.bf16.msra.mxu0 %v1887
        %5964 = vmatprep.subr.bf16.mxu0 %v1896
        %5965 = vmatpush1.bf16.msra.mxu0 %v1895
        %5966 = vmatprep.subr.bf16.mxu0 %v1904
        %5967 = vmatpush1.bf16.msra.mxu0 %v1903
        %5968 = vmatprep.subr.bf16.mxu0 %v1912
        %5969 = vmatpush1.bf16.msra.mxu0 %v1911
        %5970 = vmatprep.subr.bf16.mxu0 %v1920
        %5971 = vmatpush1.bf16.msra.mxu0 %v1919
        %5972 = vmatprep.mubr.bf16.mxu0 %v5898
        %5973 = vmatmul.mubr.bf16.gmra.mrb[0].mxu0 %v5897
        %v5974 = vpop.f32.mrb[0].mxu0
        %v5975 = vadd.f32 0.0, %v5974
        %v5976 = vpop.f32.mrb[0].mxu0
        %v5977 = vadd.f32 0.0, %v5976
        %v5978 = vpop.f32.mrb[0].mxu0
        %v5979 = vpop.f32.mrb[0].mxu0
        %5980 = vdwg.mxu0
        %v5981 = vadd.f32 %v5934, %v981
        %v5982 = vadd.f32 %v5936, %v985
        %v5983 = vadd.f32 %v5975, %v989
        %v5984 = vadd.f32 %v5977, %v993
        %v5985 = vmul.f32 %v5981, 0.5
        %v5986 = vtanh.pop %v5985
        %v5987 = vmul.f32 %v5986, 0.5
        %v5988 = vadd.f32 %v5987, 0.5
        %v5989 = vmul.f32 %v5982, 0.5
        %v5990 = vtanh.pop %v5989
        %v5991 = vmul.f32 %v5990, 0.5
        %v5992 = vadd.f32 %v5991, 0.5
        %v5993 = vtanh.pop %v5983
        %v5994 = vmul.f32 %v5984, 0.5
        %v5995 = vtanh.pop %v5994
        %v5996 = vmul.f32 %v5995, 0.5
        %v5997 = vadd.f32 %v5996, 0.5
        %v5998 = vmul.f32 %v5992, %v5532
        %v5999 = vmul.f32 %v5988, %v5993
        %v6000 = vadd.f32 %v5998, %v5999
        %v6001 = vtanh.pop %v6000
        %v6002 = vmul.f32 %v5997, %v6001
        %v6003 = vpack.c.bf16 %v6002, %v6002
        %v6004 = vld [vmem:[#allocation9] sm:$0xf]
        %v6005 = vld [vmem:[#allocation9 + $0x4] sm:$0xf]
        %v6006 = vld [vmem:[#allocation9 + $0x8] sm:$0xf]
        %v6007 = vld [vmem:[#allocation9 + $0xc] sm:$0xf]
        %v6008 = vld [vmem:[#allocation9 + $0x10] sm:$0xf]
        %v6009 = vld [vmem:[#allocation9 + $0x14] sm:$0xf]
        %v6010 = vld [vmem:[#allocation9 + $0x18] sm:$0xf]
        %v6011 = vld [vmem:[#allocation9 + $0x1c] sm:$0xf]
        %v6012 = vld [vmem:[#allocation9 + $0x20] sm:$0xf]
        %v6013 = vld [vmem:[#allocation9 + $0x24] sm:$0xf]
        %v6014 = vld [vmem:[#allocation9 + $0x28] sm:$0xf]
        %v6015 = vld [vmem:[#allocation9 + $0x2c] sm:$0xf]
        %v6016 = vld [vmem:[#allocation9 + $0x30] sm:$0xf]
        %v6017 = vld [vmem:[#allocation9 + $0x34] sm:$0xf]
        %v6018 = vld [vmem:[#allocation9 + $0x38] sm:$0xf]
        %v6019 = vld [vmem:[#allocation9 + $0x3c] sm:$0xf]
        %v6020 = vld [vmem:[%s6] sm:$0x1]
        %v6022 = vlaneseq
        %v6023 = vshrl.u32 %v6022, 7
        %v6024 = vsub.s32 0, %v6023
        %v6025 = vrot.slane %v6020, %v6024
        %v6043 = vunpack.c.l.b16 %v6004
        %v6044 = vunpack.c.l.b16 %v6005
        %v6045 = vunpack.c.l.b16 %v6006
        %v6046 = vunpack.c.l.b16 %v6007
        %v6047 = vunpack.c.l.b16 %v6008
        %v6048 = vunpack.c.l.b16 %v6009
        %v6049 = vunpack.c.l.b16 %v6010
        %v6050 = vunpack.c.l.b16 %v6011
        %v6051 = vunpack.c.l.b16 %v6012
        %v6052 = vunpack.c.l.b16 %v6013
        %v6053 = vunpack.c.l.b16 %v6014
        %v6054 = vunpack.c.l.b16 %v6015
        %v6055 = vunpack.c.l.b16 %v6016
        %v6056 = vunpack.c.l.b16 %v6017
        %v6057 = vunpack.c.l.b16 %v6018
        %v6058 = vunpack.c.l.b16 %v6019
        %v6059 = vpack.c.b16 %v6044, %v6043
        %v6060 = vpack.c.b16 %v6046, %v6045
        %v6061 = vpack.c.b16 %v6048, %v6047
        %v6062 = vpack.c.b16 %v6050, %v6049
        %v6063 = vpack.c.b16 %v6052, %v6051
        %v6064 = vpack.c.b16 %v6054, %v6053
        %v6065 = vpack.c.b16 %v6056, %v6055
        %v6066 = vpack.c.b16 %v6058, %v6057
        %6075 = vmatprep.subr.bf16.mxu0 0
        %6076 = vmatpush1.bf16.msra.mxu0 %v6059
        %6077 = vmatprep.subr.bf16.mxu0 0
        %6078 = vmatpush1.bf16.msra.mxu0 %v6060
        %6079 = vmatprep.subr.bf16.mxu0 0
        %6080 = vmatpush1.bf16.msra.mxu0 %v6061
        %6081 = vmatprep.subr.bf16.mxu0 0
        %6082 = vmatpush1.bf16.msra.mxu0 %v6062
        %6083 = vmatprep.subr.bf16.mxu0 0
        %6084 = vmatpush1.bf16.msra.mxu0 %v6063
        %6085 = vmatprep.subr.bf16.mxu0 0
        %6086 = vmatpush1.bf16.msra.mxu0 %v6064
        %6087 = vmatprep.subr.bf16.mxu0 0
        %6088 = vmatpush1.bf16.msra.mxu0 %v6065
        %6089 = vmatprep.subr.bf16.mxu0 0
        %6090 = vmatpush1.bf16.msra.mxu0 %v6066
        %6091 = vmatprep.subr.bf16.mxu0 0
        %6092 = vmatpush1.bf16.msra.mxu0 0
        %6093 = vmatprep.subr.bf16.mxu0 0
        %6094 = vmatpush1.bf16.msra.mxu0 0
        %6095 = vmatprep.subr.bf16.mxu0 0
        %6096 = vmatpush1.bf16.msra.mxu0 0
        %6097 = vmatprep.subr.bf16.mxu0 0
        %6098 = vmatpush1.bf16.msra.mxu0 0
        %6099 = vmatprep.subr.bf16.mxu0 0
        %6100 = vmatpush1.bf16.msra.mxu0 0
        %6101 = vmatprep.subr.bf16.mxu0 0
        %6102 = vmatpush1.bf16.msra.mxu0 0
        %6103 = vmatprep.subr.bf16.mxu0 0
        %6104 = vmatpush1.bf16.msra.mxu0 0
        %6105 = vmatprep.subr.bf16.mxu0 0
        %6106 = vmatpush1.bf16.msra.mxu0 0
        %6107 = vmatprep.mubr.bf16.mxu0 0
        %6108 = vmatmul.mubr.bf16.gmra.mrb[0].mxu0 %v6003
        %v6109 = vpop.f32.mrb[0].mxu0
        %v6110 = vadd.f32 %v6025, %v6109
        %v6111 = vpop.f32.mrb[0].mxu0
        %v6112 = vpop.f32.mrb[0].mxu0
        %v6113 = vpop.f32.mrb[0].mxu0
        %6114 = vdwg.mxu0
        %6115 = vst [vmem:[%s341] sm:$0xff] %v6110
        %s6116 = sand.u32 %s186, 1
        %s6117 = scalar_lea.sflag [#allocation5], %s6116
        %s6118 = sand.u32 %s186, 1
        %s6119 = smul.addr %s6118, 8
        %s6120 = scalar_lea.vmem [#allocation11], %s6119
        // Predicated region
        $region65: #{tpu_custom_call.1} parent=47 // pred_check
          %p6121 = pneg %p196
        $region66: #{tpu_custom_call.1} parent=47 // pred_check_branch
          %6123 = sbr.rel (%p6121) target = $region68
        $region67: #{tpu_custom_call.1} parent=47 // pred_region
          %s6125 = ssub.s32 128, 128
          %6126 = vsyncadd %s6117, %s6125
          %s6127 = smul.addr %s26, 128
          %s6128 = scalar_lea.hbm %s7, %s6127
          %s6130 = sshll.u32 %s6120, 4
          %s6131 = int_to_ptr.vmem [resolvable:$true] %s6130
          %6133 = dma.vmem_to_hbm [thread:$0]  %s6131, 128, %s6128, %s6117
        $region68: #{tpu_custom_call.1} parent=47 // pred_fallthru
          _
      $region48: #{tpu_custom_call.1} parent=5 // pred_fallthru
        _
      %p6134 = scmp.le.s32.totalorder 2, %s21
      // Predicated region
      $region69: #{tpu_custom_call.1} parent=5 // pred_check
        %p6135 = pneg %p6134
      $region70: #{tpu_custom_call.1} parent=5 // pred_check_branch
        %6137 = sbr.rel (%p6135) target = $region72
      $region71: #{tpu_custom_call.1} parent=5 // pred_region
        %s6138 = ssub.s32 %s21, 2
        // Predicated region
        $region73: #{tpu_custom_call.1} parent=71 // pred_check
          %p6139 = pneg %p202
        $region74: #{tpu_custom_call.1} parent=71 // pred_check_branch
          %6141 = sbr.rel (%p6139) target = $region76
        $region75: #{tpu_custom_call.1} parent=71 // pred_region
          %s6142 = sand.u32 %s187, 1
          %s6143 = scalar_lea.sflag [#allocation5], %s6142
          %s6144 = sand.u32 %s187, 1
          %s6145 = smul.addr %s6144, 8
          %s6146 = scalar_lea.vmem [#allocation11], %s6145
          %6147 = dma.done %s6143, 128
        $region76: #{tpu_custom_call.1} parent=71 // pred_fallthru
          _
      $region72: #{tpu_custom_call.1} parent=5 // pred_fallthru
        _
    $region6: #{tpu_custom_call.1} parent=1 // loop_footer
      %s25 = sadd.s32 1, %s21
    $region7: #{tpu_custom_call.1} parent=1 // loop_footer_branch
      %20 = sbr.rel target = $region3
    $region8: #{tpu_custom_call.1} parent=1 // loop_exit
      _
    %6148 = vsyncpa [#allocation4], 1
    %s6149 = scalar_lea.sflag [#allocation4], 1
    %6150 = vsyncpa %s6149, 1
    %6151 = vsyncpa [#allocation7], 1
    %6152 = vsyncpa [#allocation10], 1
    %6153 = vsyncpa [#allocation5], 1
    %s6154 = scalar_lea.sflag [#allocation5], 1
    %6155 = vsyncpa %s6154, 1

</llo_original>
